<compile_context>
chip_gen: v5e
topology: v5e:2x2
jax: 0.10.0
libtpu: 0.0.40
codegen_flags: <defaults>
</compile_context>

<pallas_src>
import functools
import math

import jax
import jax.numpy as jnp
from jax import lax
from jax.experimental import pallas as pl
from jax.experimental.pallas import tpu as pltpu


# Set True on TPU v7x (2 TensorCores / chip) to shard the batch grid axis across cores.
_USE_CORE_PARALLEL = False


def _batch_dimension_semantics():
    if _USE_CORE_PARALLEL:
        return (pltpu.CORE_PARALLEL,)
    return ("parallel",)


def _vmem_limit_bytes():
    """~3/4 of physical VMEM: ~96 MiB on v5e/v6e (128 MiB), ~48 MiB on v7x (64 MiB)."""
    try:
        cap = pltpu.get_tpu_info().vmem_capacity_bytes
    except Exception:
        cap = 64 * 1024 * 1024
    return max(int(cap * 3 // 4), 32 * 1024 * 1024)


# ---------------------------------------------------------------------------
# Fused whole-forward kernel (one grid step per batch element)
# ---------------------------------------------------------------------------

def _forward_kernel(vis_ref, *refs, num_layers, num_heads, hidden, seq_len, ans_len, eps):
    (wvf, bvf, wof, bof, fng, fnb,
     wq, bq, wk, bk, wv, bv, wo, bo, ln1g, ln1b,
     wvc, bvc, woc, boc, ln2g, ln2b,
     w1, b1, w2, b2, ln3g, ln3b,
     emb, out_ref) = refs

    f32, bf16 = jnp.float32, jnp.bfloat16
    head_dim = hidden // num_heads

    def layer_norm(y, g, b):
        mu = jnp.mean(y, axis=-1, keepdims=True)
        var = jnp.mean((y - mu) ** 2, axis=-1, keepdims=True)
        return (y - mu) * lax.rsqrt(var + eps) * g + b

    vis = vis_ref[0].astype(bf16)                                    # [1, H]

    def attend_single_kv(wv_a, bv_a, wo_a, bo_a):
        # src_len == 1  =>  softmax over a single key is identically 1, so the whole
        # attention block reduces exactly to out_proj(v_proj(memory)); q/k never matter.
        v1 = jnp.dot(vis, wv_a, preferred_element_type=f32) + bv_a   # [1, H]
        return jnp.dot(v1.astype(bf16), wo_a, preferred_element_type=f32) + bo_a

    # ---- feature_attention + feature_norm: decoder input (constant across rows) ----
    ctx0 = attend_single_kv(wvf[...], bvf[...], wof[...], bof[...])  # [1, H]
    x = jnp.broadcast_to(layer_norm(ctx0, fng[...], fnb[...]), (seq_len, hidden))

    # causal mask built once per grid step (no HBM mask tensor, reused across layers/heads)
    rows = lax.broadcasted_iota(jnp.int32, (seq_len, seq_len), 0)
    cols = lax.broadcasted_iota(jnp.int32, (seq_len, seq_len), 1)
    allow = cols <= rows

    for l in range(num_layers):
        # ---- causal self-attention: full-width QKV / out projections, heads unrolled ----
        xb = x.astype(bf16)
        q = jnp.dot(xb, wq[l], preferred_element_type=f32) + bq[l]   # scale folded into wq/bq
        k = jnp.dot(xb, wk[l], preferred_element_type=f32) + bk[l]
        v = jnp.dot(xb, wv[l], preferred_element_type=f32) + bv[l]
        ctx_heads = []
        for h in range(num_heads):
            sl = slice(h * head_dim, (h + 1) * head_dim)
            qh = q[:, sl].astype(bf16)
            kh = k[:, sl].astype(bf16)
            vh = v[:, sl].astype(bf16)
            s = lax.dot_general(qh, kh, (((1,), (1,)), ((), ())),
                                preferred_element_type=f32)          # [L, L]
            s = jnp.where(allow, s, -jnp.inf)
            m = jnp.max(s, axis=-1, keepdims=True)
            p = jnp.exp(s - m)
            p = p / jnp.sum(p, axis=-1, keepdims=True)               # exact softmax (f32)
            ctx_heads.append(jnp.dot(p.astype(bf16), vh, preferred_element_type=f32))
        ctx = jnp.concatenate(ctx_heads, axis=-1).astype(bf16)       # [L, H]
        sa = jnp.dot(ctx, wo[l], preferred_element_type=f32) + bo[l]
        x = layer_norm(x + sa, ln1g[l], ln1b[l])

        # ---- cross-attention over the single visual token (Lk == 1 specialization) ----
        ca = attend_single_kv(wvc[l], bvc[l], woc[l], boc[l])        # [1, H] -> broadcast add
        x = layer_norm(x + ca, ln2g[l], ln2b[l])

        # ---- feed-forward (ReLU) ----
        xb = x.astype(bf16)
        hmid = jnp.maximum(jnp.dot(xb, w1[l], preferred_element_type=f32) + b1[l], 0.0)
        y = jnp.dot(hmid.astype(bf16), w2[l], preferred_element_type=f32) + b2[l]
        x = layer_norm(x + y, ln3g[l], ln3b[l])

    # ---- slice to answer length BEFORE the (largest) matmul, then tied-embedding logits ----
    dec = x[:ans_len, :].astype(bf16)                                # [A, H]
    out_ref[0] = jnp.dot(dec, emb[...], preferred_element_type=f32)  # lane-dense [A, V] store


# ---------------------------------------------------------------------------
# Wrapper
# ---------------------------------------------------------------------------

def answering_agent_forward(text_features, visual_features, params, cfg):
    """Forward pass of AnsweringAgent (eval mode).

    text_features:   [B, L, H]  (stand-in for BERT last_hidden_state; defines seq_len)
    visual_features: [B, H]     (stand-in for FeatureExtractor output)
    returns logits:  [B, min(max_answer_length, L), vocab]
    """
    B, L, H = text_features.shape
    assert L <= cfg["max_seq_length"]
    nh = cfg["num_heads"]
    nl = cfg["num_decoder_layers"]
    V = cfg["vocab_size"]
    A = min(cfg["max_answer_length"], L)

    vis = visual_features[:, None, :]                                # [B, 1, H]

    weight_args = (
        params["wvf"], params["bvf"], params["wof"], params["bof"],
        params["fn_g"], params["fn_b"],
        params["wq"], params["bq"], params["wk"], params["bk"],
        params["wv"], params["bv"], params["wo"], params["bo"],
        params["ln1_g"], params["ln1_b"],
        params["wvc"], params["bvc"], params["woc"], params["boc"],
        params["ln2_g"], params["ln2_b"],
        params["w1"], params["b1"], params["w2"], params["b2"],
        params["ln3_g"], params["ln3_b"],
        params["word_emb_T"],
    )

    def _const_spec(a):
        zeros = (0,) * a.ndim
        # Block index is grid-invariant -> Pallas skips re-DMA between consecutive steps.
        return pl.BlockSpec(a.shape, lambda b, _z=zeros: _z)

    kernel = functools.partial(
        _forward_kernel, num_layers=nl, num_heads=nh, hidden=H,
        seq_len=L, ans_len=A, eps=1e-5)

    return pl.pallas_call(
        kernel,
        out_shape=jax.ShapeDtypeStruct((B, A, V), jnp.float32),
        grid=(B,),
        in_specs=[pl.BlockSpec((1, 1, H), lambda b: (b, 0, 0))]
                 + [_const_spec(a) for a in weight_args],
        out_specs=pl.BlockSpec((1, A, V), lambda b: (b, 0, 0)),
        compiler_params=pltpu.CompilerParams(
            dimension_semantics=_batch_dimension_semantics(),
            vmem_limit_bytes=_vmem_limit_bytes()),
    )(vis, *weight_args)


# ---------------------------------------------------------------------------
# Deterministic parameter construction (pre-transposed [in, out], pre-cast bf16 weights)
# ---------------------------------------------------------------------------

def make_params(key, cfg):
    H, F, V = cfg["hidden_size"], cfg["ffn_dim"], cfg["vocab_size"]
    nh, nl = cfg["num_heads"], cfg["num_decoder_layers"]
    hd = H // nh
    scale = float(hd) ** (-0.5)                                      # folded into wq / bq
    s_h, s_f = 1.0 / math.sqrt(H), 1.0 / math.sqrt(F)
    ks = jax.random.split(key, 11)

    def w(k, shape, s):
        return (jax.random.normal(k, shape, jnp.float32) * s).astype(jnp.bfloat16)

    zH = lambda *lead: jnp.zeros(lead + (H,), jnp.float32)
    oH = lambda *lead: jnp.ones(lead + (H,), jnp.float32)

    return {
        # feature attention (single-token memory: only v/out projections can affect output)
        "wvf": w(ks[0], (H, H), s_h), "bvf": zH(1),
        "wof": w(ks[1], (H, H), s_h), "bof": zH(1),
        "fn_g": oH(1), "fn_b": zH(1),
        # decoder self-attention, stacked over layers; 1/sqrt(head_dim) folded into wq/bq
        "wq": w(ks[2], (nl, H, H), s_h * scale), "bq": zH(nl, 1),
        "wk": w(ks[3], (nl, H, H), s_h),         "bk": zH(nl, 1),
        "wv": w(ks[4], (nl, H, H), s_h),         "bv": zH(nl, 1),
        "wo": w(ks[5], (nl, H, H), s_h),         "bo": zH(nl, 1),
        "ln1_g": oH(nl, 1), "ln1_b": zH(nl, 1),
        # decoder cross-attention over the single visual token
        "wvc": w(ks[6], (nl, H, H), s_h), "bvc": zH(nl, 1),
        "woc": w(ks[7], (nl, H, H), s_h), "boc": zH(nl, 1),
        "ln2_g": oH(nl, 1), "ln2_b": zH(nl, 1),
        # feed-forward
        "w1": w(ks[8], (nl, H, F), s_h), "b1": jnp.zeros((nl, 1, F), jnp.float32),
        "w2": w(ks[9], (nl, F, H), s_f), "b2": zH(nl, 1),
        "ln3_g": oH(nl, 1), "ln3_b": zH(nl, 1),
        # tied word-embedding weight, pre-transposed [H, V]
        "word_emb_T": w(ks[10], (H, V), 0.02),
    }


# ---------------------------------------------------------------------------
# main
# ---------------------------------------------------------------------------

if __name__ == "__main__":
    cfg = {
        "hidden_size": 128,        # lane-dense (multiple of 128)
        "num_heads": 4,            # head_dim = 32
        "ffn_dim": 256,
        "num_decoder_layers": 2,
        "vocab_size": 256,         # padded to a multiple of 128
        "max_seq_length": 64,
        "max_answer_length": 8,
    }
    B, L = 2, 16

    root = jax.random.PRNGKey(0)
    k_text, k_vis, k_par = jax.random.split(root, 3)

    # stand-ins for BERT last_hidden_state and FeatureExtractor output
    text_features = jax.random.normal(k_text, (B, L, cfg["hidden_size"]), jnp.float32)
    visual_features = jax.random.normal(k_vis, (B, cfg["hidden_size"]), jnp.float32)
    params = make_params(k_par, cfg)

    fwd = jax.jit(lambda t, v, p: answering_agent_forward(t, v, p, cfg))
    out = jax.block_until_ready(fwd(text_features, visual_features, params))

    assert out.shape == (B, cfg["max_answer_length"], cfg["vocab_size"])
    assert bool(jnp.all(jnp.isfinite(out)))
    print("KERNEL_OK")
</pallas_src>

<mosaic_0001>
module attributes {stable_mosaic.version = 11 : i64} {
  func.func @_forward_kernel(%arg0: i32, %arg1: memref<1x1x128xf32, #tpu.memory_space<vmem>>, %arg2: memref<128x128xbf16, #tpu.memory_space<vmem>>, %arg3: memref<1x128xf32, #tpu.memory_space<vmem>>, %arg4: memref<128x128xbf16, #tpu.memory_space<vmem>>, %arg5: memref<1x128xf32, #tpu.memory_space<vmem>>, %arg6: memref<1x128xf32, #tpu.memory_space<vmem>>, %arg7: memref<1x128xf32, #tpu.memory_space<vmem>>, %arg8: memref<2x128x128xbf16, #tpu.memory_space<vmem>>, %arg9: memref<2x1x128xf32, #tpu.memory_space<vmem>>, %arg10: memref<2x128x128xbf16, #tpu.memory_space<vmem>>, %arg11: memref<2x1x128xf32, #tpu.memory_space<vmem>>, %arg12: memref<2x128x128xbf16, #tpu.memory_space<vmem>>, %arg13: memref<2x1x128xf32, #tpu.memory_space<vmem>>, %arg14: memref<2x128x128xbf16, #tpu.memory_space<vmem>>, %arg15: memref<2x1x128xf32, #tpu.memory_space<vmem>>, %arg16: memref<2x1x128xf32, #tpu.memory_space<vmem>>, %arg17: memref<2x1x128xf32, #tpu.memory_space<vmem>>, %arg18: memref<2x128x128xbf16, #tpu.memory_space<vmem>>, %arg19: memref<2x1x128xf32, #tpu.memory_space<vmem>>, %arg20: memref<2x128x128xbf16, #tpu.memory_space<vmem>>, %arg21: memref<2x1x128xf32, #tpu.memory_space<vmem>>, %arg22: memref<2x1x128xf32, #tpu.memory_space<vmem>>, %arg23: memref<2x1x128xf32, #tpu.memory_space<vmem>>, %arg24: memref<2x128x256xbf16, #tpu.memory_space<vmem>>, %arg25: memref<2x1x256xf32, #tpu.memory_space<vmem>>, %arg26: memref<2x256x128xbf16, #tpu.memory_space<vmem>>, %arg27: memref<2x1x128xf32, #tpu.memory_space<vmem>>, %arg28: memref<2x1x128xf32, #tpu.memory_space<vmem>>, %arg29: memref<2x1x128xf32, #tpu.memory_space<vmem>>, %arg30: memref<128x256xbf16, #tpu.memory_space<vmem>>, %arg31: memref<1x8x256xf32, #tpu.memory_space<vmem>>) attributes {dimension_semantics = [#tpu.dimension_semantics<parallel>], iteration_bounds = array<i64: 2>, scalar_prefetch = 0 : i64, scratch_operands = 0 : i64, tpu.core_type = #tpu.core_type<tc>, window_params = [{transform_indices = @transform_0, window_bounds = array<i64: 1, 1, 128>}, {pipeline_mode = #tpu.pipeline_mode<synchronous>, transform_indices = @transform_1, window_bounds = array<i64: 128, 128>}, {pipeline_mode = #tpu.pipeline_mode<synchronous>, transform_indices = @transform_2, window_bounds = array<i64: 1, 128>}, {pipeline_mode = #tpu.pipeline_mode<synchronous>, transform_indices = @transform_3, window_bounds = array<i64: 128, 128>}, {pipeline_mode = #tpu.pipeline_mode<synchronous>, transform_indices = @transform_4, window_bounds = array<i64: 1, 128>}, {pipeline_mode = #tpu.pipeline_mode<synchronous>, transform_indices = @transform_5, window_bounds = array<i64: 1, 128>}, {pipeline_mode = #tpu.pipeline_mode<synchronous>, transform_indices = @transform_6, window_bounds = array<i64: 1, 128>}, {pipeline_mode = #tpu.pipeline_mode<synchronous>, transform_indices = @transform_7, window_bounds = array<i64: 2, 128, 128>}, {pipeline_mode = #tpu.pipeline_mode<synchronous>, transform_indices = @transform_8, window_bounds = array<i64: 2, 1, 128>}, {pipeline_mode = #tpu.pipeline_mode<synchronous>, transform_indices = @transform_9, window_bounds = array<i64: 2, 128, 128>}, {pipeline_mode = #tpu.pipeline_mode<synchronous>, transform_indices = @transform_10, window_bounds = array<i64: 2, 1, 128>}, {pipeline_mode = #tpu.pipeline_mode<synchronous>, transform_indices = @transform_11, window_bounds = array<i64: 2, 128, 128>}, {pipeline_mode = #tpu.pipeline_mode<synchronous>, transform_indices = @transform_12, window_bounds = array<i64: 2, 1, 128>}, {pipeline_mode = #tpu.pipeline_mode<synchronous>, transform_indices = @transform_13, window_bounds = array<i64: 2, 128, 128>}, {pipeline_mode = #tpu.pipeline_mode<synchronous>, transform_indices = @transform_14, window_bounds = array<i64: 2, 1, 128>}, {pipeline_mode = #tpu.pipeline_mode<synchronous>, transform_indices = @transform_15, window_bounds = array<i64: 2, 1, 128>}, {pipeline_mode = #tpu.pipeline_mode<synchronous>, transform_indices = @transform_16, window_bounds = array<i64: 2, 1, 128>}, {pipeline_mode = #tpu.pipeline_mode<synchronous>, transform_indices = @transform_17, window_bounds = array<i64: 2, 128, 128>}, {pipeline_mode = #tpu.pipeline_mode<synchronous>, transform_indices = @transform_18, window_bounds = array<i64: 2, 1, 128>}, {pipeline_mode = #tpu.pipeline_mode<synchronous>, transform_indices = @transform_19, window_bounds = array<i64: 2, 128, 128>}, {pipeline_mode = #tpu.pipeline_mode<synchronous>, transform_indices = @transform_20, window_bounds = array<i64: 2, 1, 128>}, {pipeline_mode = #tpu.pipeline_mode<synchronous>, transform_indices = @transform_21, window_bounds = array<i64: 2, 1, 128>}, {pipeline_mode = #tpu.pipeline_mode<synchronous>, transform_indices = @transform_22, window_bounds = array<i64: 2, 1, 128>}, {pipeline_mode = #tpu.pipeline_mode<synchronous>, transform_indices = @transform_23, window_bounds = array<i64: 2, 128, 256>}, {pipeline_mode = #tpu.pipeline_mode<synchronous>, transform_indices = @transform_24, window_bounds = array<i64: 2, 1, 256>}, {pipeline_mode = #tpu.pipeline_mode<synchronous>, transform_indices = @transform_25, window_bounds = array<i64: 2, 256, 128>}, {pipeline_mode = #tpu.pipeline_mode<synchronous>, transform_indices = @transform_26, window_bounds = array<i64: 2, 1, 128>}, {pipeline_mode = #tpu.pipeline_mode<synchronous>, transform_indices = @transform_27, window_bounds = array<i64: 2, 1, 128>}, {pipeline_mode = #tpu.pipeline_mode<synchronous>, transform_indices = @transform_28, window_bounds = array<i64: 2, 1, 128>}, {pipeline_mode = #tpu.pipeline_mode<synchronous>, transform_indices = @transform_29, window_bounds = array<i64: 128, 256>}, {transform_indices = @transform_30, window_bounds = array<i64: 1, 8, 256>}]} {
    %c0 = arith.constant 0 : index
    %c0_0 = arith.constant 0 : index
    %c0_1 = arith.constant 0 : index
    %0 = vector.load %arg1[%c0, %c0_0, %c0_1] : memref<1x1x128xf32, #tpu.memory_space<vmem>>, vector<1x1x128xf32>
    %1 = vector.shape_cast %0 : vector<1x1x128xf32> to vector<1x128xf32>
    %2 = arith.truncf %1 : vector<1x128xf32> to vector<1x128xbf16>
    %c0_2 = arith.constant 0 : index
    %c0_3 = arith.constant 0 : index
    %3 = vector.load %arg2[%c0_2, %c0_3] : memref<128x128xbf16, #tpu.memory_space<vmem>>, vector<128x128xbf16>
    %c0_4 = arith.constant 0 : index
    %c0_5 = arith.constant 0 : index
    %4 = vector.load %arg3[%c0_4, %c0_5] : memref<1x128xf32, #tpu.memory_space<vmem>>, vector<1x128xf32>
    %c0_6 = arith.constant 0 : index
    %c0_7 = arith.constant 0 : index
    %5 = vector.load %arg4[%c0_6, %c0_7] : memref<128x128xbf16, #tpu.memory_space<vmem>>, vector<128x128xbf16>
    %c0_8 = arith.constant 0 : index
    %c0_9 = arith.constant 0 : index
    %6 = vector.load %arg5[%c0_8, %c0_9] : memref<1x128xf32, #tpu.memory_space<vmem>>, vector<1x128xf32>
    %cst = arith.constant dense<0.000000e+00> : vector<1x128xf32>
    %7 = tpu.matmul %2, %3, %cst {dimension_numbers = #tpu.dot_dimension_numbers<[1], [0], [0], [1], [0, 0, 1, 1], [], []>} : vector<1x128xbf16>, vector<128x128xbf16>, vector<1x128xf32> -> vector<1x128xf32>
    %8 = arith.addf %7, %4 : vector<1x128xf32>
    %9 = arith.truncf %8 : vector<1x128xf32> to vector<1x128xbf16>
    %cst_10 = arith.constant dense<0.000000e+00> : vector<1x128xf32>
    %10 = tpu.matmul %9, %5, %cst_10 {dimension_numbers = #tpu.dot_dimension_numbers<[1], [0], [0], [1], [0, 0, 1, 1], [], []>} : vector<1x128xbf16>, vector<128x128xbf16>, vector<1x128xf32> -> vector<1x128xf32>
    %11 = arith.addf %10, %6 : vector<1x128xf32>
    %c0_11 = arith.constant 0 : index
    %c0_12 = arith.constant 0 : index
    %12 = vector.load %arg6[%c0_11, %c0_12] : memref<1x128xf32, #tpu.memory_space<vmem>>, vector<1x128xf32>
    %c0_13 = arith.constant 0 : index
    %c0_14 = arith.constant 0 : index
    %13 = vector.load %arg7[%c0_13, %c0_14] : memref<1x128xf32, #tpu.memory_space<vmem>>, vector<1x128xf32>
    %cst_15 = arith.constant dense<0.000000e+00> : vector<1xf32>
    %14 = vector.multi_reduction <add>, %11, %cst_15 [1] : vector<1x128xf32> to vector<1xf32>
    %15 = vector.shape_cast %14 : vector<1xf32> to vector<1x1xf32>
    %cst_16 = arith.constant 1.280000e+02 : f32
    %16 = vector.broadcast %cst_16 : f32 to vector<1x1xf32>
    %17 = arith.divf %15, %16 : vector<1x1xf32>
    %18 = vector.broadcast %17 : vector<1x1xf32> to vector<1x128xf32>
    %19 = arith.subf %11, %18 : vector<1x128xf32>
    %20 = arith.mulf %19, %19 : vector<1x128xf32>
    %cst_17 = arith.constant dense<0.000000e+00> : vector<1xf32>
    %21 = vector.multi_reduction <add>, %20, %cst_17 [1] : vector<1x128xf32> to vector<1xf32>
    %22 = vector.shape_cast %21 : vector<1xf32> to vector<1x1xf32>
    %cst_18 = arith.constant 1.280000e+02 : f32
    %23 = vector.broadcast %cst_18 : f32 to vector<1x1xf32>
    %24 = arith.divf %22, %23 : vector<1x1xf32>
    %25 = vector.broadcast %17 : vector<1x1xf32> to vector<1x128xf32>
    %26 = arith.subf %11, %25 : vector<1x128xf32>
    %cst_19 = arith.constant 9.99999974E-6 : f32
    %27 = vector.broadcast %cst_19 : f32 to vector<1x1xf32>
    %28 = arith.addf %24, %27 : vector<1x1xf32>
    %29 = math.rsqrt %28 : vector<1x1xf32>
    %30 = vector.broadcast %29 : vector<1x1xf32> to vector<1x128xf32>
    %31 = arith.mulf %26, %30 : vector<1x128xf32>
    %32 = arith.mulf %31, %12 : vector<1x128xf32>
    %33 = arith.addf %32, %13 : vector<1x128xf32>
    %34 = vector.shape_cast %33 : vector<1x128xf32> to vector<1x128xf32>
    %35 = vector.broadcast %34 : vector<1x128xf32> to vector<16x128xf32>
    %36 = tpu.iota {dimensions = array<i32: 0>} : vector<16x16xi32>
    %37 = tpu.iota {dimensions = array<i32: 1>} : vector<16x16xi32>
    %38 = arith.cmpi sle, %37, %36 : vector<16x16xi32>
    %39 = arith.truncf %35 : vector<16x128xf32> to vector<16x128xbf16>
    %c0_20 = arith.constant 0 : index
    %c0_21 = arith.constant 0 : index
    %c0_22 = arith.constant 0 : index
    %40 = vector.load %arg8[%c0_20, %c0_21, %c0_22] : memref<2x128x128xbf16, #tpu.memory_space<vmem>>, vector<1x128x128xbf16>
    %41 = vector.shape_cast %40 : vector<1x128x128xbf16> to vector<128x128xbf16>
    %cst_23 = arith.constant dense<0.000000e+00> : vector<16x128xf32>
    %42 = tpu.matmul %39, %41, %cst_23 {dimension_numbers = #tpu.dot_dimension_numbers<[1], [0], [0], [1], [0, 0, 1, 1], [], []>} : vector<16x128xbf16>, vector<128x128xbf16>, vector<16x128xf32> -> vector<16x128xf32>
    %c0_24 = arith.constant 0 : index
    %c0_25 = arith.constant 0 : index
    %c0_26 = arith.constant 0 : index
    %43 = vector.load %arg9[%c0_24, %c0_25, %c0_26] : memref<2x1x128xf32, #tpu.memory_space<vmem>>, vector<1x1x128xf32>
    %44 = vector.shape_cast %43 : vector<1x1x128xf32> to vector<1x128xf32>
    %45 = vector.broadcast %44 : vector<1x128xf32> to vector<16x128xf32>
    %46 = arith.addf %42, %45 : vector<16x128xf32>
    %c0_27 = arith.constant 0 : index
    %c0_28 = arith.constant 0 : index
    %c0_29 = arith.constant 0 : index
    %47 = vector.load %arg10[%c0_27, %c0_28, %c0_29] : memref<2x128x128xbf16, #tpu.memory_space<vmem>>, vector<1x128x128xbf16>
    %48 = vector.shape_cast %47 : vector<1x128x128xbf16> to vector<128x128xbf16>
    %cst_30 = arith.constant dense<0.000000e+00> : vector<16x128xf32>
    %49 = tpu.matmul %39, %48, %cst_30 {dimension_numbers = #tpu.dot_dimension_numbers<[1], [0], [0], [1], [0, 0, 1, 1], [], []>} : vector<16x128xbf16>, vector<128x128xbf16>, vector<16x128xf32> -> vector<16x128xf32>
    %c0_31 = arith.constant 0 : index
    %c0_32 = arith.constant 0 : index
    %c0_33 = arith.constant 0 : index
    %50 = vector.load %arg11[%c0_31, %c0_32, %c0_33] : memref<2x1x128xf32, #tpu.memory_space<vmem>>, vector<1x1x128xf32>
    %51 = vector.shape_cast %50 : vector<1x1x128xf32> to vector<1x128xf32>
    %52 = vector.broadcast %51 : vector<1x128xf32> to vector<16x128xf32>
    %53 = arith.addf %49, %52 : vector<16x128xf32>
    %c0_34 = arith.constant 0 : index
    %c0_35 = arith.constant 0 : index
    %c0_36 = arith.constant 0 : index
    %54 = vector.load %arg12[%c0_34, %c0_35, %c0_36] : memref<2x128x128xbf16, #tpu.memory_space<vmem>>, vector<1x128x128xbf16>
    %55 = vector.shape_cast %54 : vector<1x128x128xbf16> to vector<128x128xbf16>
    %cst_37 = arith.constant dense<0.000000e+00> : vector<16x128xf32>
    %56 = tpu.matmul %39, %55, %cst_37 {dimension_numbers = #tpu.dot_dimension_numbers<[1], [0], [0], [1], [0, 0, 1, 1], [], []>} : vector<16x128xbf16>, vector<128x128xbf16>, vector<16x128xf32> -> vector<16x128xf32>
    %c0_38 = arith.constant 0 : index
    %c0_39 = arith.constant 0 : index
    %c0_40 = arith.constant 0 : index
    %57 = vector.load %arg13[%c0_38, %c0_39, %c0_40] : memref<2x1x128xf32, #tpu.memory_space<vmem>>, vector<1x1x128xf32>
    %58 = vector.shape_cast %57 : vector<1x1x128xf32> to vector<1x128xf32>
    %59 = vector.broadcast %58 : vector<1x128xf32> to vector<16x128xf32>
    %60 = arith.addf %56, %59 : vector<16x128xf32>
    %61 = vector.extract_strided_slice %46 {offsets = [0, 0], sizes = [16, 32], strides = [1, 1]} : vector<16x128xf32> to vector<16x32xf32>
    %62 = arith.truncf %61 : vector<16x32xf32> to vector<16x32xbf16>
    %63 = vector.extract_strided_slice %53 {offsets = [0, 0], sizes = [16, 32], strides = [1, 1]} : vector<16x128xf32> to vector<16x32xf32>
    %64 = arith.truncf %63 : vector<16x32xf32> to vector<16x32xbf16>
    %65 = vector.extract_strided_slice %60 {offsets = [0, 0], sizes = [16, 32], strides = [1, 1]} : vector<16x128xf32> to vector<16x32xf32>
    %66 = arith.truncf %65 : vector<16x32xf32> to vector<16x32xbf16>
    %cst_41 = arith.constant dense<0.000000e+00> : vector<16x16xf32>
    %67 = tpu.matmul %62, %64, %cst_41 {dimension_numbers = #tpu.dot_dimension_numbers<[1], [1], [0], [0], [0, 0, 1, 0], [], []>} : vector<16x32xbf16>, vector<16x32xbf16>, vector<16x16xf32> -> vector<16x16xf32>
    %cst_42 = arith.constant 0xFF800000 : f32
    %68 = vector.broadcast %cst_42 : f32 to vector<16x16xf32>
    %69 = arith.select %38, %67, %68 : vector<16x16xi1>, vector<16x16xf32>
    %cst_43 = arith.constant dense<0xFF800000> : vector<16xf32>
    %70 = vector.multi_reduction <maximumf>, %69, %cst_43 [1] : vector<16x16xf32> to vector<16xf32>
    %71 = vector.shape_cast %70 : vector<16xf32> to vector<16x1xf32>
    %72 = vector.broadcast %71 : vector<16x1xf32> to vector<16x16xf32>
    %73 = arith.subf %69, %72 : vector<16x16xf32>
    %74 = math.exp %73 : vector<16x16xf32>
    %cst_44 = arith.constant dense<0.000000e+00> : vector<16xf32>
    %75 = vector.multi_reduction <add>, %74, %cst_44 [1] : vector<16x16xf32> to vector<16xf32>
    %76 = vector.shape_cast %75 : vector<16xf32> to vector<16x1xf32>
    %77 = vector.broadcast %76 : vector<16x1xf32> to vector<16x16xf32>
    %78 = arith.divf %74, %77 : vector<16x16xf32>
    %79 = arith.truncf %78 : vector<16x16xf32> to vector<16x16xbf16>
    %cst_45 = arith.constant dense<0.000000e+00> : vector<16x32xf32>
    %80 = tpu.matmul %79, %66, %cst_45 {dimension_numbers = #tpu.dot_dimension_numbers<[1], [0], [0], [1], [0, 0, 1, 1], [], []>} : vector<16x16xbf16>, vector<16x32xbf16>, vector<16x32xf32> -> vector<16x32xf32>
    %81 = vector.extract_strided_slice %46 {offsets = [0, 32], sizes = [16, 32], strides = [1, 1]} : vector<16x128xf32> to vector<16x32xf32>
    %82 = arith.truncf %81 : vector<16x32xf32> to vector<16x32xbf16>
    %83 = vector.extract_strided_slice %53 {offsets = [0, 32], sizes = [16, 32], strides = [1, 1]} : vector<16x128xf32> to vector<16x32xf32>
    %84 = arith.truncf %83 : vector<16x32xf32> to vector<16x32xbf16>
    %85 = vector.extract_strided_slice %60 {offsets = [0, 32], sizes = [16, 32], strides = [1, 1]} : vector<16x128xf32> to vector<16x32xf32>
    %86 = arith.truncf %85 : vector<16x32xf32> to vector<16x32xbf16>
    %cst_46 = arith.constant dense<0.000000e+00> : vector<16x16xf32>
    %87 = tpu.matmul %82, %84, %cst_46 {dimension_numbers = #tpu.dot_dimension_numbers<[1], [1], [0], [0], [0, 0, 1, 0], [], []>} : vector<16x32xbf16>, vector<16x32xbf16>, vector<16x16xf32> -> vector<16x16xf32>
    %cst_47 = arith.constant 0xFF800000 : f32
    %88 = vector.broadcast %cst_47 : f32 to vector<16x16xf32>
    %89 = arith.select %38, %87, %88 : vector<16x16xi1>, vector<16x16xf32>
    %cst_48 = arith.constant dense<0xFF800000> : vector<16xf32>
    %90 = vector.multi_reduction <maximumf>, %89, %cst_48 [1] : vector<16x16xf32> to vector<16xf32>
    %91 = vector.shape_cast %90 : vector<16xf32> to vector<16x1xf32>
    %92 = vector.broadcast %91 : vector<16x1xf32> to vector<16x16xf32>
    %93 = arith.subf %89, %92 : vector<16x16xf32>
    %94 = math.exp %93 : vector<16x16xf32>
    %cst_49 = arith.constant dense<0.000000e+00> : vector<16xf32>
    %95 = vector.multi_reduction <add>, %94, %cst_49 [1] : vector<16x16xf32> to vector<16xf32>
    %96 = vector.shape_cast %95 : vector<16xf32> to vector<16x1xf32>
    %97 = vector.broadcast %96 : vector<16x1xf32> to vector<16x16xf32>
    %98 = arith.divf %94, %97 : vector<16x16xf32>
    %99 = arith.truncf %98 : vector<16x16xf32> to vector<16x16xbf16>
    %cst_50 = arith.constant dense<0.000000e+00> : vector<16x32xf32>
    %100 = tpu.matmul %99, %86, %cst_50 {dimension_numbers = #tpu.dot_dimension_numbers<[1], [0], [0], [1], [0, 0, 1, 1], [], []>} : vector<16x16xbf16>, vector<16x32xbf16>, vector<16x32xf32> -> vector<16x32xf32>
    %101 = vector.extract_strided_slice %46 {offsets = [0, 64], sizes = [16, 32], strides = [1, 1]} : vector<16x128xf32> to vector<16x32xf32>
    %102 = arith.truncf %101 : vector<16x32xf32> to vector<16x32xbf16>
    %103 = vector.extract_strided_slice %53 {offsets = [0, 64], sizes = [16, 32], strides = [1, 1]} : vector<16x128xf32> to vector<16x32xf32>
    %104 = arith.truncf %103 : vector<16x32xf32> to vector<16x32xbf16>
    %105 = vector.extract_strided_slice %60 {offsets = [0, 64], sizes = [16, 32], strides = [1, 1]} : vector<16x128xf32> to vector<16x32xf32>
    %106 = arith.truncf %105 : vector<16x32xf32> to vector<16x32xbf16>
    %cst_51 = arith.constant dense<0.000000e+00> : vector<16x16xf32>
    %107 = tpu.matmul %102, %104, %cst_51 {dimension_numbers = #tpu.dot_dimension_numbers<[1], [1], [0], [0], [0, 0, 1, 0], [], []>} : vector<16x32xbf16>, vector<16x32xbf16>, vector<16x16xf32> -> vector<16x16xf32>
    %cst_52 = arith.constant 0xFF800000 : f32
    %108 = vector.broadcast %cst_52 : f32 to vector<16x16xf32>
    %109 = arith.select %38, %107, %108 : vector<16x16xi1>, vector<16x16xf32>
    %cst_53 = arith.constant dense<0xFF800000> : vector<16xf32>
    %110 = vector.multi_reduction <maximumf>, %109, %cst_53 [1] : vector<16x16xf32> to vector<16xf32>
    %111 = vector.shape_cast %110 : vector<16xf32> to vector<16x1xf32>
    %112 = vector.broadcast %111 : vector<16x1xf32> to vector<16x16xf32>
    %113 = arith.subf %109, %112 : vector<16x16xf32>
    %114 = math.exp %113 : vector<16x16xf32>
    %cst_54 = arith.constant dense<0.000000e+00> : vector<16xf32>
    %115 = vector.multi_reduction <add>, %114, %cst_54 [1] : vector<16x16xf32> to vector<16xf32>
    %116 = vector.shape_cast %115 : vector<16xf32> to vector<16x1xf32>
    %117 = vector.broadcast %116 : vector<16x1xf32> to vector<16x16xf32>
    %118 = arith.divf %114, %117 : vector<16x16xf32>
    %119 = arith.truncf %118 : vector<16x16xf32> to vector<16x16xbf16>
    %cst_55 = arith.constant dense<0.000000e+00> : vector<16x32xf32>
    %120 = tpu.matmul %119, %106, %cst_55 {dimension_numbers = #tpu.dot_dimension_numbers<[1], [0], [0], [1], [0, 0, 1, 1], [], []>} : vector<16x16xbf16>, vector<16x32xbf16>, vector<16x32xf32> -> vector<16x32xf32>
    %121 = vector.extract_strided_slice %46 {offsets = [0, 96], sizes = [16, 32], strides = [1, 1]} : vector<16x128xf32> to vector<16x32xf32>
    %122 = arith.truncf %121 : vector<16x32xf32> to vector<16x32xbf16>
    %123 = vector.extract_strided_slice %53 {offsets = [0, 96], sizes = [16, 32], strides = [1, 1]} : vector<16x128xf32> to vector<16x32xf32>
    %124 = arith.truncf %123 : vector<16x32xf32> to vector<16x32xbf16>
    %125 = vector.extract_strided_slice %60 {offsets = [0, 96], sizes = [16, 32], strides = [1, 1]} : vector<16x128xf32> to vector<16x32xf32>
    %126 = arith.truncf %125 : vector<16x32xf32> to vector<16x32xbf16>
    %cst_56 = arith.constant dense<0.000000e+00> : vector<16x16xf32>
    %127 = tpu.matmul %122, %124, %cst_56 {dimension_numbers = #tpu.dot_dimension_numbers<[1], [1], [0], [0], [0, 0, 1, 0], [], []>} : vector<16x32xbf16>, vector<16x32xbf16>, vector<16x16xf32> -> vector<16x16xf32>
    %cst_57 = arith.constant 0xFF800000 : f32
    %128 = vector.broadcast %cst_57 : f32 to vector<16x16xf32>
    %129 = arith.select %38, %127, %128 : vector<16x16xi1>, vector<16x16xf32>
    %cst_58 = arith.constant dense<0xFF800000> : vector<16xf32>
    %130 = vector.multi_reduction <maximumf>, %129, %cst_58 [1] : vector<16x16xf32> to vector<16xf32>
    %131 = vector.shape_cast %130 : vector<16xf32> to vector<16x1xf32>
    %132 = vector.broadcast %131 : vector<16x1xf32> to vector<16x16xf32>
    %133 = arith.subf %129, %132 : vector<16x16xf32>
    %134 = math.exp %133 : vector<16x16xf32>
    %cst_59 = arith.constant dense<0.000000e+00> : vector<16xf32>
    %135 = vector.multi_reduction <add>, %134, %cst_59 [1] : vector<16x16xf32> to vector<16xf32>
    %136 = vector.shape_cast %135 : vector<16xf32> to vector<16x1xf32>
    %137 = vector.broadcast %136 : vector<16x1xf32> to vector<16x16xf32>
    %138 = arith.divf %134, %137 : vector<16x16xf32>
    %139 = arith.truncf %138 : vector<16x16xf32> to vector<16x16xbf16>
    %cst_60 = arith.constant dense<0.000000e+00> : vector<16x32xf32>
    %140 = tpu.matmul %139, %126, %cst_60 {dimension_numbers = #tpu.dot_dimension_numbers<[1], [0], [0], [1], [0, 0, 1, 1], [], []>} : vector<16x16xbf16>, vector<16x32xbf16>, vector<16x32xf32> -> vector<16x32xf32>
    %141 = tpu.concatenate %80, %100, %120, %140 in 1 : vector<16x32xf32>, vector<16x32xf32>, vector<16x32xf32>, vector<16x32xf32> -> vector<16x128xf32>
    %142 = arith.truncf %141 : vector<16x128xf32> to vector<16x128xbf16>
    %c0_61 = arith.constant 0 : index
    %c0_62 = arith.constant 0 : index
    %c0_63 = arith.constant 0 : index
    %143 = vector.load %arg14[%c0_61, %c0_62, %c0_63] : memref<2x128x128xbf16, #tpu.memory_space<vmem>>, vector<1x128x128xbf16>
    %144 = vector.shape_cast %143 : vector<1x128x128xbf16> to vector<128x128xbf16>
    %cst_64 = arith.constant dense<0.000000e+00> : vector<16x128xf32>
    %145 = tpu.matmul %142, %144, %cst_64 {dimension_numbers = #tpu.dot_dimension_numbers<[1], [0], [0], [1], [0, 0, 1, 1], [], []>} : vector<16x128xbf16>, vector<128x128xbf16>, vector<16x128xf32> -> vector<16x128xf32>
    %c0_65 = arith.constant 0 : index
    %c0_66 = arith.constant 0 : index
    %c0_67 = arith.constant 0 : index
    %146 = vector.load %arg15[%c0_65, %c0_66, %c0_67] : memref<2x1x128xf32, #tpu.memory_space<vmem>>, vector<1x1x128xf32>
    %147 = vector.shape_cast %146 : vector<1x1x128xf32> to vector<1x128xf32>
    %148 = vector.broadcast %147 : vector<1x128xf32> to vector<16x128xf32>
    %149 = arith.addf %145, %148 : vector<16x128xf32>
    %150 = arith.addf %35, %149 : vector<16x128xf32>
    %c0_68 = arith.constant 0 : index
    %c0_69 = arith.constant 0 : index
    %c0_70 = arith.constant 0 : index
    %151 = vector.load %arg16[%c0_68, %c0_69, %c0_70] : memref<2x1x128xf32, #tpu.memory_space<vmem>>, vector<1x1x128xf32>
    %152 = vector.shape_cast %151 : vector<1x1x128xf32> to vector<1x128xf32>
    %c0_71 = arith.constant 0 : index
    %c0_72 = arith.constant 0 : index
    %c0_73 = arith.constant 0 : index
    %153 = vector.load %arg17[%c0_71, %c0_72, %c0_73] : memref<2x1x128xf32, #tpu.memory_space<vmem>>, vector<1x1x128xf32>
    %154 = vector.shape_cast %153 : vector<1x1x128xf32> to vector<1x128xf32>
    %cst_74 = arith.constant dense<0.000000e+00> : vector<16xf32>
    %155 = vector.multi_reduction <add>, %150, %cst_74 [1] : vector<16x128xf32> to vector<16xf32>
    %156 = vector.shape_cast %155 : vector<16xf32> to vector<16x1xf32>
    %cst_75 = arith.constant 1.280000e+02 : f32
    %157 = vector.broadcast %cst_75 : f32 to vector<16x1xf32>
    %158 = arith.divf %156, %157 : vector<16x1xf32>
    %159 = vector.broadcast %158 : vector<16x1xf32> to vector<16x128xf32>
    %160 = arith.subf %150, %159 : vector<16x128xf32>
    %161 = arith.mulf %160, %160 : vector<16x128xf32>
    %cst_76 = arith.constant dense<0.000000e+00> : vector<16xf32>
    %162 = vector.multi_reduction <add>, %161, %cst_76 [1] : vector<16x128xf32> to vector<16xf32>
    %163 = vector.shape_cast %162 : vector<16xf32> to vector<16x1xf32>
    %cst_77 = arith.constant 1.280000e+02 : f32
    %164 = vector.broadcast %cst_77 : f32 to vector<16x1xf32>
    %165 = arith.divf %163, %164 : vector<16x1xf32>
    %166 = vector.broadcast %158 : vector<16x1xf32> to vector<16x128xf32>
    %167 = arith.subf %150, %166 : vector<16x128xf32>
    %cst_78 = arith.constant 9.99999974E-6 : f32
    %168 = vector.broadcast %cst_78 : f32 to vector<16x1xf32>
    %169 = arith.addf %165, %168 : vector<16x1xf32>
    %170 = math.rsqrt %169 : vector<16x1xf32>
    %171 = vector.broadcast %170 : vector<16x1xf32> to vector<16x128xf32>
    %172 = arith.mulf %167, %171 : vector<16x128xf32>
    %173 = vector.broadcast %152 : vector<1x128xf32> to vector<16x128xf32>
    %174 = arith.mulf %172, %173 : vector<16x128xf32>
    %175 = vector.broadcast %154 : vector<1x128xf32> to vector<16x128xf32>
    %176 = arith.addf %174, %175 : vector<16x128xf32>
    %c0_79 = arith.constant 0 : index
    %c0_80 = arith.constant 0 : index
    %c0_81 = arith.constant 0 : index
    %177 = vector.load %arg18[%c0_79, %c0_80, %c0_81] : memref<2x128x128xbf16, #tpu.memory_space<vmem>>, vector<1x128x128xbf16>
    %178 = vector.shape_cast %177 : vector<1x128x128xbf16> to vector<128x128xbf16>
    %c0_82 = arith.constant 0 : index
    %c0_83 = arith.constant 0 : index
    %c0_84 = arith.constant 0 : index
    %179 = vector.load %arg19[%c0_82, %c0_83, %c0_84] : memref<2x1x128xf32, #tpu.memory_space<vmem>>, vector<1x1x128xf32>
    %180 = vector.shape_cast %179 : vector<1x1x128xf32> to vector<1x128xf32>
    %c0_85 = arith.constant 0 : index
    %c0_86 = arith.constant 0 : index
    %c0_87 = arith.constant 0 : index
    %181 = vector.load %arg20[%c0_85, %c0_86, %c0_87] : memref<2x128x128xbf16, #tpu.memory_space<vmem>>, vector<1x128x128xbf16>
    %182 = vector.shape_cast %181 : vector<1x128x128xbf16> to vector<128x128xbf16>
    %c0_88 = arith.constant 0 : index
    %c0_89 = arith.constant 0 : index
    %c0_90 = arith.constant 0 : index
    %183 = vector.load %arg21[%c0_88, %c0_89, %c0_90] : memref<2x1x128xf32, #tpu.memory_space<vmem>>, vector<1x1x128xf32>
    %184 = vector.shape_cast %183 : vector<1x1x128xf32> to vector<1x128xf32>
    %cst_91 = arith.constant dense<0.000000e+00> : vector<1x128xf32>
    %185 = tpu.matmul %2, %178, %cst_91 {dimension_numbers = #tpu.dot_dimension_numbers<[1], [0], [0], [1], [0, 0, 1, 1], [], []>} : vector<1x128xbf16>, vector<128x128xbf16>, vector<1x128xf32> -> vector<1x128xf32>
    %186 = arith.addf %185, %180 : vector<1x128xf32>
    %187 = arith.truncf %186 : vector<1x128xf32> to vector<1x128xbf16>
    %cst_92 = arith.constant dense<0.000000e+00> : vector<1x128xf32>
    %188 = tpu.matmul %187, %182, %cst_92 {dimension_numbers = #tpu.dot_dimension_numbers<[1], [0], [0], [1], [0, 0, 1, 1], [], []>} : vector<1x128xbf16>, vector<128x128xbf16>, vector<1x128xf32> -> vector<1x128xf32>
    %189 = arith.addf %188, %184 : vector<1x128xf32>
    %190 = vector.broadcast %189 : vector<1x128xf32> to vector<16x128xf32>
    %191 = arith.addf %176, %190 : vector<16x128xf32>
    %c0_93 = arith.constant 0 : index
    %c0_94 = arith.constant 0 : index
    %c0_95 = arith.constant 0 : index
    %192 = vector.load %arg22[%c0_93, %c0_94, %c0_95] : memref<2x1x128xf32, #tpu.memory_space<vmem>>, vector<1x1x128xf32>
    %193 = vector.shape_cast %192 : vector<1x1x128xf32> to vector<1x128xf32>
    %c0_96 = arith.constant 0 : index
    %c0_97 = arith.constant 0 : index
    %c0_98 = arith.constant 0 : index
    %194 = vector.load %arg23[%c0_96, %c0_97, %c0_98] : memref<2x1x128xf32, #tpu.memory_space<vmem>>, vector<1x1x128xf32>
    %195 = vector.shape_cast %194 : vector<1x1x128xf32> to vector<1x128xf32>
    %cst_99 = arith.constant dense<0.000000e+00> : vector<16xf32>
    %196 = vector.multi_reduction <add>, %191, %cst_99 [1] : vector<16x128xf32> to vector<16xf32>
    %197 = vector.shape_cast %196 : vector<16xf32> to vector<16x1xf32>
    %cst_100 = arith.constant 1.280000e+02 : f32
    %198 = vector.broadcast %cst_100 : f32 to vector<16x1xf32>
    %199 = arith.divf %197, %198 : vector<16x1xf32>
    %200 = vector.broadcast %199 : vector<16x1xf32> to vector<16x128xf32>
    %201 = arith.subf %191, %200 : vector<16x128xf32>
    %202 = arith.mulf %201, %201 : vector<16x128xf32>
    %cst_101 = arith.constant dense<0.000000e+00> : vector<16xf32>
    %203 = vector.multi_reduction <add>, %202, %cst_101 [1] : vector<16x128xf32> to vector<16xf32>
    %204 = vector.shape_cast %203 : vector<16xf32> to vector<16x1xf32>
    %cst_102 = arith.constant 1.280000e+02 : f32
    %205 = vector.broadcast %cst_102 : f32 to vector<16x1xf32>
    %206 = arith.divf %204, %205 : vector<16x1xf32>
    %207 = vector.broadcast %199 : vector<16x1xf32> to vector<16x128xf32>
    %208 = arith.subf %191, %207 : vector<16x128xf32>
    %cst_103 = arith.constant 9.99999974E-6 : f32
    %209 = vector.broadcast %cst_103 : f32 to vector<16x1xf32>
    %210 = arith.addf %206, %209 : vector<16x1xf32>
    %211 = math.rsqrt %210 : vector<16x1xf32>
    %212 = vector.broadcast %211 : vector<16x1xf32> to vector<16x128xf32>
    %213 = arith.mulf %208, %212 : vector<16x128xf32>
    %214 = vector.broadcast %193 : vector<1x128xf32> to vector<16x128xf32>
    %215 = arith.mulf %213, %214 : vector<16x128xf32>
    %216 = vector.broadcast %195 : vector<1x128xf32> to vector<16x128xf32>
    %217 = arith.addf %215, %216 : vector<16x128xf32>
    %218 = arith.truncf %217 : vector<16x128xf32> to vector<16x128xbf16>
    %c0_104 = arith.constant 0 : index
    %c0_105 = arith.constant 0 : index
    %c0_106 = arith.constant 0 : index
    %219 = vector.load %arg24[%c0_104, %c0_105, %c0_106] : memref<2x128x256xbf16, #tpu.memory_space<vmem>>, vector<1x128x256xbf16>
    %220 = vector.shape_cast %219 : vector<1x128x256xbf16> to vector<128x256xbf16>
    %cst_107 = arith.constant dense<0.000000e+00> : vector<16x256xf32>
    %221 = tpu.matmul %218, %220, %cst_107 {dimension_numbers = #tpu.dot_dimension_numbers<[1], [0], [0], [1], [0, 0, 1, 1], [], []>} : vector<16x128xbf16>, vector<128x256xbf16>, vector<16x256xf32> -> vector<16x256xf32>
    %c0_108 = arith.constant 0 : index
    %c0_109 = arith.constant 0 : index
    %c0_110 = arith.constant 0 : index
    %222 = vector.load %arg25[%c0_108, %c0_109, %c0_110] : memref<2x1x256xf32, #tpu.memory_space<vmem>>, vector<1x1x256xf32>
    %223 = vector.shape_cast %222 : vector<1x1x256xf32> to vector<1x256xf32>
    %224 = vector.broadcast %223 : vector<1x256xf32> to vector<16x256xf32>
    %225 = arith.addf %221, %224 : vector<16x256xf32>
    %cst_111 = arith.constant 0.000000e+00 : f32
    %226 = vector.broadcast %cst_111 : f32 to vector<16x256xf32>
    %227 = arith.maximumf %225, %226 : vector<16x256xf32>
    %228 = arith.truncf %227 : vector<16x256xf32> to vector<16x256xbf16>
    %c0_112 = arith.constant 0 : index
    %c0_113 = arith.constant 0 : index
    %c0_114 = arith.constant 0 : index
    %229 = vector.load %arg26[%c0_112, %c0_113, %c0_114] : memref<2x256x128xbf16, #tpu.memory_space<vmem>>, vector<1x256x128xbf16>
    %230 = vector.shape_cast %229 : vector<1x256x128xbf16> to vector<256x128xbf16>
    %cst_115 = arith.constant dense<0.000000e+00> : vector<16x128xf32>
    %231 = tpu.matmul %228, %230, %cst_115 {dimension_numbers = #tpu.dot_dimension_numbers<[1], [0], [0], [1], [0, 0, 1, 1], [], []>} : vector<16x256xbf16>, vector<256x128xbf16>, vector<16x128xf32> -> vector<16x128xf32>
    %c0_116 = arith.constant 0 : index
    %c0_117 = arith.constant 0 : index
    %c0_118 = arith.constant 0 : index
    %232 = vector.load %arg27[%c0_116, %c0_117, %c0_118] : memref<2x1x128xf32, #tpu.memory_space<vmem>>, vector<1x1x128xf32>
    %233 = vector.shape_cast %232 : vector<1x1x128xf32> to vector<1x128xf32>
    %234 = vector.broadcast %233 : vector<1x128xf32> to vector<16x128xf32>
    %235 = arith.addf %231, %234 : vector<16x128xf32>
    %236 = arith.addf %217, %235 : vector<16x128xf32>
    %c0_119 = arith.constant 0 : index
    %c0_120 = arith.constant 0 : index
    %c0_121 = arith.constant 0 : index
    %237 = vector.load %arg28[%c0_119, %c0_120, %c0_121] : memref<2x1x128xf32, #tpu.memory_space<vmem>>, vector<1x1x128xf32>
    %238 = vector.shape_cast %237 : vector<1x1x128xf32> to vector<1x128xf32>
    %c0_122 = arith.constant 0 : index
    %c0_123 = arith.constant 0 : index
    %c0_124 = arith.constant 0 : index
    %239 = vector.load %arg29[%c0_122, %c0_123, %c0_124] : memref<2x1x128xf32, #tpu.memory_space<vmem>>, vector<1x1x128xf32>
    %240 = vector.shape_cast %239 : vector<1x1x128xf32> to vector<1x128xf32>
    %cst_125 = arith.constant dense<0.000000e+00> : vector<16xf32>
    %241 = vector.multi_reduction <add>, %236, %cst_125 [1] : vector<16x128xf32> to vector<16xf32>
    %242 = vector.shape_cast %241 : vector<16xf32> to vector<16x1xf32>
    %cst_126 = arith.constant 1.280000e+02 : f32
    %243 = vector.broadcast %cst_126 : f32 to vector<16x1xf32>
    %244 = arith.divf %242, %243 : vector<16x1xf32>
    %245 = vector.broadcast %244 : vector<16x1xf32> to vector<16x128xf32>
    %246 = arith.subf %236, %245 : vector<16x128xf32>
    %247 = arith.mulf %246, %246 : vector<16x128xf32>
    %cst_127 = arith.constant dense<0.000000e+00> : vector<16xf32>
    %248 = vector.multi_reduction <add>, %247, %cst_127 [1] : vector<16x128xf32> to vector<16xf32>
    %249 = vector.shape_cast %248 : vector<16xf32> to vector<16x1xf32>
    %cst_128 = arith.constant 1.280000e+02 : f32
    %250 = vector.broadcast %cst_128 : f32 to vector<16x1xf32>
    %251 = arith.divf %249, %250 : vector<16x1xf32>
    %252 = vector.broadcast %244 : vector<16x1xf32> to vector<16x128xf32>
    %253 = arith.subf %236, %252 : vector<16x128xf32>
    %cst_129 = arith.constant 9.99999974E-6 : f32
    %254 = vector.broadcast %cst_129 : f32 to vector<16x1xf32>
    %255 = arith.addf %251, %254 : vector<16x1xf32>
    %256 = math.rsqrt %255 : vector<16x1xf32>
    %257 = vector.broadcast %256 : vector<16x1xf32> to vector<16x128xf32>
    %258 = arith.mulf %253, %257 : vector<16x128xf32>
    %259 = vector.broadcast %238 : vector<1x128xf32> to vector<16x128xf32>
    %260 = arith.mulf %258, %259 : vector<16x128xf32>
    %261 = vector.broadcast %240 : vector<1x128xf32> to vector<16x128xf32>
    %262 = arith.addf %260, %261 : vector<16x128xf32>
    %263 = arith.truncf %262 : vector<16x128xf32> to vector<16x128xbf16>
    %c1 = arith.constant 1 : index
    %c0_130 = arith.constant 0 : index
    %c0_131 = arith.constant 0 : index
    %264 = vector.load %arg8[%c1, %c0_130, %c0_131] : memref<2x128x128xbf16, #tpu.memory_space<vmem>>, vector<1x128x128xbf16>
    %265 = vector.shape_cast %264 : vector<1x128x128xbf16> to vector<128x128xbf16>
    %cst_132 = arith.constant dense<0.000000e+00> : vector<16x128xf32>
    %266 = tpu.matmul %263, %265, %cst_132 {dimension_numbers = #tpu.dot_dimension_numbers<[1], [0], [0], [1], [0, 0, 1, 1], [], []>} : vector<16x128xbf16>, vector<128x128xbf16>, vector<16x128xf32> -> vector<16x128xf32>
    %c1_133 = arith.constant 1 : index
    %c0_134 = arith.constant 0 : index
    %c0_135 = arith.constant 0 : index
    %267 = vector.load %arg9[%c1_133, %c0_134, %c0_135] : memref<2x1x128xf32, #tpu.memory_space<vmem>>, vector<1x1x128xf32>
    %268 = vector.shape_cast %267 : vector<1x1x128xf32> to vector<1x128xf32>
    %269 = vector.broadcast %268 : vector<1x128xf32> to vector<16x128xf32>
    %270 = arith.addf %266, %269 : vector<16x128xf32>
    %c1_136 = arith.constant 1 : index
    %c0_137 = arith.constant 0 : index
    %c0_138 = arith.constant 0 : index
    %271 = vector.load %arg10[%c1_136, %c0_137, %c0_138] : memref<2x128x128xbf16, #tpu.memory_space<vmem>>, vector<1x128x128xbf16>
    %272 = vector.shape_cast %271 : vector<1x128x128xbf16> to vector<128x128xbf16>
    %cst_139 = arith.constant dense<0.000000e+00> : vector<16x128xf32>
    %273 = tpu.matmul %263, %272, %cst_139 {dimension_numbers = #tpu.dot_dimension_numbers<[1], [0], [0], [1], [0, 0, 1, 1], [], []>} : vector<16x128xbf16>, vector<128x128xbf16>, vector<16x128xf32> -> vector<16x128xf32>
    %c1_140 = arith.constant 1 : index
    %c0_141 = arith.constant 0 : index
    %c0_142 = arith.constant 0 : index
    %274 = vector.load %arg11[%c1_140, %c0_141, %c0_142] : memref<2x1x128xf32, #tpu.memory_space<vmem>>, vector<1x1x128xf32>
    %275 = vector.shape_cast %274 : vector<1x1x128xf32> to vector<1x128xf32>
    %276 = vector.broadcast %275 : vector<1x128xf32> to vector<16x128xf32>
    %277 = arith.addf %273, %276 : vector<16x128xf32>
    %c1_143 = arith.constant 1 : index
    %c0_144 = arith.constant 0 : index
    %c0_145 = arith.constant 0 : index
    %278 = vector.load %arg12[%c1_143, %c0_144, %c0_145] : memref<2x128x128xbf16, #tpu.memory_space<vmem>>, vector<1x128x128xbf16>
    %279 = vector.shape_cast %278 : vector<1x128x128xbf16> to vector<128x128xbf16>
    %cst_146 = arith.constant dense<0.000000e+00> : vector<16x128xf32>
    %280 = tpu.matmul %263, %279, %cst_146 {dimension_numbers = #tpu.dot_dimension_numbers<[1], [0], [0], [1], [0, 0, 1, 1], [], []>} : vector<16x128xbf16>, vector<128x128xbf16>, vector<16x128xf32> -> vector<16x128xf32>
    %c1_147 = arith.constant 1 : index
    %c0_148 = arith.constant 0 : index
    %c0_149 = arith.constant 0 : index
    %281 = vector.load %arg13[%c1_147, %c0_148, %c0_149] : memref<2x1x128xf32, #tpu.memory_space<vmem>>, vector<1x1x128xf32>
    %282 = vector.shape_cast %281 : vector<1x1x128xf32> to vector<1x128xf32>
    %283 = vector.broadcast %282 : vector<1x128xf32> to vector<16x128xf32>
    %284 = arith.addf %280, %283 : vector<16x128xf32>
    %285 = vector.extract_strided_slice %270 {offsets = [0, 0], sizes = [16, 32], strides = [1, 1]} : vector<16x128xf32> to vector<16x32xf32>
    %286 = arith.truncf %285 : vector<16x32xf32> to vector<16x32xbf16>
    %287 = vector.extract_strided_slice %277 {offsets = [0, 0], sizes = [16, 32], strides = [1, 1]} : vector<16x128xf32> to vector<16x32xf32>
    %288 = arith.truncf %287 : vector<16x32xf32> to vector<16x32xbf16>
    %289 = vector.extract_strided_slice %284 {offsets = [0, 0], sizes = [16, 32], strides = [1, 1]} : vector<16x128xf32> to vector<16x32xf32>
    %290 = arith.truncf %289 : vector<16x32xf32> to vector<16x32xbf16>
    %cst_150 = arith.constant dense<0.000000e+00> : vector<16x16xf32>
    %291 = tpu.matmul %286, %288, %cst_150 {dimension_numbers = #tpu.dot_dimension_numbers<[1], [1], [0], [0], [0, 0, 1, 0], [], []>} : vector<16x32xbf16>, vector<16x32xbf16>, vector<16x16xf32> -> vector<16x16xf32>
    %cst_151 = arith.constant 0xFF800000 : f32
    %292 = vector.broadcast %cst_151 : f32 to vector<16x16xf32>
    %293 = arith.select %38, %291, %292 : vector<16x16xi1>, vector<16x16xf32>
    %cst_152 = arith.constant dense<0xFF800000> : vector<16xf32>
    %294 = vector.multi_reduction <maximumf>, %293, %cst_152 [1] : vector<16x16xf32> to vector<16xf32>
    %295 = vector.shape_cast %294 : vector<16xf32> to vector<16x1xf32>
    %296 = vector.broadcast %295 : vector<16x1xf32> to vector<16x16xf32>
    %297 = arith.subf %293, %296 : vector<16x16xf32>
    %298 = math.exp %297 : vector<16x16xf32>
    %cst_153 = arith.constant dense<0.000000e+00> : vector<16xf32>
    %299 = vector.multi_reduction <add>, %298, %cst_153 [1] : vector<16x16xf32> to vector<16xf32>
    %300 = vector.shape_cast %299 : vector<16xf32> to vector<16x1xf32>
    %301 = vector.broadcast %300 : vector<16x1xf32> to vector<16x16xf32>
    %302 = arith.divf %298, %301 : vector<16x16xf32>
    %303 = arith.truncf %302 : vector<16x16xf32> to vector<16x16xbf16>
    %cst_154 = arith.constant dense<0.000000e+00> : vector<16x32xf32>
    %304 = tpu.matmul %303, %290, %cst_154 {dimension_numbers = #tpu.dot_dimension_numbers<[1], [0], [0], [1], [0, 0, 1, 1], [], []>} : vector<16x16xbf16>, vector<16x32xbf16>, vector<16x32xf32> -> vector<16x32xf32>
    %305 = vector.extract_strided_slice %270 {offsets = [0, 32], sizes = [16, 32], strides = [1, 1]} : vector<16x128xf32> to vector<16x32xf32>
    %306 = arith.truncf %305 : vector<16x32xf32> to vector<16x32xbf16>
    %307 = vector.extract_strided_slice %277 {offsets = [0, 32], sizes = [16, 32], strides = [1, 1]} : vector<16x128xf32> to vector<16x32xf32>
    %308 = arith.truncf %307 : vector<16x32xf32> to vector<16x32xbf16>
    %309 = vector.extract_strided_slice %284 {offsets = [0, 32], sizes = [16, 32], strides = [1, 1]} : vector<16x128xf32> to vector<16x32xf32>
    %310 = arith.truncf %309 : vector<16x32xf32> to vector<16x32xbf16>
    %cst_155 = arith.constant dense<0.000000e+00> : vector<16x16xf32>
    %311 = tpu.matmul %306, %308, %cst_155 {dimension_numbers = #tpu.dot_dimension_numbers<[1], [1], [0], [0], [0, 0, 1, 0], [], []>} : vector<16x32xbf16>, vector<16x32xbf16>, vector<16x16xf32> -> vector<16x16xf32>
    %cst_156 = arith.constant 0xFF800000 : f32
    %312 = vector.broadcast %cst_156 : f32 to vector<16x16xf32>
    %313 = arith.select %38, %311, %312 : vector<16x16xi1>, vector<16x16xf32>
    %cst_157 = arith.constant dense<0xFF800000> : vector<16xf32>
    %314 = vector.multi_reduction <maximumf>, %313, %cst_157 [1] : vector<16x16xf32> to vector<16xf32>
    %315 = vector.shape_cast %314 : vector<16xf32> to vector<16x1xf32>
    %316 = vector.broadcast %315 : vector<16x1xf32> to vector<16x16xf32>
    %317 = arith.subf %313, %316 : vector<16x16xf32>
    %318 = math.exp %317 : vector<16x16xf32>
    %cst_158 = arith.constant dense<0.000000e+00> : vector<16xf32>
    %319 = vector.multi_reduction <add>, %318, %cst_158 [1] : vector<16x16xf32> to vector<16xf32>
    %320 = vector.shape_cast %319 : vector<16xf32> to vector<16x1xf32>
    %321 = vector.broadcast %320 : vector<16x1xf32> to vector<16x16xf32>
    %322 = arith.divf %318, %321 : vector<16x16xf32>
    %323 = arith.truncf %322 : vector<16x16xf32> to vector<16x16xbf16>
    %cst_159 = arith.constant dense<0.000000e+00> : vector<16x32xf32>
    %324 = tpu.matmul %323, %310, %cst_159 {dimension_numbers = #tpu.dot_dimension_numbers<[1], [0], [0], [1], [0, 0, 1, 1], [], []>} : vector<16x16xbf16>, vector<16x32xbf16>, vector<16x32xf32> -> vector<16x32xf32>
    %325 = vector.extract_strided_slice %270 {offsets = [0, 64], sizes = [16, 32], strides = [1, 1]} : vector<16x128xf32> to vector<16x32xf32>
    %326 = arith.truncf %325 : vector<16x32xf32> to vector<16x32xbf16>
    %327 = vector.extract_strided_slice %277 {offsets = [0, 64], sizes = [16, 32], strides = [1, 1]} : vector<16x128xf32> to vector<16x32xf32>
    %328 = arith.truncf %327 : vector<16x32xf32> to vector<16x32xbf16>
    %329 = vector.extract_strided_slice %284 {offsets = [0, 64], sizes = [16, 32], strides = [1, 1]} : vector<16x128xf32> to vector<16x32xf32>
    %330 = arith.truncf %329 : vector<16x32xf32> to vector<16x32xbf16>
    %cst_160 = arith.constant dense<0.000000e+00> : vector<16x16xf32>
    %331 = tpu.matmul %326, %328, %cst_160 {dimension_numbers = #tpu.dot_dimension_numbers<[1], [1], [0], [0], [0, 0, 1, 0], [], []>} : vector<16x32xbf16>, vector<16x32xbf16>, vector<16x16xf32> -> vector<16x16xf32>
    %cst_161 = arith.constant 0xFF800000 : f32
    %332 = vector.broadcast %cst_161 : f32 to vector<16x16xf32>
    %333 = arith.select %38, %331, %332 : vector<16x16xi1>, vector<16x16xf32>
    %cst_162 = arith.constant dense<0xFF800000> : vector<16xf32>
    %334 = vector.multi_reduction <maximumf>, %333, %cst_162 [1] : vector<16x16xf32> to vector<16xf32>
    %335 = vector.shape_cast %334 : vector<16xf32> to vector<16x1xf32>
    %336 = vector.broadcast %335 : vector<16x1xf32> to vector<16x16xf32>
    %337 = arith.subf %333, %336 : vector<16x16xf32>
    %338 = math.exp %337 : vector<16x16xf32>
    %cst_163 = arith.constant dense<0.000000e+00> : vector<16xf32>
    %339 = vector.multi_reduction <add>, %338, %cst_163 [1] : vector<16x16xf32> to vector<16xf32>
    %340 = vector.shape_cast %339 : vector<16xf32> to vector<16x1xf32>
    %341 = vector.broadcast %340 : vector<16x1xf32> to vector<16x16xf32>
    %342 = arith.divf %338, %341 : vector<16x16xf32>
    %343 = arith.truncf %342 : vector<16x16xf32> to vector<16x16xbf16>
    %cst_164 = arith.constant dense<0.000000e+00> : vector<16x32xf32>
    %344 = tpu.matmul %343, %330, %cst_164 {dimension_numbers = #tpu.dot_dimension_numbers<[1], [0], [0], [1], [0, 0, 1, 1], [], []>} : vector<16x16xbf16>, vector<16x32xbf16>, vector<16x32xf32> -> vector<16x32xf32>
    %345 = vector.extract_strided_slice %270 {offsets = [0, 96], sizes = [16, 32], strides = [1, 1]} : vector<16x128xf32> to vector<16x32xf32>
    %346 = arith.truncf %345 : vector<16x32xf32> to vector<16x32xbf16>
    %347 = vector.extract_strided_slice %277 {offsets = [0, 96], sizes = [16, 32], strides = [1, 1]} : vector<16x128xf32> to vector<16x32xf32>
    %348 = arith.truncf %347 : vector<16x32xf32> to vector<16x32xbf16>
    %349 = vector.extract_strided_slice %284 {offsets = [0, 96], sizes = [16, 32], strides = [1, 1]} : vector<16x128xf32> to vector<16x32xf32>
    %350 = arith.truncf %349 : vector<16x32xf32> to vector<16x32xbf16>
    %cst_165 = arith.constant dense<0.000000e+00> : vector<16x16xf32>
    %351 = tpu.matmul %346, %348, %cst_165 {dimension_numbers = #tpu.dot_dimension_numbers<[1], [1], [0], [0], [0, 0, 1, 0], [], []>} : vector<16x32xbf16>, vector<16x32xbf16>, vector<16x16xf32> -> vector<16x16xf32>
    %cst_166 = arith.constant 0xFF800000 : f32
    %352 = vector.broadcast %cst_166 : f32 to vector<16x16xf32>
    %353 = arith.select %38, %351, %352 : vector<16x16xi1>, vector<16x16xf32>
    %cst_167 = arith.constant dense<0xFF800000> : vector<16xf32>
    %354 = vector.multi_reduction <maximumf>, %353, %cst_167 [1] : vector<16x16xf32> to vector<16xf32>
    %355 = vector.shape_cast %354 : vector<16xf32> to vector<16x1xf32>
    %356 = vector.broadcast %355 : vector<16x1xf32> to vector<16x16xf32>
    %357 = arith.subf %353, %356 : vector<16x16xf32>
    %358 = math.exp %357 : vector<16x16xf32>
    %cst_168 = arith.constant dense<0.000000e+00> : vector<16xf32>
    %359 = vector.multi_reduction <add>, %358, %cst_168 [1] : vector<16x16xf32> to vector<16xf32>
    %360 = vector.shape_cast %359 : vector<16xf32> to vector<16x1xf32>
    %361 = vector.broadcast %360 : vector<16x1xf32> to vector<16x16xf32>
    %362 = arith.divf %358, %361 : vector<16x16xf32>
    %363 = arith.truncf %362 : vector<16x16xf32> to vector<16x16xbf16>
    %cst_169 = arith.constant dense<0.000000e+00> : vector<16x32xf32>
    %364 = tpu.matmul %363, %350, %cst_169 {dimension_numbers = #tpu.dot_dimension_numbers<[1], [0], [0], [1], [0, 0, 1, 1], [], []>} : vector<16x16xbf16>, vector<16x32xbf16>, vector<16x32xf32> -> vector<16x32xf32>
    %365 = tpu.concatenate %304, %324, %344, %364 in 1 : vector<16x32xf32>, vector<16x32xf32>, vector<16x32xf32>, vector<16x32xf32> -> vector<16x128xf32>
    %366 = arith.truncf %365 : vector<16x128xf32> to vector<16x128xbf16>
    %c1_170 = arith.constant 1 : index
    %c0_171 = arith.constant 0 : index
    %c0_172 = arith.constant 0 : index
    %367 = vector.load %arg14[%c1_170, %c0_171, %c0_172] : memref<2x128x128xbf16, #tpu.memory_space<vmem>>, vector<1x128x128xbf16>
    %368 = vector.shape_cast %367 : vector<1x128x128xbf16> to vector<128x128xbf16>
    %cst_173 = arith.constant dense<0.000000e+00> : vector<16x128xf32>
    %369 = tpu.matmul %366, %368, %cst_173 {dimension_numbers = #tpu.dot_dimension_numbers<[1], [0], [0], [1], [0, 0, 1, 1], [], []>} : vector<16x128xbf16>, vector<128x128xbf16>, vector<16x128xf32> -> vector<16x128xf32>
    %c1_174 = arith.constant 1 : index
    %c0_175 = arith.constant 0 : index
    %c0_176 = arith.constant 0 : index
    %370 = vector.load %arg15[%c1_174, %c0_175, %c0_176] : memref<2x1x128xf32, #tpu.memory_space<vmem>>, vector<1x1x128xf32>
    %371 = vector.shape_cast %370 : vector<1x1x128xf32> to vector<1x128xf32>
    %372 = vector.broadcast %371 : vector<1x128xf32> to vector<16x128xf32>
    %373 = arith.addf %369, %372 : vector<16x128xf32>
    %374 = arith.addf %262, %373 : vector<16x128xf32>
    %c1_177 = arith.constant 1 : index
    %c0_178 = arith.constant 0 : index
    %c0_179 = arith.constant 0 : index
    %375 = vector.load %arg16[%c1_177, %c0_178, %c0_179] : memref<2x1x128xf32, #tpu.memory_space<vmem>>, vector<1x1x128xf32>
    %376 = vector.shape_cast %375 : vector<1x1x128xf32> to vector<1x128xf32>
    %c1_180 = arith.constant 1 : index
    %c0_181 = arith.constant 0 : index
    %c0_182 = arith.constant 0 : index
    %377 = vector.load %arg17[%c1_180, %c0_181, %c0_182] : memref<2x1x128xf32, #tpu.memory_space<vmem>>, vector<1x1x128xf32>
    %378 = vector.shape_cast %377 : vector<1x1x128xf32> to vector<1x128xf32>
    %cst_183 = arith.constant dense<0.000000e+00> : vector<16xf32>
    %379 = vector.multi_reduction <add>, %374, %cst_183 [1] : vector<16x128xf32> to vector<16xf32>
    %380 = vector.shape_cast %379 : vector<16xf32> to vector<16x1xf32>
    %cst_184 = arith.constant 1.280000e+02 : f32
    %381 = vector.broadcast %cst_184 : f32 to vector<16x1xf32>
    %382 = arith.divf %380, %381 : vector<16x1xf32>
    %383 = vector.broadcast %382 : vector<16x1xf32> to vector<16x128xf32>
    %384 = arith.subf %374, %383 : vector<16x128xf32>
    %385 = arith.mulf %384, %384 : vector<16x128xf32>
    %cst_185 = arith.constant dense<0.000000e+00> : vector<16xf32>
    %386 = vector.multi_reduction <add>, %385, %cst_185 [1] : vector<16x128xf32> to vector<16xf32>
    %387 = vector.shape_cast %386 : vector<16xf32> to vector<16x1xf32>
    %cst_186 = arith.constant 1.280000e+02 : f32
    %388 = vector.broadcast %cst_186 : f32 to vector<16x1xf32>
    %389 = arith.divf %387, %388 : vector<16x1xf32>
    %390 = vector.broadcast %382 : vector<16x1xf32> to vector<16x128xf32>
    %391 = arith.subf %374, %390 : vector<16x128xf32>
    %cst_187 = arith.constant 9.99999974E-6 : f32
    %392 = vector.broadcast %cst_187 : f32 to vector<16x1xf32>
    %393 = arith.addf %389, %392 : vector<16x1xf32>
    %394 = math.rsqrt %393 : vector<16x1xf32>
    %395 = vector.broadcast %394 : vector<16x1xf32> to vector<16x128xf32>
    %396 = arith.mulf %391, %395 : vector<16x128xf32>
    %397 = vector.broadcast %376 : vector<1x128xf32> to vector<16x128xf32>
    %398 = arith.mulf %396, %397 : vector<16x128xf32>
    %399 = vector.broadcast %378 : vector<1x128xf32> to vector<16x128xf32>
    %400 = arith.addf %398, %399 : vector<16x128xf32>
    %c1_188 = arith.constant 1 : index
    %c0_189 = arith.constant 0 : index
    %c0_190 = arith.constant 0 : index
    %401 = vector.load %arg18[%c1_188, %c0_189, %c0_190] : memref<2x128x128xbf16, #tpu.memory_space<vmem>>, vector<1x128x128xbf16>
    %402 = vector.shape_cast %401 : vector<1x128x128xbf16> to vector<128x128xbf16>
    %c1_191 = arith.constant 1 : index
    %c0_192 = arith.constant 0 : index
    %c0_193 = arith.constant 0 : index
    %403 = vector.load %arg19[%c1_191, %c0_192, %c0_193] : memref<2x1x128xf32, #tpu.memory_space<vmem>>, vector<1x1x128xf32>
    %404 = vector.shape_cast %403 : vector<1x1x128xf32> to vector<1x128xf32>
    %c1_194 = arith.constant 1 : index
    %c0_195 = arith.constant 0 : index
    %c0_196 = arith.constant 0 : index
    %405 = vector.load %arg20[%c1_194, %c0_195, %c0_196] : memref<2x128x128xbf16, #tpu.memory_space<vmem>>, vector<1x128x128xbf16>
    %406 = vector.shape_cast %405 : vector<1x128x128xbf16> to vector<128x128xbf16>
    %c1_197 = arith.constant 1 : index
    %c0_198 = arith.constant 0 : index
    %c0_199 = arith.constant 0 : index
    %407 = vector.load %arg21[%c1_197, %c0_198, %c0_199] : memref<2x1x128xf32, #tpu.memory_space<vmem>>, vector<1x1x128xf32>
    %408 = vector.shape_cast %407 : vector<1x1x128xf32> to vector<1x128xf32>
    %cst_200 = arith.constant dense<0.000000e+00> : vector<1x128xf32>
    %409 = tpu.matmul %2, %402, %cst_200 {dimension_numbers = #tpu.dot_dimension_numbers<[1], [0], [0], [1], [0, 0, 1, 1], [], []>} : vector<1x128xbf16>, vector<128x128xbf16>, vector<1x128xf32> -> vector<1x128xf32>
    %410 = arith.addf %409, %404 : vector<1x128xf32>
    %411 = arith.truncf %410 : vector<1x128xf32> to vector<1x128xbf16>
    %cst_201 = arith.constant dense<0.000000e+00> : vector<1x128xf32>
    %412 = tpu.matmul %411, %406, %cst_201 {dimension_numbers = #tpu.dot_dimension_numbers<[1], [0], [0], [1], [0, 0, 1, 1], [], []>} : vector<1x128xbf16>, vector<128x128xbf16>, vector<1x128xf32> -> vector<1x128xf32>
    %413 = arith.addf %412, %408 : vector<1x128xf32>
    %414 = vector.broadcast %413 : vector<1x128xf32> to vector<16x128xf32>
    %415 = arith.addf %400, %414 : vector<16x128xf32>
    %c1_202 = arith.constant 1 : index
    %c0_203 = arith.constant 0 : index
    %c0_204 = arith.constant 0 : index
    %416 = vector.load %arg22[%c1_202, %c0_203, %c0_204] : memref<2x1x128xf32, #tpu.memory_space<vmem>>, vector<1x1x128xf32>
    %417 = vector.shape_cast %416 : vector<1x1x128xf32> to vector<1x128xf32>
    %c1_205 = arith.constant 1 : index
    %c0_206 = arith.constant 0 : index
    %c0_207 = arith.constant 0 : index
    %418 = vector.load %arg23[%c1_205, %c0_206, %c0_207] : memref<2x1x128xf32, #tpu.memory_space<vmem>>, vector<1x1x128xf32>
    %419 = vector.shape_cast %418 : vector<1x1x128xf32> to vector<1x128xf32>
    %cst_208 = arith.constant dense<0.000000e+00> : vector<16xf32>
    %420 = vector.multi_reduction <add>, %415, %cst_208 [1] : vector<16x128xf32> to vector<16xf32>
    %421 = vector.shape_cast %420 : vector<16xf32> to vector<16x1xf32>
    %cst_209 = arith.constant 1.280000e+02 : f32
    %422 = vector.broadcast %cst_209 : f32 to vector<16x1xf32>
    %423 = arith.divf %421, %422 : vector<16x1xf32>
    %424 = vector.broadcast %423 : vector<16x1xf32> to vector<16x128xf32>
    %425 = arith.subf %415, %424 : vector<16x128xf32>
    %426 = arith.mulf %425, %425 : vector<16x128xf32>
    %cst_210 = arith.constant dense<0.000000e+00> : vector<16xf32>
    %427 = vector.multi_reduction <add>, %426, %cst_210 [1] : vector<16x128xf32> to vector<16xf32>
    %428 = vector.shape_cast %427 : vector<16xf32> to vector<16x1xf32>
    %cst_211 = arith.constant 1.280000e+02 : f32
    %429 = vector.broadcast %cst_211 : f32 to vector<16x1xf32>
    %430 = arith.divf %428, %429 : vector<16x1xf32>
    %431 = vector.broadcast %423 : vector<16x1xf32> to vector<16x128xf32>
    %432 = arith.subf %415, %431 : vector<16x128xf32>
    %cst_212 = arith.constant 9.99999974E-6 : f32
    %433 = vector.broadcast %cst_212 : f32 to vector<16x1xf32>
    %434 = arith.addf %430, %433 : vector<16x1xf32>
    %435 = math.rsqrt %434 : vector<16x1xf32>
    %436 = vector.broadcast %435 : vector<16x1xf32> to vector<16x128xf32>
    %437 = arith.mulf %432, %436 : vector<16x128xf32>
    %438 = vector.broadcast %417 : vector<1x128xf32> to vector<16x128xf32>
    %439 = arith.mulf %437, %438 : vector<16x128xf32>
    %440 = vector.broadcast %419 : vector<1x128xf32> to vector<16x128xf32>
    %441 = arith.addf %439, %440 : vector<16x128xf32>
    %442 = arith.truncf %441 : vector<16x128xf32> to vector<16x128xbf16>
    %c1_213 = arith.constant 1 : index
    %c0_214 = arith.constant 0 : index
    %c0_215 = arith.constant 0 : index
    %443 = vector.load %arg24[%c1_213, %c0_214, %c0_215] : memref<2x128x256xbf16, #tpu.memory_space<vmem>>, vector<1x128x256xbf16>
    %444 = vector.shape_cast %443 : vector<1x128x256xbf16> to vector<128x256xbf16>
    %cst_216 = arith.constant dense<0.000000e+00> : vector<16x256xf32>
    %445 = tpu.matmul %442, %444, %cst_216 {dimension_numbers = #tpu.dot_dimension_numbers<[1], [0], [0], [1], [0, 0, 1, 1], [], []>} : vector<16x128xbf16>, vector<128x256xbf16>, vector<16x256xf32> -> vector<16x256xf32>
    %c1_217 = arith.constant 1 : index
    %c0_218 = arith.constant 0 : index
    %c0_219 = arith.constant 0 : index
    %446 = vector.load %arg25[%c1_217, %c0_218, %c0_219] : memref<2x1x256xf32, #tpu.memory_space<vmem>>, vector<1x1x256xf32>
    %447 = vector.shape_cast %446 : vector<1x1x256xf32> to vector<1x256xf32>
    %448 = vector.broadcast %447 : vector<1x256xf32> to vector<16x256xf32>
    %449 = arith.addf %445, %448 : vector<16x256xf32>
    %cst_220 = arith.constant 0.000000e+00 : f32
    %450 = vector.broadcast %cst_220 : f32 to vector<16x256xf32>
    %451 = arith.maximumf %449, %450 : vector<16x256xf32>
    %452 = arith.truncf %451 : vector<16x256xf32> to vector<16x256xbf16>
    %c1_221 = arith.constant 1 : index
    %c0_222 = arith.constant 0 : index
    %c0_223 = arith.constant 0 : index
    %453 = vector.load %arg26[%c1_221, %c0_222, %c0_223] : memref<2x256x128xbf16, #tpu.memory_space<vmem>>, vector<1x256x128xbf16>
    %454 = vector.shape_cast %453 : vector<1x256x128xbf16> to vector<256x128xbf16>
    %cst_224 = arith.constant dense<0.000000e+00> : vector<16x128xf32>
    %455 = tpu.matmul %452, %454, %cst_224 {dimension_numbers = #tpu.dot_dimension_numbers<[1], [0], [0], [1], [0, 0, 1, 1], [], []>} : vector<16x256xbf16>, vector<256x128xbf16>, vector<16x128xf32> -> vector<16x128xf32>
    %c1_225 = arith.constant 1 : index
    %c0_226 = arith.constant 0 : index
    %c0_227 = arith.constant 0 : index
    %456 = vector.load %arg27[%c1_225, %c0_226, %c0_227] : memref<2x1x128xf32, #tpu.memory_space<vmem>>, vector<1x1x128xf32>
    %457 = vector.shape_cast %456 : vector<1x1x128xf32> to vector<1x128xf32>
    %458 = vector.broadcast %457 : vector<1x128xf32> to vector<16x128xf32>
    %459 = arith.addf %455, %458 : vector<16x128xf32>
    %460 = arith.addf %441, %459 : vector<16x128xf32>
    %c1_228 = arith.constant 1 : index
    %c0_229 = arith.constant 0 : index
    %c0_230 = arith.constant 0 : index
    %461 = vector.load %arg28[%c1_228, %c0_229, %c0_230] : memref<2x1x128xf32, #tpu.memory_space<vmem>>, vector<1x1x128xf32>
    %462 = vector.shape_cast %461 : vector<1x1x128xf32> to vector<1x128xf32>
    %c1_231 = arith.constant 1 : index
    %c0_232 = arith.constant 0 : index
    %c0_233 = arith.constant 0 : index
    %463 = vector.load %arg29[%c1_231, %c0_232, %c0_233] : memref<2x1x128xf32, #tpu.memory_space<vmem>>, vector<1x1x128xf32>
    %464 = vector.shape_cast %463 : vector<1x1x128xf32> to vector<1x128xf32>
    %cst_234 = arith.constant dense<0.000000e+00> : vector<16xf32>
    %465 = vector.multi_reduction <add>, %460, %cst_234 [1] : vector<16x128xf32> to vector<16xf32>
    %466 = vector.shape_cast %465 : vector<16xf32> to vector<16x1xf32>
    %cst_235 = arith.constant 1.280000e+02 : f32
    %467 = vector.broadcast %cst_235 : f32 to vector<16x1xf32>
    %468 = arith.divf %466, %467 : vector<16x1xf32>
    %469 = vector.broadcast %468 : vector<16x1xf32> to vector<16x128xf32>
    %470 = arith.subf %460, %469 : vector<16x128xf32>
    %471 = arith.mulf %470, %470 : vector<16x128xf32>
    %cst_236 = arith.constant dense<0.000000e+00> : vector<16xf32>
    %472 = vector.multi_reduction <add>, %471, %cst_236 [1] : vector<16x128xf32> to vector<16xf32>
    %473 = vector.shape_cast %472 : vector<16xf32> to vector<16x1xf32>
    %cst_237 = arith.constant 1.280000e+02 : f32
    %474 = vector.broadcast %cst_237 : f32 to vector<16x1xf32>
    %475 = arith.divf %473, %474 : vector<16x1xf32>
    %476 = vector.broadcast %468 : vector<16x1xf32> to vector<16x128xf32>
    %477 = arith.subf %460, %476 : vector<16x128xf32>
    %cst_238 = arith.constant 9.99999974E-6 : f32
    %478 = vector.broadcast %cst_238 : f32 to vector<16x1xf32>
    %479 = arith.addf %475, %478 : vector<16x1xf32>
    %480 = math.rsqrt %479 : vector<16x1xf32>
    %481 = vector.broadcast %480 : vector<16x1xf32> to vector<16x128xf32>
    %482 = arith.mulf %477, %481 : vector<16x128xf32>
    %483 = vector.broadcast %462 : vector<1x128xf32> to vector<16x128xf32>
    %484 = arith.mulf %482, %483 : vector<16x128xf32>
    %485 = vector.broadcast %464 : vector<1x128xf32> to vector<16x128xf32>
    %486 = arith.addf %484, %485 : vector<16x128xf32>
    %487 = vector.extract_strided_slice %486 {offsets = [0, 0], sizes = [8, 128], strides = [1, 1]} : vector<16x128xf32> to vector<8x128xf32>
    %488 = arith.truncf %487 : vector<8x128xf32> to vector<8x128xbf16>
    %c0_239 = arith.constant 0 : index
    %c0_240 = arith.constant 0 : index
    %489 = vector.load %arg30[%c0_239, %c0_240] : memref<128x256xbf16, #tpu.memory_space<vmem>>, vector<128x256xbf16>
    %cst_241 = arith.constant dense<0.000000e+00> : vector<8x256xf32>
    %490 = tpu.matmul %488, %489, %cst_241 {dimension_numbers = #tpu.dot_dimension_numbers<[1], [0], [0], [1], [0, 0, 1, 1], [], []>} : vector<8x128xbf16>, vector<128x256xbf16>, vector<8x256xf32> -> vector<8x256xf32>
    %c0_242 = arith.constant 0 : index
    %c0_243 = arith.constant 0 : index
    %c0_244 = arith.constant 0 : index
    %491 = vector.load %arg31[%c0_242, %c0_243, %c0_244] : memref<1x8x256xf32, #tpu.memory_space<vmem>>, vector<1x8x256xf32>
    %492 = vector.shape_cast %491 : vector<1x8x256xf32> to vector<8x256xf32>
    %493 = vector.shape_cast %490 : vector<8x256xf32> to vector<1x8x256xf32>
    tpu.vector_store %arg31[%c0_242, %c0_243, %c0_244], %493 {strides = array<i32>} : memref<1x8x256xf32, #tpu.memory_space<vmem>>, vector<1x8x256xf32>,
    return
  }
  func.func @transform_0(%arg0: i32) -> (i32, i32, i32) {
    %c0_i32 = arith.constant 0 : i32
    %c0_i32_0 = arith.constant 0 : i32
    %c0_i32_1 = arith.constant 0 : i32
    return %arg0, %c0_i32, %c0_i32_0 : i32, i32, i32
  }
  func.func @transform_1(%arg0: i32) -> (i32, i32) {
    %c0_i32 = arith.constant 0 : i32
    %c0_i32_0 = arith.constant 0 : i32
    %c0_i32_1 = arith.constant 0 : i32
    return %c0_i32, %c0_i32_0 : i32, i32
  }
  func.func @transform_2(%arg0: i32) -> (i32, i32) {
    %c0_i32 = arith.constant 0 : i32
    %c0_i32_0 = arith.constant 0 : i32
    %c0_i32_1 = arith.constant 0 : i32
    return %c0_i32, %c0_i32_0 : i32, i32
  }
  func.func @transform_3(%arg0: i32) -> (i32, i32) {
    %c0_i32 = arith.constant 0 : i32
    %c0_i32_0 = arith.constant 0 : i32
    %c0_i32_1 = arith.constant 0 : i32
    return %c0_i32, %c0_i32_0 : i32, i32
  }
  func.func @transform_4(%arg0: i32) -> (i32, i32) {
    %c0_i32 = arith.constant 0 : i32
    %c0_i32_0 = arith.constant 0 : i32
    %c0_i32_1 = arith.constant 0 : i32
    return %c0_i32, %c0_i32_0 : i32, i32
  }
  func.func @transform_5(%arg0: i32) -> (i32, i32) {
    %c0_i32 = arith.constant 0 : i32
    %c0_i32_0 = arith.constant 0 : i32
    %c0_i32_1 = arith.constant 0 : i32
    return %c0_i32, %c0_i32_0 : i32, i32
  }
  func.func @transform_6(%arg0: i32) -> (i32, i32) {
    %c0_i32 = arith.constant 0 : i32
    %c0_i32_0 = arith.constant 0 : i32
    %c0_i32_1 = arith.constant 0 : i32
    return %c0_i32, %c0_i32_0 : i32, i32
  }
  func.func @transform_7(%arg0: i32) -> (i32, i32, i32) {
    %c0_i32 = arith.constant 0 : i32
    %c0_i32_0 = arith.constant 0 : i32
    %c0_i32_1 = arith.constant 0 : i32
    %c0_i32_2 = arith.constant 0 : i32
    return %c0_i32, %c0_i32_0, %c0_i32_1 : i32, i32, i32
  }
  func.func @transform_8(%arg0: i32) -> (i32, i32, i32) {
    %c0_i32 = arith.constant 0 : i32
    %c0_i32_0 = arith.constant 0 : i32
    %c0_i32_1 = arith.constant 0 : i32
    %c0_i32_2 = arith.constant 0 : i32
    return %c0_i32, %c0_i32_0, %c0_i32_1 : i32, i32, i32
  }
  func.func @transform_9(%arg0: i32) -> (i32, i32, i32) {
    %c0_i32 = arith.constant 0 : i32
    %c0_i32_0 = arith.constant 0 : i32
    %c0_i32_1 = arith.constant 0 : i32
    %c0_i32_2 = arith.constant 0 : i32
    return %c0_i32, %c0_i32_0, %c0_i32_1 : i32, i32, i32
  }
  func.func @transform_10(%arg0: i32) -> (i32, i32, i32) {
    %c0_i32 = arith.constant 0 : i32
    %c0_i32_0 = arith.constant 0 : i32
    %c0_i32_1 = arith.constant 0 : i32
    %c0_i32_2 = arith.constant 0 : i32
    return %c0_i32, %c0_i32_0, %c0_i32_1 : i32, i32, i32
  }
  func.func @transform_11(%arg0: i32) -> (i32, i32, i32) {
    %c0_i32 = arith.constant 0 : i32
    %c0_i32_0 = arith.constant 0 : i32
    %c0_i32_1 = arith.constant 0 : i32
    %c0_i32_2 = arith.constant 0 : i32
    return %c0_i32, %c0_i32_0, %c0_i32_1 : i32, i32, i32
  }
  func.func @transform_12(%arg0: i32) -> (i32, i32, i32) {
    %c0_i32 = arith.constant 0 : i32
    %c0_i32_0 = arith.constant 0 : i32
    %c0_i32_1 = arith.constant 0 : i32
    %c0_i32_2 = arith.constant 0 : i32
    return %c0_i32, %c0_i32_0, %c0_i32_1 : i32, i32, i32
  }
  func.func @transform_13(%arg0: i32) -> (i32, i32, i32) {
    %c0_i32 = arith.constant 0 : i32
    %c0_i32_0 = arith.constant 0 : i32
    %c0_i32_1 = arith.constant 0 : i32
    %c0_i32_2 = arith.constant 0 : i32
    return %c0_i32, %c0_i32_0, %c0_i32_1 : i32, i32, i32
  }
  func.func @transform_14(%arg0: i32) -> (i32, i32, i32) {
    %c0_i32 = arith.constant 0 : i32
    %c0_i32_0 = arith.constant 0 : i32
    %c0_i32_1 = arith.constant 0 : i32
    %c0_i32_2 = arith.constant 0 : i32
    return %c0_i32, %c0_i32_0, %c0_i32_1 : i32, i32, i32
  }
  func.func @transform_15(%arg0: i32) -> (i32, i32, i32) {
    %c0_i32 = arith.constant 0 : i32
    %c0_i32_0 = arith.constant 0 : i32
    %c0_i32_1 = arith.constant 0 : i32
    %c0_i32_2 = arith.constant 0 : i32
    return %c0_i32, %c0_i32_0, %c0_i32_1 : i32, i32, i32
  }
  func.func @transform_16(%arg0: i32) -> (i32, i32, i32) {
    %c0_i32 = arith.constant 0 : i32
    %c0_i32_0 = arith.constant 0 : i32
    %c0_i32_1 = arith.constant 0 : i32
    %c0_i32_2 = arith.constant 0 : i32
    return %c0_i32, %c0_i32_0, %c0_i32_1 : i32, i32, i32
  }
  func.func @transform_17(%arg0: i32) -> (i32, i32, i32) {
    %c0_i32 = arith.constant 0 : i32
    %c0_i32_0 = arith.constant 0 : i32
    %c0_i32_1 = arith.constant 0 : i32
    %c0_i32_2 = arith.constant 0 : i32
    return %c0_i32, %c0_i32_0, %c0_i32_1 : i32, i32, i32
  }
  func.func @transform_18(%arg0: i32) -> (i32, i32, i32) {
    %c0_i32 = arith.constant 0 : i32
    %c0_i32_0 = arith.constant 0 : i32
    %c0_i32_1 = arith.constant 0 : i32
    %c0_i32_2 = arith.constant 0 : i32
    return %c0_i32, %c0_i32_0, %c0_i32_1 : i32, i32, i32
  }
  func.func @transform_19(%arg0: i32) -> (i32, i32, i32) {
    %c0_i32 = arith.constant 0 : i32
    %c0_i32_0 = arith.constant 0 : i32
    %c0_i32_1 = arith.constant 0 : i32
    %c0_i32_2 = arith.constant 0 : i32
    return %c0_i32, %c0_i32_0, %c0_i32_1 : i32, i32, i32
  }
  func.func @transform_20(%arg0: i32) -> (i32, i32, i32) {
    %c0_i32 = arith.constant 0 : i32
    %c0_i32_0 = arith.constant 0 : i32
    %c0_i32_1 = arith.constant 0 : i32
    %c0_i32_2 = arith.constant 0 : i32
    return %c0_i32, %c0_i32_0, %c0_i32_1 : i32, i32, i32
  }
  func.func @transform_21(%arg0: i32) -> (i32, i32, i32) {
    %c0_i32 = arith.constant 0 : i32
    %c0_i32_0 = arith.constant 0 : i32
    %c0_i32_1 = arith.constant 0 : i32
    %c0_i32_2 = arith.constant 0 : i32
    return %c0_i32, %c0_i32_0, %c0_i32_1 : i32, i32, i32
  }
  func.func @transform_22(%arg0: i32) -> (i32, i32, i32) {
    %c0_i32 = arith.constant 0 : i32
    %c0_i32_0 = arith.constant 0 : i32
    %c0_i32_1 = arith.constant 0 : i32
    %c0_i32_2 = arith.constant 0 : i32
    return %c0_i32, %c0_i32_0, %c0_i32_1 : i32, i32, i32
  }
  func.func @transform_23(%arg0: i32) -> (i32, i32, i32) {
    %c0_i32 = arith.constant 0 : i32
    %c0_i32_0 = arith.constant 0 : i32
    %c0_i32_1 = arith.constant 0 : i32
    %c0_i32_2 = arith.constant 0 : i32
    return %c0_i32, %c0_i32_0, %c0_i32_1 : i32, i32, i32
  }
  func.func @transform_24(%arg0: i32) -> (i32, i32, i32) {
    %c0_i32 = arith.constant 0 : i32
    %c0_i32_0 = arith.constant 0 : i32
    %c0_i32_1 = arith.constant 0 : i32
    %c0_i32_2 = arith.constant 0 : i32
    return %c0_i32, %c0_i32_0, %c0_i32_1 : i32, i32, i32
  }
  func.func @transform_25(%arg0: i32) -> (i32, i32, i32) {
    %c0_i32 = arith.constant 0 : i32
    %c0_i32_0 = arith.constant 0 : i32
    %c0_i32_1 = arith.constant 0 : i32
    %c0_i32_2 = arith.constant 0 : i32
    return %c0_i32, %c0_i32_0, %c0_i32_1 : i32, i32, i32
  }
  func.func @transform_26(%arg0: i32) -> (i32, i32, i32) {
    %c0_i32 = arith.constant 0 : i32
    %c0_i32_0 = arith.constant 0 : i32
    %c0_i32_1 = arith.constant 0 : i32
    %c0_i32_2 = arith.constant 0 : i32
    return %c0_i32, %c0_i32_0, %c0_i32_1 : i32, i32, i32
  }
  func.func @transform_27(%arg0: i32) -> (i32, i32, i32) {
    %c0_i32 = arith.constant 0 : i32
    %c0_i32_0 = arith.constant 0 : i32
    %c0_i32_1 = arith.constant 0 : i32
    %c0_i32_2 = arith.constant 0 : i32
    return %c0_i32, %c0_i32_0, %c0_i32_1 : i32, i32, i32
  }
  func.func @transform_28(%arg0: i32) -> (i32, i32, i32) {
    %c0_i32 = arith.constant 0 : i32
    %c0_i32_0 = arith.constant 0 : i32
    %c0_i32_1 = arith.constant 0 : i32
    %c0_i32_2 = arith.constant 0 : i32
    return %c0_i32, %c0_i32_0, %c0_i32_1 : i32, i32, i32
  }
  func.func @transform_29(%arg0: i32) -> (i32, i32) {
    %c0_i32 = arith.constant 0 : i32
    %c0_i32_0 = arith.constant 0 : i32
    %c0_i32_1 = arith.constant 0 : i32
    return %c0_i32, %c0_i32_0 : i32, i32
  }
  func.func @transform_30(%arg0: i32) -> (i32, i32, i32) {
    %c0_i32 = arith.constant 0 : i32
    %c0_i32_0 = arith.constant 0 : i32
    %c0_i32_1 = arith.constant 0 : i32
    return %arg0, %c0_i32, %c0_i32_0 : i32, i32, i32
  }
}

</mosaic_0001>

<llo_original>
// kernel: _lambda_.1
$region0: #{_lambda_.1}
  #allocation0 [shape = 'u32[]', space=smem, size = 0x4, offset = 0x4, fixed_abs, tag = 'smem constant byte address 0x4 - core index']
  #allocation1 [shape = 'u32[72,128]{1,0:T(1,128)}', space=vmem, size = 0x9000, scoped, tag = 'internal scratch']
  %s0 = inlined_call_operand.smem [shape: u32[31], index: -1, kind: input, shape index: {}]
  %s1 = sld [smem:[%s0]]
  %s2 = scalar_lea.smem %s0, 1
  %s3 = sld [smem:[%s2]]
  %s4 = scalar_lea.smem %s0, 2
  %s5 = sld [smem:[%s4]]
  %s6 = scalar_lea.smem %s0, 3
  %s7 = sld [smem:[%s6]]
  %s8 = scalar_lea.smem %s0, 4
  %s9 = sld [smem:[%s8]]
  %s10 = scalar_lea.smem %s0, 5
  %s11 = sld [smem:[%s10]]
  %s12 = scalar_lea.smem %s0, 6
  %s13 = sld [smem:[%s12]]
  %s14 = scalar_lea.smem %s0, 7
  %s15 = sld [smem:[%s14]]
  %s16 = scalar_lea.smem %s0, 8
  %s17 = sld [smem:[%s16]]
  %s18 = scalar_lea.smem %s0, 9
  %s19 = sld [smem:[%s18]]
  %s20 = scalar_lea.smem %s0, 10
  %s21 = sld [smem:[%s20]]
  %s22 = scalar_lea.smem %s0, 11
  %s23 = sld [smem:[%s22]]
  %s24 = scalar_lea.smem %s0, 12
  %s25 = sld [smem:[%s24]]
  %s26 = scalar_lea.smem %s0, 13
  %s27 = sld [smem:[%s26]]
  %s28 = scalar_lea.smem %s0, 14
  %s29 = sld [smem:[%s28]]
  %s30 = scalar_lea.smem %s0, 15
  %s31 = sld [smem:[%s30]]
  %s32 = scalar_lea.smem %s0, 16
  %s33 = sld [smem:[%s32]]
  %s34 = scalar_lea.smem %s0, 17
  %s35 = sld [smem:[%s34]]
  %s36 = scalar_lea.smem %s0, 18
  %s37 = sld [smem:[%s36]]
  %s38 = scalar_lea.smem %s0, 19
  %s39 = sld [smem:[%s38]]
  %s40 = scalar_lea.smem %s0, 20
  %s41 = sld [smem:[%s40]]
  %s42 = scalar_lea.smem %s0, 21
  %s43 = sld [smem:[%s42]]
  %s44 = scalar_lea.smem %s0, 22
  %s45 = sld [smem:[%s44]]
  %s46 = scalar_lea.smem %s0, 23
  %s47 = sld [smem:[%s46]]
  %s48 = scalar_lea.smem %s0, 24
  %s49 = sld [smem:[%s48]]
  %s50 = scalar_lea.smem %s0, 25
  %s51 = sld [smem:[%s50]]
  %s52 = scalar_lea.smem %s0, 26
  %s53 = sld [smem:[%s52]]
  %s54 = scalar_lea.smem %s0, 27
  %s55 = sld [smem:[%s54]]
  %s56 = scalar_lea.smem %s0, 28
  %s57 = sld [smem:[%s56]]
  %s58 = scalar_lea.smem %s0, 29
  %s59 = sld [smem:[%s58]]
  %s60 = scalar_lea.smem %s0, 30
  %s61 = sld [smem:[%s60]]
  %s62 = sld [smem:[#allocation0]]
  $region241: #{_lambda_.1} parent=0
    _
  %s64 = ssub.s32 1, %s62
  %s65 = scalar_select 0, %s64, %s62
  $region1: #{_lambda_.1} parent=0
    #allocation2 [shape = 'u8[1024]{0}', space=vmem, size = 0x400, scoped, tag = 'input window, operand 0']
    #allocation3 [shape = 's32[2]{0}', space=sflag, size = 0x8, scoped, tag = 'scoped memory for _lambda_.1']
    #allocation4 [shape = 's32[2]{0}', space=sflag, size = 0x8, scoped, tag = 'scoped memory for _lambda_.1']
    #allocation5 [shape = 'u8[32768]{0}', space=vmem, size = 0x8000, scoped, tag = 'input window, operand 1, single buffered']
    #allocation6 [shape = 's32[1]{0}', space=sflag, size = 0x4, scoped, tag = 'scoped memory for _lambda_.1']
    #allocation7 [shape = 'u8[512]{0}', space=vmem, size = 0x400, scoped, tag = 'input window, operand 2, single buffered']
    #allocation8 [shape = 'u8[32768]{0}', space=vmem, size = 0x8000, scoped, tag = 'input window, operand 3, single buffered']
    #allocation9 [shape = 's32[1]{0}', space=sflag, size = 0x4, scoped, tag = 'scoped memory for _lambda_.1']
    #allocation10 [shape = 'u8[512]{0}', space=vmem, size = 0x400, scoped, tag = 'input window, operand 4, single buffered']
    #allocation11 [shape = 'u8[512]{0}', space=vmem, size = 0x400, scoped, tag = 'input window, operand 5, single buffered']
    #allocation12 [shape = 's32[1]{0}', space=sflag, size = 0x4, scoped, tag = 'scoped memory for _lambda_.1']
    #allocation13 [shape = 'u8[512]{0}', space=vmem, size = 0x400, scoped, tag = 'input window, operand 6, single buffered']
    #allocation14 [shape = 'u8[65536]{0}', space=vmem, size = 0x10000, scoped, tag = 'input window, operand 7, single buffered']
    #allocation15 [shape = 's32[1]{0}', space=sflag, size = 0x4, scoped, tag = 'scoped memory for _lambda_.1']
    #allocation16 [shape = 'u8[65536]{0}', space=vmem, size = 0x10000, scoped, tag = 'input window, operand 9, single buffered']
    #allocation17 [shape = 'u8[1024]{0}', space=vmem, size = 0x400, scoped, tag = 'input window, operand 10, single buffered']
    #allocation18 [shape = 's32[1]{0}', space=sflag, size = 0x4, scoped, tag = 'scoped memory for _lambda_.1']
    #allocation19 [shape = 'u8[65536]{0}', space=vmem, size = 0x10000, scoped, tag = 'input window, operand 11, single buffered']
    #allocation20 [shape = 'u8[65536]{0}', space=vmem, size = 0x10000, scoped, tag = 'input window, operand 13, single buffered']
    #allocation21 [shape = 's32[1]{0}', space=sflag, size = 0x4, scoped, tag = 'scoped memory for _lambda_.1']
    #allocation22 [shape = 'u8[1024]{0}', space=vmem, size = 0x400, scoped, tag = 'input window, operand 14, single buffered']
    #allocation23 [shape = 'u8[65536]{0}', space=vmem, size = 0x10000, scoped, tag = 'input window, operand 17, single buffered']
    #allocation24 [shape = 's32[1]{0}', space=sflag, size = 0x4, scoped, tag = 'scoped memory for _lambda_.1']
    #allocation25 [shape = 'u8[1024]{0}', space=vmem, size = 0x400, scoped, tag = 'input window, operand 18, single buffered']
    #allocation26 [shape = 'u8[65536]{0}', space=vmem, size = 0x10000, scoped, tag = 'input window, operand 19, single buffered']
    #allocation27 [shape = 's32[1]{0}', space=sflag, size = 0x4, scoped, tag = 'scoped memory for _lambda_.1']
    #allocation28 [shape = 'u8[1024]{0}', space=vmem, size = 0x400, scoped, tag = 'input window, operand 20, single buffered']
    #allocation29 [shape = 'u8[131072]{0}', space=vmem, size = 0x20000, scoped, tag = 'input window, operand 23, single buffered']
    #allocation30 [shape = 's32[1]{0}', space=sflag, size = 0x4, scoped, tag = 'scoped memory for _lambda_.1']
    #allocation31 [shape = 'u8[2048]{0}', space=vmem, size = 0x800, scoped, tag = 'input window, operand 24, single buffered']
    #allocation32 [shape = 'u8[131072]{0}', space=vmem, size = 0x20000, scoped, tag = 'input window, operand 25, single buffered']
    #allocation33 [shape = 's32[1]{0}', space=sflag, size = 0x4, scoped, tag = 'scoped memory for _lambda_.1']
    #allocation34 [shape = 'u8[1024]{0}', space=vmem, size = 0x400, scoped, tag = 'input window, operand 26, single buffered']
    #allocation35 [shape = 'u8[65536]{0}', space=vmem, size = 0x10000, scoped, tag = 'input window, operand 29, single buffered']
    #allocation36 [shape = 's32[1]{0}', space=sflag, size = 0x4, scoped, tag = 'scoped memory for _lambda_.1']
    #allocation37 [shape = 'u8[16384]{0}', space=vmem, size = 0x4000, scoped, tag = 'output window, operand 0']
    %66 = vsyncpa [#allocation3], 0
    %s67 = scalar_lea.sflag [#allocation3], 1
    %68 = vsyncpa %s67, 0
    %69 = vsyncpa [#allocation6], 0
    %70 = vsyncpa [#allocation9], 0
    %71 = vsyncpa [#allocation12], 0
    %72 = vsyncpa [#allocation15], 0
    %73 = vsyncpa [#allocation18], 0
    %74 = vsyncpa [#allocation21], 0
    %75 = vsyncpa [#allocation24], 0
    %76 = vsyncpa [#allocation27], 0
    %77 = vsyncpa [#allocation30], 0
    %78 = vsyncpa [#allocation33], 0
    %79 = vsyncpa [#allocation36], 0
    %80 = vsyncpa [#allocation4], 0
    %s81 = scalar_lea.sflag [#allocation4], 1
    %82 = vsyncpa %s81, 0
    loop: start=0, step=1, limit=4
    $region2: #{_lambda_.1} parent=1 // loop_pre_header
      _
    $region3: #{_lambda_.1} parent=1 // loop_header
      %s84 = sphi 0, %s88
      %p85 = scmp.ge.s32.totalorder %s84, 4
      %s94 = sphi 0, %s96
      %s97 = sphi 0, %s94
      %s98 = sphi 0, %s97
      %s114 = sphi 0, %s98
      %s118 = sphi 0, %s118
      %s120 = sphi 0, %s118
      %s121 = sphi 0, %s120
      %s135 = sphi 0, %s121
      %s139 = sphi 0, %s139
      %s141 = sphi 0, %s139
      %s142 = sphi 0, %s141
      %s156 = sphi 0, %s142
      %s160 = sphi 0, %s160
      %s162 = sphi 0, %s160
      %s163 = sphi 0, %s162
      %s177 = sphi 0, %s163
      %s181 = sphi 0, %s181
      %s183 = sphi 0, %s181
      %s184 = sphi 0, %s183
      %s198 = sphi 0, %s184
      %s202 = sphi 0, %s202
      %s204 = sphi 0, %s202
      %s205 = sphi 0, %s204
      %s219 = sphi 0, %s205
      %s223 = sphi 0, %s223
      %s225 = sphi 0, %s223
      %s226 = sphi 0, %s225
      %s240 = sphi 0, %s226
      %s244 = sphi 0, %s244
      %s246 = sphi 0, %s244
      %s247 = sphi 0, %s246
      %s261 = sphi 0, %s247
      %s265 = sphi 0, %s265
      %s267 = sphi 0, %s265
      %s268 = sphi 0, %s267
      %s282 = sphi 0, %s268
      %s286 = sphi 0, %s286
      %s288 = sphi 0, %s286
      %s289 = sphi 0, %s288
      %s303 = sphi 0, %s289
      %s307 = sphi 0, %s307
      %s309 = sphi 0, %s307
      %s310 = sphi 0, %s309
      %s324 = sphi 0, %s310
      %s328 = sphi 0, %s328
      %s330 = sphi 0, %s328
      %s331 = sphi 0, %s330
      %s345 = sphi 0, %s331
      %s349 = sphi 0, %s349
      %s351 = sphi 0, %s349
      %s352 = sphi 0, %s351
      %s366 = sphi 0, %s352
      %s370 = sphi 0, %s370
      %s372 = sphi 0, %s370
      %s373 = sphi 0, %s372
      %s387 = sphi 0, %s373
      %s391 = sphi 0, %s391
      %s393 = sphi 0, %s391
      %s394 = sphi 0, %s393
      %s408 = sphi 0, %s394
      %s412 = sphi 0, %s412
      %s414 = sphi 0, %s412
      %s415 = sphi 0, %s414
      %s429 = sphi 0, %s415
      %s433 = sphi 0, %s433
      %s435 = sphi 0, %s433
      %s436 = sphi 0, %s435
      %s450 = sphi 0, %s436
      %s454 = sphi 0, %s454
      %s456 = sphi 0, %s454
      %s457 = sphi 0, %s456
      %s471 = sphi 0, %s457
      %s475 = sphi 0, %s475
      %s477 = sphi 0, %s475
      %s478 = sphi 0, %s477
      %s492 = sphi 0, %s478
      %s496 = sphi 0, %s496
      %s498 = sphi 0, %s496
      %s499 = sphi 0, %s498
      %s513 = sphi 0, %s499
      %s517 = sphi 0, %s517
      %s519 = sphi 0, %s517
      %s520 = sphi 0, %s519
      %s534 = sphi 0, %s520
      %s538 = sphi 0, %s538
      %s540 = sphi 0, %s538
      %s541 = sphi 0, %s540
      %s555 = sphi 0, %s541
      %s559 = sphi 0, %s559
      %s561 = sphi 0, %s559
      %s562 = sphi 0, %s561
      %s576 = sphi 0, %s562
      %s580 = sphi 0, %s580
      %s582 = sphi 0, %s580
      %s583 = sphi 0, %s582
      %s597 = sphi 0, %s583
      %s601 = sphi 0, %s601
      %s603 = sphi 0, %s601
      %s604 = sphi 0, %s603
      %s618 = sphi 0, %s604
      %s622 = sphi 0, %s622
      %s624 = sphi 0, %s622
      %s625 = sphi 0, %s624
      %s639 = sphi 0, %s625
      %s643 = sphi 0, %s643
      %s645 = sphi 0, %s643
      %s646 = sphi 0, %s645
      %s660 = sphi 0, %s646
      %s664 = sphi 0, %s664
      %s666 = sphi 0, %s664
      %s667 = sphi 0, %s666
      %s681 = sphi 0, %s667
      %s685 = sphi 0, %s685
      %s687 = sphi 0, %s685
      %s688 = sphi 0, %s687
      %s702 = sphi 0, %s688
      %s706 = sphi 0, %s706
      %s708 = sphi 0, %s706
      %s709 = sphi 0, %s708
      %s723 = sphi 0, %s709
      %s729 = sphi 0, %s731
      %s732 = sphi 0, %s729
      %s733 = sphi 0, %s732
      %s749 = sphi 0, %s733
    $region4: #{_lambda_.1} parent=1 // loop_header_branch
      %87 = sbr.rel (%p85) target = $region8
    $region5: #{_lambda_.1} parent=1 // loop_body
      %s89 = ssub.s32 %s84, 1
      %s90 = ssub.s32 %s84, 2
      %s91 = sadd.s32 %s84, 1
      %s92 = ssub.s32 %s84, %s91
      %p93 = scmp.eq.s32.totalorder %s92, 0
      %s95 = sadd.s32 %s94, 1
      %s96 = scalar_select %p93, %s94, %s95
      %p99 = pneg %p93
      %p100 = scmp.eq.s32.totalorder %s84, 1
      %p101 = por %p99, %p100
      %p102 = scmp.ne.s32.totalorder %s94, %s97
      %p103 = scmp.eq.s32.totalorder %s84, 0
      %p104 = por %p102, %p103
      %p105 = scmp.ne.s32.totalorder %s94, %s97
      %p106 = scmp.eq.s32.totalorder %s89, 1
      %p107 = por %p105, %p106
      %p108 = scmp.ne.s32.totalorder %s97, %s98
      %p109 = scmp.eq.s32.totalorder %s89, 0
      %p110 = por %p108, %p109
      %p111 = scmp.ne.s32.totalorder %s97, %s98
      %p112 = scmp.eq.s32.totalorder %s90, 1
      %p113 = por %p111, %p112
      %p115 = scmp.ne.s32.totalorder %s98, %s114
      %p116 = scmp.eq.s32.totalorder %s90, 0
      %p117 = por %p115, %p116
      %s119 = sadd.s32 %s118, 1
      %p122 = scmp.eq.s32.totalorder %s84, 1
      %p123 = scmp.ne.s32.totalorder %s118, %s120
      %p124 = scmp.eq.s32.totalorder %s84, 0
      %p125 = por %p123, %p124
      %p126 = scmp.ne.s32.totalorder %s118, %s120
      %p127 = scmp.eq.s32.totalorder %s89, 1
      %p128 = por %p126, %p127
      %p129 = scmp.ne.s32.totalorder %s120, %s121
      %p130 = scmp.eq.s32.totalorder %s89, 0
      %p131 = por %p129, %p130
      %p132 = scmp.ne.s32.totalorder %s120, %s121
      %p133 = scmp.eq.s32.totalorder %s90, 1
      %p134 = por %p132, %p133
      %p136 = scmp.ne.s32.totalorder %s121, %s135
      %p137 = scmp.eq.s32.totalorder %s90, 0
      %p138 = por %p136, %p137
      %s140 = sadd.s32 %s139, 1
      %p143 = scmp.eq.s32.totalorder %s84, 1
      %p144 = scmp.ne.s32.totalorder %s139, %s141
      %p145 = scmp.eq.s32.totalorder %s84, 0
      %p146 = por %p144, %p145
      %p147 = scmp.ne.s32.totalorder %s139, %s141
      %p148 = scmp.eq.s32.totalorder %s89, 1
      %p149 = por %p147, %p148
      %p150 = scmp.ne.s32.totalorder %s141, %s142
      %p151 = scmp.eq.s32.totalorder %s89, 0
      %p152 = por %p150, %p151
      %p153 = scmp.ne.s32.totalorder %s141, %s142
      %p154 = scmp.eq.s32.totalorder %s90, 1
      %p155 = por %p153, %p154
      %p157 = scmp.ne.s32.totalorder %s142, %s156
      %p158 = scmp.eq.s32.totalorder %s90, 0
      %p159 = por %p157, %p158
      %s161 = sadd.s32 %s160, 1
      %p164 = scmp.eq.s32.totalorder %s84, 1
      %p165 = scmp.ne.s32.totalorder %s160, %s162
      %p166 = scmp.eq.s32.totalorder %s84, 0
      %p167 = por %p165, %p166
      %p168 = scmp.ne.s32.totalorder %s160, %s162
      %p169 = scmp.eq.s32.totalorder %s89, 1
      %p170 = por %p168, %p169
      %p171 = scmp.ne.s32.totalorder %s162, %s163
      %p172 = scmp.eq.s32.totalorder %s89, 0
      %p173 = por %p171, %p172
      %p174 = scmp.ne.s32.totalorder %s162, %s163
      %p175 = scmp.eq.s32.totalorder %s90, 1
      %p176 = por %p174, %p175
      %p178 = scmp.ne.s32.totalorder %s163, %s177
      %p179 = scmp.eq.s32.totalorder %s90, 0
      %p180 = por %p178, %p179
      %s182 = sadd.s32 %s181, 1
      %p185 = scmp.eq.s32.totalorder %s84, 1
      %p186 = scmp.ne.s32.totalorder %s181, %s183
      %p187 = scmp.eq.s32.totalorder %s84, 0
      %p188 = por %p186, %p187
      %p189 = scmp.ne.s32.totalorder %s181, %s183
      %p190 = scmp.eq.s32.totalorder %s89, 1
      %p191 = por %p189, %p190
      %p192 = scmp.ne.s32.totalorder %s183, %s184
      %p193 = scmp.eq.s32.totalorder %s89, 0
      %p194 = por %p192, %p193
      %p195 = scmp.ne.s32.totalorder %s183, %s184
      %p196 = scmp.eq.s32.totalorder %s90, 1
      %p197 = por %p195, %p196
      %p199 = scmp.ne.s32.totalorder %s184, %s198
      %p200 = scmp.eq.s32.totalorder %s90, 0
      %p201 = por %p199, %p200
      %s203 = sadd.s32 %s202, 1
      %p206 = scmp.eq.s32.totalorder %s84, 1
      %p207 = scmp.ne.s32.totalorder %s202, %s204
      %p208 = scmp.eq.s32.totalorder %s84, 0
      %p209 = por %p207, %p208
      %p210 = scmp.ne.s32.totalorder %s202, %s204
      %p211 = scmp.eq.s32.totalorder %s89, 1
      %p212 = por %p210, %p211
      %p213 = scmp.ne.s32.totalorder %s204, %s205
      %p214 = scmp.eq.s32.totalorder %s89, 0
      %p215 = por %p213, %p214
      %p216 = scmp.ne.s32.totalorder %s204, %s205
      %p217 = scmp.eq.s32.totalorder %s90, 1
      %p218 = por %p216, %p217
      %p220 = scmp.ne.s32.totalorder %s205, %s219
      %p221 = scmp.eq.s32.totalorder %s90, 0
      %p222 = por %p220, %p221
      %s224 = sadd.s32 %s223, 1
      %p227 = scmp.eq.s32.totalorder %s84, 1
      %p228 = scmp.ne.s32.totalorder %s223, %s225
      %p229 = scmp.eq.s32.totalorder %s84, 0
      %p230 = por %p228, %p229
      %p231 = scmp.ne.s32.totalorder %s223, %s225
      %p232 = scmp.eq.s32.totalorder %s89, 1
      %p233 = por %p231, %p232
      %p234 = scmp.ne.s32.totalorder %s225, %s226
      %p235 = scmp.eq.s32.totalorder %s89, 0
      %p236 = por %p234, %p235
      %p237 = scmp.ne.s32.totalorder %s225, %s226
      %p238 = scmp.eq.s32.totalorder %s90, 1
      %p239 = por %p237, %p238
      %p241 = scmp.ne.s32.totalorder %s226, %s240
      %p242 = scmp.eq.s32.totalorder %s90, 0
      %p243 = por %p241, %p242
      %s245 = sadd.s32 %s244, 1
      %p248 = scmp.eq.s32.totalorder %s84, 1
      %p249 = scmp.ne.s32.totalorder %s244, %s246
      %p250 = scmp.eq.s32.totalorder %s84, 0
      %p251 = por %p249, %p250
      %p252 = scmp.ne.s32.totalorder %s244, %s246
      %p253 = scmp.eq.s32.totalorder %s89, 1
      %p254 = por %p252, %p253
      %p255 = scmp.ne.s32.totalorder %s246, %s247
      %p256 = scmp.eq.s32.totalorder %s89, 0
      %p257 = por %p255, %p256
      %p258 = scmp.ne.s32.totalorder %s246, %s247
      %p259 = scmp.eq.s32.totalorder %s90, 1
      %p260 = por %p258, %p259
      %p262 = scmp.ne.s32.totalorder %s247, %s261
      %p263 = scmp.eq.s32.totalorder %s90, 0
      %p264 = por %p262, %p263
      %s266 = sadd.s32 %s265, 1
      %p269 = scmp.eq.s32.totalorder %s84, 1
      %p270 = scmp.ne.s32.totalorder %s265, %s267
      %p271 = scmp.eq.s32.totalorder %s84, 0
      %p272 = por %p270, %p271
      %p273 = scmp.ne.s32.totalorder %s265, %s267
      %p274 = scmp.eq.s32.totalorder %s89, 1
      %p275 = por %p273, %p274
      %p276 = scmp.ne.s32.totalorder %s267, %s268
      %p277 = scmp.eq.s32.totalorder %s89, 0
      %p278 = por %p276, %p277
      %p279 = scmp.ne.s32.totalorder %s267, %s268
      %p280 = scmp.eq.s32.totalorder %s90, 1
      %p281 = por %p279, %p280
      %p283 = scmp.ne.s32.totalorder %s268, %s282
      %p284 = scmp.eq.s32.totalorder %s90, 0
      %p285 = por %p283, %p284
      %s287 = sadd.s32 %s286, 1
      %p290 = scmp.eq.s32.totalorder %s84, 1
      %p291 = scmp.ne.s32.totalorder %s286, %s288
      %p292 = scmp.eq.s32.totalorder %s84, 0
      %p293 = por %p291, %p292
      %p294 = scmp.ne.s32.totalorder %s286, %s288
      %p295 = scmp.eq.s32.totalorder %s89, 1
      %p296 = por %p294, %p295
      %p297 = scmp.ne.s32.totalorder %s288, %s289
      %p298 = scmp.eq.s32.totalorder %s89, 0
      %p299 = por %p297, %p298
      %p300 = scmp.ne.s32.totalorder %s288, %s289
      %p301 = scmp.eq.s32.totalorder %s90, 1
      %p302 = por %p300, %p301
      %p304 = scmp.ne.s32.totalorder %s289, %s303
      %p305 = scmp.eq.s32.totalorder %s90, 0
      %p306 = por %p304, %p305
      %s308 = sadd.s32 %s307, 1
      %p311 = scmp.eq.s32.totalorder %s84, 1
      %p312 = scmp.ne.s32.totalorder %s307, %s309
      %p313 = scmp.eq.s32.totalorder %s84, 0
      %p314 = por %p312, %p313
      %p315 = scmp.ne.s32.totalorder %s307, %s309
      %p316 = scmp.eq.s32.totalorder %s89, 1
      %p317 = por %p315, %p316
      %p318 = scmp.ne.s32.totalorder %s309, %s310
      %p319 = scmp.eq.s32.totalorder %s89, 0
      %p320 = por %p318, %p319
      %p321 = scmp.ne.s32.totalorder %s309, %s310
      %p322 = scmp.eq.s32.totalorder %s90, 1
      %p323 = por %p321, %p322
      %p325 = scmp.ne.s32.totalorder %s310, %s324
      %p326 = scmp.eq.s32.totalorder %s90, 0
      %p327 = por %p325, %p326
      %s329 = sadd.s32 %s328, 1
      %p332 = scmp.eq.s32.totalorder %s84, 1
      %p333 = scmp.ne.s32.totalorder %s328, %s330
      %p334 = scmp.eq.s32.totalorder %s84, 0
      %p335 = por %p333, %p334
      %p336 = scmp.ne.s32.totalorder %s328, %s330
      %p337 = scmp.eq.s32.totalorder %s89, 1
      %p338 = por %p336, %p337
      %p339 = scmp.ne.s32.totalorder %s330, %s331
      %p340 = scmp.eq.s32.totalorder %s89, 0
      %p341 = por %p339, %p340
      %p342 = scmp.ne.s32.totalorder %s330, %s331
      %p343 = scmp.eq.s32.totalorder %s90, 1
      %p344 = por %p342, %p343
      %p346 = scmp.ne.s32.totalorder %s331, %s345
      %p347 = scmp.eq.s32.totalorder %s90, 0
      %p348 = por %p346, %p347
      %s350 = sadd.s32 %s349, 1
      %p353 = scmp.eq.s32.totalorder %s84, 1
      %p354 = scmp.ne.s32.totalorder %s349, %s351
      %p355 = scmp.eq.s32.totalorder %s84, 0
      %p356 = por %p354, %p355
      %p357 = scmp.ne.s32.totalorder %s349, %s351
      %p358 = scmp.eq.s32.totalorder %s89, 1
      %p359 = por %p357, %p358
      %p360 = scmp.ne.s32.totalorder %s351, %s352
      %p361 = scmp.eq.s32.totalorder %s89, 0
      %p362 = por %p360, %p361
      %p363 = scmp.ne.s32.totalorder %s351, %s352
      %p364 = scmp.eq.s32.totalorder %s90, 1
      %p365 = por %p363, %p364
      %p367 = scmp.ne.s32.totalorder %s352, %s366
      %p368 = scmp.eq.s32.totalorder %s90, 0
      %p369 = por %p367, %p368
      %s371 = sadd.s32 %s370, 1
      %p374 = scmp.eq.s32.totalorder %s84, 1
      %p375 = scmp.ne.s32.totalorder %s370, %s372
      %p376 = scmp.eq.s32.totalorder %s84, 0
      %p377 = por %p375, %p376
      %p378 = scmp.ne.s32.totalorder %s370, %s372
      %p379 = scmp.eq.s32.totalorder %s89, 1
      %p380 = por %p378, %p379
      %p381 = scmp.ne.s32.totalorder %s372, %s373
      %p382 = scmp.eq.s32.totalorder %s89, 0
      %p383 = por %p381, %p382
      %p384 = scmp.ne.s32.totalorder %s372, %s373
      %p385 = scmp.eq.s32.totalorder %s90, 1
      %p386 = por %p384, %p385
      %p388 = scmp.ne.s32.totalorder %s373, %s387
      %p389 = scmp.eq.s32.totalorder %s90, 0
      %p390 = por %p388, %p389
      %s392 = sadd.s32 %s391, 1
      %p395 = scmp.eq.s32.totalorder %s84, 1
      %p396 = scmp.ne.s32.totalorder %s391, %s393
      %p397 = scmp.eq.s32.totalorder %s84, 0
      %p398 = por %p396, %p397
      %p399 = scmp.ne.s32.totalorder %s391, %s393
      %p400 = scmp.eq.s32.totalorder %s89, 1
      %p401 = por %p399, %p400
      %p402 = scmp.ne.s32.totalorder %s393, %s394
      %p403 = scmp.eq.s32.totalorder %s89, 0
      %p404 = por %p402, %p403
      %p405 = scmp.ne.s32.totalorder %s393, %s394
      %p406 = scmp.eq.s32.totalorder %s90, 1
      %p407 = por %p405, %p406
      %p409 = scmp.ne.s32.totalorder %s394, %s408
      %p410 = scmp.eq.s32.totalorder %s90, 0
      %p411 = por %p409, %p410
      %s413 = sadd.s32 %s412, 1
      %p416 = scmp.eq.s32.totalorder %s84, 1
      %p417 = scmp.ne.s32.totalorder %s412, %s414
      %p418 = scmp.eq.s32.totalorder %s84, 0
      %p419 = por %p417, %p418
      %p420 = scmp.ne.s32.totalorder %s412, %s414
      %p421 = scmp.eq.s32.totalorder %s89, 1
      %p422 = por %p420, %p421
      %p423 = scmp.ne.s32.totalorder %s414, %s415
      %p424 = scmp.eq.s32.totalorder %s89, 0
      %p425 = por %p423, %p424
      %p426 = scmp.ne.s32.totalorder %s414, %s415
      %p427 = scmp.eq.s32.totalorder %s90, 1
      %p428 = por %p426, %p427
      %p430 = scmp.ne.s32.totalorder %s415, %s429
      %p431 = scmp.eq.s32.totalorder %s90, 0
      %p432 = por %p430, %p431
      %s434 = sadd.s32 %s433, 1
      %p437 = scmp.eq.s32.totalorder %s84, 1
      %p438 = scmp.ne.s32.totalorder %s433, %s435
      %p439 = scmp.eq.s32.totalorder %s84, 0
      %p440 = por %p438, %p439
      %p441 = scmp.ne.s32.totalorder %s433, %s435
      %p442 = scmp.eq.s32.totalorder %s89, 1
      %p443 = por %p441, %p442
      %p444 = scmp.ne.s32.totalorder %s435, %s436
      %p445 = scmp.eq.s32.totalorder %s89, 0
      %p446 = por %p444, %p445
      %p447 = scmp.ne.s32.totalorder %s435, %s436
      %p448 = scmp.eq.s32.totalorder %s90, 1
      %p449 = por %p447, %p448
      %p451 = scmp.ne.s32.totalorder %s436, %s450
      %p452 = scmp.eq.s32.totalorder %s90, 0
      %p453 = por %p451, %p452
      %s455 = sadd.s32 %s454, 1
      %p458 = scmp.eq.s32.totalorder %s84, 1
      %p459 = scmp.ne.s32.totalorder %s454, %s456
      %p460 = scmp.eq.s32.totalorder %s84, 0
      %p461 = por %p459, %p460
      %p462 = scmp.ne.s32.totalorder %s454, %s456
      %p463 = scmp.eq.s32.totalorder %s89, 1
      %p464 = por %p462, %p463
      %p465 = scmp.ne.s32.totalorder %s456, %s457
      %p466 = scmp.eq.s32.totalorder %s89, 0
      %p467 = por %p465, %p466
      %p468 = scmp.ne.s32.totalorder %s456, %s457
      %p469 = scmp.eq.s32.totalorder %s90, 1
      %p470 = por %p468, %p469
      %p472 = scmp.ne.s32.totalorder %s457, %s471
      %p473 = scmp.eq.s32.totalorder %s90, 0
      %p474 = por %p472, %p473
      %s476 = sadd.s32 %s475, 1
      %p479 = scmp.eq.s32.totalorder %s84, 1
      %p480 = scmp.ne.s32.totalorder %s475, %s477
      %p481 = scmp.eq.s32.totalorder %s84, 0
      %p482 = por %p480, %p481
      %p483 = scmp.ne.s32.totalorder %s475, %s477
      %p484 = scmp.eq.s32.totalorder %s89, 1
      %p485 = por %p483, %p484
      %p486 = scmp.ne.s32.totalorder %s477, %s478
      %p487 = scmp.eq.s32.totalorder %s89, 0
      %p488 = por %p486, %p487
      %p489 = scmp.ne.s32.totalorder %s477, %s478
      %p490 = scmp.eq.s32.totalorder %s90, 1
      %p491 = por %p489, %p490
      %p493 = scmp.ne.s32.totalorder %s478, %s492
      %p494 = scmp.eq.s32.totalorder %s90, 0
      %p495 = por %p493, %p494
      %s497 = sadd.s32 %s496, 1
      %p500 = scmp.eq.s32.totalorder %s84, 1
      %p501 = scmp.ne.s32.totalorder %s496, %s498
      %p502 = scmp.eq.s32.totalorder %s84, 0
      %p503 = por %p501, %p502
      %p504 = scmp.ne.s32.totalorder %s496, %s498
      %p505 = scmp.eq.s32.totalorder %s89, 1
      %p506 = por %p504, %p505
      %p507 = scmp.ne.s32.totalorder %s498, %s499
      %p508 = scmp.eq.s32.totalorder %s89, 0
      %p509 = por %p507, %p508
      %p510 = scmp.ne.s32.totalorder %s498, %s499
      %p511 = scmp.eq.s32.totalorder %s90, 1
      %p512 = por %p510, %p511
      %p514 = scmp.ne.s32.totalorder %s499, %s513
      %p515 = scmp.eq.s32.totalorder %s90, 0
      %p516 = por %p514, %p515
      %s518 = sadd.s32 %s517, 1
      %p521 = scmp.eq.s32.totalorder %s84, 1
      %p522 = scmp.ne.s32.totalorder %s517, %s519
      %p523 = scmp.eq.s32.totalorder %s84, 0
      %p524 = por %p522, %p523
      %p525 = scmp.ne.s32.totalorder %s517, %s519
      %p526 = scmp.eq.s32.totalorder %s89, 1
      %p527 = por %p525, %p526
      %p528 = scmp.ne.s32.totalorder %s519, %s520
      %p529 = scmp.eq.s32.totalorder %s89, 0
      %p530 = por %p528, %p529
      %p531 = scmp.ne.s32.totalorder %s519, %s520
      %p532 = scmp.eq.s32.totalorder %s90, 1
      %p533 = por %p531, %p532
      %p535 = scmp.ne.s32.totalorder %s520, %s534
      %p536 = scmp.eq.s32.totalorder %s90, 0
      %p537 = por %p535, %p536
      %s539 = sadd.s32 %s538, 1
      %p542 = scmp.eq.s32.totalorder %s84, 1
      %p543 = scmp.ne.s32.totalorder %s538, %s540
      %p544 = scmp.eq.s32.totalorder %s84, 0
      %p545 = por %p543, %p544
      %p546 = scmp.ne.s32.totalorder %s538, %s540
      %p547 = scmp.eq.s32.totalorder %s89, 1
      %p548 = por %p546, %p547
      %p549 = scmp.ne.s32.totalorder %s540, %s541
      %p550 = scmp.eq.s32.totalorder %s89, 0
      %p551 = por %p549, %p550
      %p552 = scmp.ne.s32.totalorder %s540, %s541
      %p553 = scmp.eq.s32.totalorder %s90, 1
      %p554 = por %p552, %p553
      %p556 = scmp.ne.s32.totalorder %s541, %s555
      %p557 = scmp.eq.s32.totalorder %s90, 0
      %p558 = por %p556, %p557
      %s560 = sadd.s32 %s559, 1
      %p563 = scmp.eq.s32.totalorder %s84, 1
      %p564 = scmp.ne.s32.totalorder %s559, %s561
      %p565 = scmp.eq.s32.totalorder %s84, 0
      %p566 = por %p564, %p565
      %p567 = scmp.ne.s32.totalorder %s559, %s561
      %p568 = scmp.eq.s32.totalorder %s89, 1
      %p569 = por %p567, %p568
      %p570 = scmp.ne.s32.totalorder %s561, %s562
      %p571 = scmp.eq.s32.totalorder %s89, 0
      %p572 = por %p570, %p571
      %p573 = scmp.ne.s32.totalorder %s561, %s562
      %p574 = scmp.eq.s32.totalorder %s90, 1
      %p575 = por %p573, %p574
      %p577 = scmp.ne.s32.totalorder %s562, %s576
      %p578 = scmp.eq.s32.totalorder %s90, 0
      %p579 = por %p577, %p578
      %s581 = sadd.s32 %s580, 1
      %p584 = scmp.eq.s32.totalorder %s84, 1
      %p585 = scmp.ne.s32.totalorder %s580, %s582
      %p586 = scmp.eq.s32.totalorder %s84, 0
      %p587 = por %p585, %p586
      %p588 = scmp.ne.s32.totalorder %s580, %s582
      %p589 = scmp.eq.s32.totalorder %s89, 1
      %p590 = por %p588, %p589
      %p591 = scmp.ne.s32.totalorder %s582, %s583
      %p592 = scmp.eq.s32.totalorder %s89, 0
      %p593 = por %p591, %p592
      %p594 = scmp.ne.s32.totalorder %s582, %s583
      %p595 = scmp.eq.s32.totalorder %s90, 1
      %p596 = por %p594, %p595
      %p598 = scmp.ne.s32.totalorder %s583, %s597
      %p599 = scmp.eq.s32.totalorder %s90, 0
      %p600 = por %p598, %p599
      %s602 = sadd.s32 %s601, 1
      %p605 = scmp.eq.s32.totalorder %s84, 1
      %p606 = scmp.ne.s32.totalorder %s601, %s603
      %p607 = scmp.eq.s32.totalorder %s84, 0
      %p608 = por %p606, %p607
      %p609 = scmp.ne.s32.totalorder %s601, %s603
      %p610 = scmp.eq.s32.totalorder %s89, 1
      %p611 = por %p609, %p610
      %p612 = scmp.ne.s32.totalorder %s603, %s604
      %p613 = scmp.eq.s32.totalorder %s89, 0
      %p614 = por %p612, %p613
      %p615 = scmp.ne.s32.totalorder %s603, %s604
      %p616 = scmp.eq.s32.totalorder %s90, 1
      %p617 = por %p615, %p616
      %p619 = scmp.ne.s32.totalorder %s604, %s618
      %p620 = scmp.eq.s32.totalorder %s90, 0
      %p621 = por %p619, %p620
      %s623 = sadd.s32 %s622, 1
      %p626 = scmp.eq.s32.totalorder %s84, 1
      %p627 = scmp.ne.s32.totalorder %s622, %s624
      %p628 = scmp.eq.s32.totalorder %s84, 0
      %p629 = por %p627, %p628
      %p630 = scmp.ne.s32.totalorder %s622, %s624
      %p631 = scmp.eq.s32.totalorder %s89, 1
      %p632 = por %p630, %p631
      %p633 = scmp.ne.s32.totalorder %s624, %s625
      %p634 = scmp.eq.s32.totalorder %s89, 0
      %p635 = por %p633, %p634
      %p636 = scmp.ne.s32.totalorder %s624, %s625
      %p637 = scmp.eq.s32.totalorder %s90, 1
      %p638 = por %p636, %p637
      %p640 = scmp.ne.s32.totalorder %s625, %s639
      %p641 = scmp.eq.s32.totalorder %s90, 0
      %p642 = por %p640, %p641
      %s644 = sadd.s32 %s643, 1
      %p647 = scmp.eq.s32.totalorder %s84, 1
      %p648 = scmp.ne.s32.totalorder %s643, %s645
      %p649 = scmp.eq.s32.totalorder %s84, 0
      %p650 = por %p648, %p649
      %p651 = scmp.ne.s32.totalorder %s643, %s645
      %p652 = scmp.eq.s32.totalorder %s89, 1
      %p653 = por %p651, %p652
      %p654 = scmp.ne.s32.totalorder %s645, %s646
      %p655 = scmp.eq.s32.totalorder %s89, 0
      %p656 = por %p654, %p655
      %p657 = scmp.ne.s32.totalorder %s645, %s646
      %p658 = scmp.eq.s32.totalorder %s90, 1
      %p659 = por %p657, %p658
      %p661 = scmp.ne.s32.totalorder %s646, %s660
      %p662 = scmp.eq.s32.totalorder %s90, 0
      %p663 = por %p661, %p662
      %s665 = sadd.s32 %s664, 1
      %p668 = scmp.eq.s32.totalorder %s84, 1
      %p669 = scmp.ne.s32.totalorder %s664, %s666
      %p670 = scmp.eq.s32.totalorder %s84, 0
      %p671 = por %p669, %p670
      %p672 = scmp.ne.s32.totalorder %s664, %s666
      %p673 = scmp.eq.s32.totalorder %s89, 1
      %p674 = por %p672, %p673
      %p675 = scmp.ne.s32.totalorder %s666, %s667
      %p676 = scmp.eq.s32.totalorder %s89, 0
      %p677 = por %p675, %p676
      %p678 = scmp.ne.s32.totalorder %s666, %s667
      %p679 = scmp.eq.s32.totalorder %s90, 1
      %p680 = por %p678, %p679
      %p682 = scmp.ne.s32.totalorder %s667, %s681
      %p683 = scmp.eq.s32.totalorder %s90, 0
      %p684 = por %p682, %p683
      %s686 = sadd.s32 %s685, 1
      %p689 = scmp.eq.s32.totalorder %s84, 1
      %p690 = scmp.ne.s32.totalorder %s685, %s687
      %p691 = scmp.eq.s32.totalorder %s84, 0
      %p692 = por %p690, %p691
      %p693 = scmp.ne.s32.totalorder %s685, %s687
      %p694 = scmp.eq.s32.totalorder %s89, 1
      %p695 = por %p693, %p694
      %p696 = scmp.ne.s32.totalorder %s687, %s688
      %p697 = scmp.eq.s32.totalorder %s89, 0
      %p698 = por %p696, %p697
      %p699 = scmp.ne.s32.totalorder %s687, %s688
      %p700 = scmp.eq.s32.totalorder %s90, 1
      %p701 = por %p699, %p700
      %p703 = scmp.ne.s32.totalorder %s688, %s702
      %p704 = scmp.eq.s32.totalorder %s90, 0
      %p705 = por %p703, %p704
      %s707 = sadd.s32 %s706, 1
      %p710 = scmp.eq.s32.totalorder %s84, 1
      %p711 = scmp.ne.s32.totalorder %s706, %s708
      %p712 = scmp.eq.s32.totalorder %s84, 0
      %p713 = por %p711, %p712
      %p714 = scmp.ne.s32.totalorder %s706, %s708
      %p715 = scmp.eq.s32.totalorder %s89, 1
      %p716 = por %p714, %p715
      %p717 = scmp.ne.s32.totalorder %s708, %s709
      %p718 = scmp.eq.s32.totalorder %s89, 0
      %p719 = por %p717, %p718
      %p720 = scmp.ne.s32.totalorder %s708, %s709
      %p721 = scmp.eq.s32.totalorder %s90, 1
      %p722 = por %p720, %p721
      %p724 = scmp.ne.s32.totalorder %s709, %s723
      %p725 = scmp.eq.s32.totalorder %s90, 0
      %p726 = por %p724, %p725
      %s727 = ssub.s32 %s84, %s91
      %p728 = scmp.eq.s32.totalorder %s727, 0
      %s730 = sadd.s32 %s729, 1
      %s731 = scalar_select %p728, %s729, %s730
      %p734 = pneg %p728
      %p735 = scmp.eq.s32.totalorder %s84, 1
      %p736 = por %p734, %p735
      %p737 = scmp.ne.s32.totalorder %s729, %s732
      %p738 = scmp.eq.s32.totalorder %s84, 0
      %p739 = por %p737, %p738
      %p740 = scmp.ne.s32.totalorder %s729, %s732
      %p741 = scmp.eq.s32.totalorder %s89, 1
      %p742 = por %p740, %p741
      %p743 = scmp.ne.s32.totalorder %s732, %s733
      %p744 = scmp.eq.s32.totalorder %s89, 0
      %p745 = por %p743, %p744
      %p746 = scmp.ne.s32.totalorder %s732, %s733
      %p747 = scmp.eq.s32.totalorder %s90, 1
      %p748 = por %p746, %p747
      %p750 = scmp.ne.s32.totalorder %s733, %s749
      %p751 = scmp.eq.s32.totalorder %s90, 0
      %p752 = por %p750, %p751
      %p753 = scmp.le.s32.totalorder 1, %s84
      %p754 = scmp.lt.s32.totalorder %s84, 3
      %p755 = pnand %p753, %p754
      %p756 = pneg %p755
      // Predicated region
      $region9: #{_lambda_.1} parent=5 // pred_check
        _
      $region10: #{_lambda_.1} parent=5 // pred_check_branch
        %758 = sbr.rel (%p755) target = $region12
      $region11: #{_lambda_.1} parent=5 // pred_region
        %s759 = ssub.s32 %s84, 1
        // Predicated region
        $region13: #{_lambda_.1} parent=11 // pred_check
          %p760 = pneg %p131
        $region14: #{_lambda_.1} parent=11 // pred_check_branch
          %762 = sbr.rel (%p760) target = $region16
        $region15: #{_lambda_.1} parent=11 // pred_region
          %764 = vsyncadd [#allocation6], 0
          %s765 = sshll.u32 %s3, 4
          %s766 = int_to_ptr.hbm [resolvable:$true] %s765
          %s767 = sshll.u32 [#allocation5], 4
          %s768 = int_to_ptr.vmem [resolvable:$true] %s767
          %773 = dma.hbm_to_vmem [thread:$0]  %s766, 1024, %s768, [#allocation6], 64, 64, 4
        $region16: #{_lambda_.1} parent=11 // pred_fallthru
          _
        // Predicated region
        $region17: #{_lambda_.1} parent=11 // pred_check
          %p774 = pneg %p152
        $region18: #{_lambda_.1} parent=11 // pred_check_branch
          %776 = sbr.rel (%p774) target = $region20
        $region19: #{_lambda_.1} parent=11 // pred_region
          %778 = vsyncadd [#allocation6], 0
          %s780 = sshll.u32 %s5, 4
          %s781 = int_to_ptr.hbm [resolvable:$true] %s780
          %s782 = sshll.u32 [#allocation7], 4
          %s783 = int_to_ptr.vmem [resolvable:$true] %s782
          %785 = dma.hbm_to_vmem [thread:$0]  %s781, 16, %s783, [#allocation6]
        $region20: #{_lambda_.1} parent=11 // pred_fallthru
          _
        // Predicated region
        $region21: #{_lambda_.1} parent=11 // pred_check
          %p786 = pneg %p173
        $region22: #{_lambda_.1} parent=11 // pred_check_branch
          %788 = sbr.rel (%p786) target = $region24
        $region23: #{_lambda_.1} parent=11 // pred_region
          %790 = vsyncadd [#allocation9], 0
          %s791 = sshll.u32 %s7, 4
          %s792 = int_to_ptr.hbm [resolvable:$true] %s791
          %s793 = sshll.u32 [#allocation8], 4
          %s794 = int_to_ptr.vmem [resolvable:$true] %s793
          %799 = dma.hbm_to_vmem [thread:$0]  %s792, 1024, %s794, [#allocation9], 64, 64, 4
        $region24: #{_lambda_.1} parent=11 // pred_fallthru
          _
        // Predicated region
        $region25: #{_lambda_.1} parent=11 // pred_check
          %p800 = pneg %p194
        $region26: #{_lambda_.1} parent=11 // pred_check_branch
          %802 = sbr.rel (%p800) target = $region28
        $region27: #{_lambda_.1} parent=11 // pred_region
          %804 = vsyncadd [#allocation9], 0
          %s806 = sshll.u32 %s9, 4
          %s807 = int_to_ptr.hbm [resolvable:$true] %s806
          %s808 = sshll.u32 [#allocation10], 4
          %s809 = int_to_ptr.vmem [resolvable:$true] %s808
          %811 = dma.hbm_to_vmem [thread:$0]  %s807, 16, %s809, [#allocation9]
        $region28: #{_lambda_.1} parent=11 // pred_fallthru
          _
        // Predicated region
        $region29: #{_lambda_.1} parent=11 // pred_check
          %p812 = pneg %p215
        $region30: #{_lambda_.1} parent=11 // pred_check_branch
          %814 = sbr.rel (%p812) target = $region32
        $region31: #{_lambda_.1} parent=11 // pred_region
          %816 = vsyncadd [#allocation12], 0
          %s818 = sshll.u32 %s11, 4
          %s819 = int_to_ptr.hbm [resolvable:$true] %s818
          %s820 = sshll.u32 [#allocation11], 4
          %s821 = int_to_ptr.vmem [resolvable:$true] %s820
          %823 = dma.hbm_to_vmem [thread:$0]  %s819, 16, %s821, [#allocation12]
        $region32: #{_lambda_.1} parent=11 // pred_fallthru
          _
        // Predicated region
        $region33: #{_lambda_.1} parent=11 // pred_check
          %p824 = pneg %p236
        $region34: #{_lambda_.1} parent=11 // pred_check_branch
          %826 = sbr.rel (%p824) target = $region36
        $region35: #{_lambda_.1} parent=11 // pred_region
          %828 = vsyncadd [#allocation12], 0
          %s830 = sshll.u32 %s13, 4
          %s831 = int_to_ptr.hbm [resolvable:$true] %s830
          %s832 = sshll.u32 [#allocation13], 4
          %s833 = int_to_ptr.vmem [resolvable:$true] %s832
          %835 = dma.hbm_to_vmem [thread:$0]  %s831, 16, %s833, [#allocation12]
        $region36: #{_lambda_.1} parent=11 // pred_fallthru
          _
        // Predicated region
        $region37: #{_lambda_.1} parent=11 // pred_check
          %p836 = pneg %p257
        $region38: #{_lambda_.1} parent=11 // pred_check_branch
          %838 = sbr.rel (%p836) target = $region40
        $region39: #{_lambda_.1} parent=11 // pred_region
          %840 = vsyncadd [#allocation15], 0
          %s841 = sshll.u32 %s15, 4
          %s842 = int_to_ptr.hbm [resolvable:$true] %s841
          %s843 = sshll.u32 [#allocation14], 4
          %s844 = int_to_ptr.vmem [resolvable:$true] %s843
          %849 = dma.hbm_to_vmem [thread:$0]  %s842, 2048, %s844, [#allocation15], 64, 64, 4
        $region40: #{_lambda_.1} parent=11 // pred_fallthru
          _
        // Predicated region
        $region41: #{_lambda_.1} parent=11 // pred_check
          %p850 = pneg %p278
        $region42: #{_lambda_.1} parent=11 // pred_check_branch
          %852 = sbr.rel (%p850) target = $region44
        $region43: #{_lambda_.1} parent=11 // pred_region
          _
        $region44: #{_lambda_.1} parent=11 // pred_fallthru
          _
        // Predicated region
        $region45: #{_lambda_.1} parent=11 // pred_check
          %p853 = pneg %p299
        $region46: #{_lambda_.1} parent=11 // pred_check_branch
          %855 = sbr.rel (%p853) target = $region48
        $region47: #{_lambda_.1} parent=11 // pred_region
          %857 = vsyncadd [#allocation15], 0
          %s858 = sshll.u32 %s19, 4
          %s859 = int_to_ptr.hbm [resolvable:$true] %s858
          %s860 = sshll.u32 [#allocation16], 4
          %s861 = int_to_ptr.vmem [resolvable:$true] %s860
          %866 = dma.hbm_to_vmem [thread:$0]  %s859, 2048, %s861, [#allocation15], 64, 64, 4
        $region48: #{_lambda_.1} parent=11 // pred_fallthru
          _
        // Predicated region
        $region49: #{_lambda_.1} parent=11 // pred_check
          %p867 = pneg %p320
        $region50: #{_lambda_.1} parent=11 // pred_check_branch
          %869 = sbr.rel (%p867) target = $region52
        $region51: #{_lambda_.1} parent=11 // pred_region
          %871 = vsyncadd [#allocation18], 0
          %s872 = sshll.u32 %s21, 4
          %s873 = int_to_ptr.hbm [resolvable:$true] %s872
          %s874 = sshll.u32 [#allocation17], 4
          %s875 = int_to_ptr.vmem [resolvable:$true] %s874
          %880 = dma.hbm_to_vmem [thread:$0]  %s873, 32, %s875, [#allocation18], 16, 16, 1
        $region52: #{_lambda_.1} parent=11 // pred_fallthru
          _
        // Predicated region
        $region53: #{_lambda_.1} parent=11 // pred_check
          %p881 = pneg %p341
        $region54: #{_lambda_.1} parent=11 // pred_check_branch
          %883 = sbr.rel (%p881) target = $region56
        $region55: #{_lambda_.1} parent=11 // pred_region
          %885 = vsyncadd [#allocation18], 0
          %s886 = sshll.u32 %s23, 4
          %s887 = int_to_ptr.hbm [resolvable:$true] %s886
          %s888 = sshll.u32 [#allocation19], 4
          %s889 = int_to_ptr.vmem [resolvable:$true] %s888
          %894 = dma.hbm_to_vmem [thread:$0]  %s887, 2048, %s889, [#allocation18], 64, 64, 4
        $region56: #{_lambda_.1} parent=11 // pred_fallthru
          _
        // Predicated region
        $region57: #{_lambda_.1} parent=11 // pred_check
          %p895 = pneg %p362
        $region58: #{_lambda_.1} parent=11 // pred_check_branch
          %897 = sbr.rel (%p895) target = $region60
        $region59: #{_lambda_.1} parent=11 // pred_region
          _
        $region60: #{_lambda_.1} parent=11 // pred_fallthru
          _
        // Predicated region
        $region61: #{_lambda_.1} parent=11 // pred_check
          %p898 = pneg %p383
        $region62: #{_lambda_.1} parent=11 // pred_check_branch
          %900 = sbr.rel (%p898) target = $region64
        $region63: #{_lambda_.1} parent=11 // pred_region
          %902 = vsyncadd [#allocation21], 0
          %s903 = sshll.u32 %s27, 4
          %s904 = int_to_ptr.hbm [resolvable:$true] %s903
          %s905 = sshll.u32 [#allocation20], 4
          %s906 = int_to_ptr.vmem [resolvable:$true] %s905
          %911 = dma.hbm_to_vmem [thread:$0]  %s904, 2048, %s906, [#allocation21], 64, 64, 4
        $region64: #{_lambda_.1} parent=11 // pred_fallthru
          _
        // Predicated region
        $region65: #{_lambda_.1} parent=11 // pred_check
          %p912 = pneg %p404
        $region66: #{_lambda_.1} parent=11 // pred_check_branch
          %914 = sbr.rel (%p912) target = $region68
        $region67: #{_lambda_.1} parent=11 // pred_region
          %916 = vsyncadd [#allocation21], 0
          %s917 = sshll.u32 %s29, 4
          %s918 = int_to_ptr.hbm [resolvable:$true] %s917
          %s919 = sshll.u32 [#allocation22], 4
          %s920 = int_to_ptr.vmem [resolvable:$true] %s919
          %925 = dma.hbm_to_vmem [thread:$0]  %s918, 32, %s920, [#allocation21], 16, 16, 1
        $region68: #{_lambda_.1} parent=11 // pred_fallthru
          _
        // Predicated region
        $region69: #{_lambda_.1} parent=11 // pred_check
          %p926 = pneg %p425
        $region70: #{_lambda_.1} parent=11 // pred_check_branch
          %928 = sbr.rel (%p926) target = $region72
        $region71: #{_lambda_.1} parent=11 // pred_region
          _
        $region72: #{_lambda_.1} parent=11 // pred_fallthru
          _
        // Predicated region
        $region73: #{_lambda_.1} parent=11 // pred_check
          %p929 = pneg %p446
        $region74: #{_lambda_.1} parent=11 // pred_check_branch
          %931 = sbr.rel (%p929) target = $region76
        $region75: #{_lambda_.1} parent=11 // pred_region
          _
        $region76: #{_lambda_.1} parent=11 // pred_fallthru
          _
        // Predicated region
        $region77: #{_lambda_.1} parent=11 // pred_check
          %p932 = pneg %p467
        $region78: #{_lambda_.1} parent=11 // pred_check_branch
          %934 = sbr.rel (%p932) target = $region80
        $region79: #{_lambda_.1} parent=11 // pred_region
          %936 = vsyncadd [#allocation24], 0
          %s937 = sshll.u32 %s35, 4
          %s938 = int_to_ptr.hbm [resolvable:$true] %s937
          %s939 = sshll.u32 [#allocation23], 4
          %s940 = int_to_ptr.vmem [resolvable:$true] %s939
          %945 = dma.hbm_to_vmem [thread:$0]  %s938, 2048, %s940, [#allocation24], 64, 64, 4
        $region80: #{_lambda_.1} parent=11 // pred_fallthru
          _
        // Predicated region
        $region81: #{_lambda_.1} parent=11 // pred_check
          %p946 = pneg %p488
        $region82: #{_lambda_.1} parent=11 // pred_check_branch
          %948 = sbr.rel (%p946) target = $region84
        $region83: #{_lambda_.1} parent=11 // pred_region
          %950 = vsyncadd [#allocation24], 0
          %s951 = sshll.u32 %s37, 4
          %s952 = int_to_ptr.hbm [resolvable:$true] %s951
          %s953 = sshll.u32 [#allocation25], 4
          %s954 = int_to_ptr.vmem [resolvable:$true] %s953
          %959 = dma.hbm_to_vmem [thread:$0]  %s952, 32, %s954, [#allocation24], 16, 16, 1
        $region84: #{_lambda_.1} parent=11 // pred_fallthru
          _
        // Predicated region
        $region85: #{_lambda_.1} parent=11 // pred_check
          %p960 = pneg %p509
        $region86: #{_lambda_.1} parent=11 // pred_check_branch
          %962 = sbr.rel (%p960) target = $region88
        $region87: #{_lambda_.1} parent=11 // pred_region
          %964 = vsyncadd [#allocation27], 0
          %s965 = sshll.u32 %s39, 4
          %s966 = int_to_ptr.hbm [resolvable:$true] %s965
          %s967 = sshll.u32 [#allocation26], 4
          %s968 = int_to_ptr.vmem [resolvable:$true] %s967
          %973 = dma.hbm_to_vmem [thread:$0]  %s966, 2048, %s968, [#allocation27], 64, 64, 4
        $region88: #{_lambda_.1} parent=11 // pred_fallthru
          _
        // Predicated region
        $region89: #{_lambda_.1} parent=11 // pred_check
          %p974 = pneg %p530
        $region90: #{_lambda_.1} parent=11 // pred_check_branch
          %976 = sbr.rel (%p974) target = $region92
        $region91: #{_lambda_.1} parent=11 // pred_region
          %978 = vsyncadd [#allocation27], 0
          %s979 = sshll.u32 %s41, 4
          %s980 = int_to_ptr.hbm [resolvable:$true] %s979
          %s981 = sshll.u32 [#allocation28], 4
          %s982 = int_to_ptr.vmem [resolvable:$true] %s981
          %987 = dma.hbm_to_vmem [thread:$0]  %s980, 32, %s982, [#allocation27], 16, 16, 1
        $region92: #{_lambda_.1} parent=11 // pred_fallthru
          _
        // Predicated region
        $region93: #{_lambda_.1} parent=11 // pred_check
          %p988 = pneg %p551
        $region94: #{_lambda_.1} parent=11 // pred_check_branch
          %990 = sbr.rel (%p988) target = $region96
        $region95: #{_lambda_.1} parent=11 // pred_region
          _
        $region96: #{_lambda_.1} parent=11 // pred_fallthru
          _
        // Predicated region
        $region97: #{_lambda_.1} parent=11 // pred_check
          %p991 = pneg %p572
        $region98: #{_lambda_.1} parent=11 // pred_check_branch
          %993 = sbr.rel (%p991) target = $region100
        $region99: #{_lambda_.1} parent=11 // pred_region
          _
        $region100: #{_lambda_.1} parent=11 // pred_fallthru
          _
        // Predicated region
        $region101: #{_lambda_.1} parent=11 // pred_check
          %p994 = pneg %p593
        $region102: #{_lambda_.1} parent=11 // pred_check_branch
          %996 = sbr.rel (%p994) target = $region104
        $region103: #{_lambda_.1} parent=11 // pred_region
          %998 = vsyncadd [#allocation30], 0
          %s999 = sshll.u32 %s47, 4
          %s1000 = int_to_ptr.hbm [resolvable:$true] %s999
          %s1001 = sshll.u32 [#allocation29], 4
          %s1002 = int_to_ptr.vmem [resolvable:$true] %s1001
          %1007 = dma.hbm_to_vmem [thread:$0]  %s1000, 4096, %s1002, [#allocation30], 128, 128, 8
        $region104: #{_lambda_.1} parent=11 // pred_fallthru
          _
        // Predicated region
        $region105: #{_lambda_.1} parent=11 // pred_check
          %p1008 = pneg %p614
        $region106: #{_lambda_.1} parent=11 // pred_check_branch
          %1010 = sbr.rel (%p1008) target = $region108
        $region107: #{_lambda_.1} parent=11 // pred_region
          %1012 = vsyncadd [#allocation30], 0
          %s1013 = sshll.u32 %s49, 4
          %s1014 = int_to_ptr.hbm [resolvable:$true] %s1013
          %s1015 = sshll.u32 [#allocation31], 4
          %s1016 = int_to_ptr.vmem [resolvable:$true] %s1015
          %1021 = dma.hbm_to_vmem [thread:$0]  %s1014, 64, %s1016, [#allocation30], 32, 32, 2
        $region108: #{_lambda_.1} parent=11 // pred_fallthru
          _
        // Predicated region
        $region109: #{_lambda_.1} parent=11 // pred_check
          %p1022 = pneg %p635
        $region110: #{_lambda_.1} parent=11 // pred_check_branch
          %1024 = sbr.rel (%p1022) target = $region112
        $region111: #{_lambda_.1} parent=11 // pred_region
          %1026 = vsyncadd [#allocation33], 0
          %s1027 = sshll.u32 %s51, 4
          %s1028 = int_to_ptr.hbm [resolvable:$true] %s1027
          %s1029 = sshll.u32 [#allocation32], 4
          %s1030 = int_to_ptr.vmem [resolvable:$true] %s1029
          %1035 = dma.hbm_to_vmem [thread:$0]  %s1028, 4096, %s1030, [#allocation33], 64, 64, 4
        $region112: #{_lambda_.1} parent=11 // pred_fallthru
          _
        // Predicated region
        $region113: #{_lambda_.1} parent=11 // pred_check
          %p1036 = pneg %p656
        $region114: #{_lambda_.1} parent=11 // pred_check_branch
          %1038 = sbr.rel (%p1036) target = $region116
        $region115: #{_lambda_.1} parent=11 // pred_region
          %1040 = vsyncadd [#allocation33], 0
          %s1041 = sshll.u32 %s53, 4
          %s1042 = int_to_ptr.hbm [resolvable:$true] %s1041
          %s1043 = sshll.u32 [#allocation34], 4
          %s1044 = int_to_ptr.vmem [resolvable:$true] %s1043
          %1049 = dma.hbm_to_vmem [thread:$0]  %s1042, 32, %s1044, [#allocation33], 16, 16, 1
        $region116: #{_lambda_.1} parent=11 // pred_fallthru
          _
        // Predicated region
        $region117: #{_lambda_.1} parent=11 // pred_check
          %p1050 = pneg %p677
        $region118: #{_lambda_.1} parent=11 // pred_check_branch
          %1052 = sbr.rel (%p1050) target = $region120
        $region119: #{_lambda_.1} parent=11 // pred_region
          _
        $region120: #{_lambda_.1} parent=11 // pred_fallthru
          _
        // Predicated region
        $region121: #{_lambda_.1} parent=11 // pred_check
          %p1053 = pneg %p698
        $region122: #{_lambda_.1} parent=11 // pred_check_branch
          %1055 = sbr.rel (%p1053) target = $region124
        $region123: #{_lambda_.1} parent=11 // pred_region
          _
        $region124: #{_lambda_.1} parent=11 // pred_fallthru
          _
        // Predicated region
        $region125: #{_lambda_.1} parent=11 // pred_check
          %p1056 = pneg %p719
        $region126: #{_lambda_.1} parent=11 // pred_check_branch
          %1058 = sbr.rel (%p1056) target = $region128
        $region127: #{_lambda_.1} parent=11 // pred_region
          %1060 = vsyncadd [#allocation36], 0
          %s1061 = sshll.u32 %s59, 4
          %s1062 = int_to_ptr.hbm [resolvable:$true] %s1061
          %s1063 = sshll.u32 [#allocation35], 4
          %s1064 = int_to_ptr.vmem [resolvable:$true] %s1063
          %1069 = dma.hbm_to_vmem [thread:$0]  %s1062, 2048, %s1064, [#allocation36], 128, 128, 8
        $region128: #{_lambda_.1} parent=11 // pred_fallthru
          _
      $region12: #{_lambda_.1} parent=5 // pred_fallthru
        _
      %p1070 = scmp.lt.s32.totalorder %s84, 2
      // Predicated region
      $region129: #{_lambda_.1} parent=5 // pred_check
        %p1071 = pneg %p1070
      $region130: #{_lambda_.1} parent=5 // pred_check_branch
        %1073 = sbr.rel (%p1071) target = $region132
      $region131: #{_lambda_.1} parent=5 // pred_region
        // Predicated region
        $region133: #{_lambda_.1} parent=131 // pred_check
          %p1074 = pneg %p104
        $region134: #{_lambda_.1} parent=131 // pred_check_branch
          %1076 = sbr.rel (%p1074) target = $region136
        $region135: #{_lambda_.1} parent=131 // pred_region
          %s1077 = sand.u32 %s94, 1
          %s1078 = scalar_lea.sflag [#allocation3], %s1077
          %s1079 = sand.u32 %s94, 1
          %s1080 = scalar_lea.vmem [#allocation2], %s1079
          %1082 = vsyncadd %s1078, 0
          %s1083 = scalar_lea.hbm %s1, %s84
          %s1085 = sshll.u32 %s1083, 4
          %s1086 = int_to_ptr.hbm [resolvable:$true] %s1085
          %s1087 = sshll.u32 %s1080, 4
          %s1088 = int_to_ptr.vmem [resolvable:$true] %s1087
          %1090 = dma.hbm_to_vmem [thread:$0]  %s1086, 16, %s1088, %s1078
        $region136: #{_lambda_.1} parent=131 // pred_fallthru
          _
      $region132: #{_lambda_.1} parent=5 // pred_fallthru
        _
      %p1091 = scmp.le.s32.totalorder 1, %s84
      %p1092 = scmp.lt.s32.totalorder %s84, 3
      %p1093 = pnand %p1091, %p1092
      %p1094 = pneg %p1093
      // Predicated region
      $region137: #{_lambda_.1} parent=5 // pred_check
        _
      $region138: #{_lambda_.1} parent=5 // pred_check_branch
        %1096 = sbr.rel (%p1093) target = $region140
      $region139: #{_lambda_.1} parent=5 // pred_region
        %s1097 = ssub.s32 %s84, 1
        %s1098 = sand.u32 %s97, 1
        %s1099 = scalar_lea.sflag [#allocation3], %s1098
        %s1100 = sand.u32 %s97, 1
        %s1101 = scalar_lea.vmem [#allocation2], %s1100
        // Predicated region
        $region141: #{_lambda_.1} parent=139 // pred_check
          %p1102 = pneg %p110
        $region142: #{_lambda_.1} parent=139 // pred_check_branch
          %1104 = sbr.rel (%p1102) target = $region144
        $region143: #{_lambda_.1} parent=139 // pred_region
          %1106 = dma.done %s1099, 16
        $region144: #{_lambda_.1} parent=139 // pred_fallthru
          _
        // Predicated region
        $region145: #{_lambda_.1} parent=139 // pred_check
          %p1107 = pneg %p131
        $region146: #{_lambda_.1} parent=139 // pred_check_branch
          %1109 = sbr.rel (%p1107) target = $region148
        $region147: #{_lambda_.1} parent=139 // pred_region
          %1111 = dma.done [#allocation6], 1024
        $region148: #{_lambda_.1} parent=139 // pred_fallthru
          _
        // Predicated region
        $region149: #{_lambda_.1} parent=139 // pred_check
          %p1112 = pneg %p152
        $region150: #{_lambda_.1} parent=139 // pred_check_branch
          %1114 = sbr.rel (%p1112) target = $region152
        $region151: #{_lambda_.1} parent=139 // pred_region
          %1116 = dma.done [#allocation6], 16
        $region152: #{_lambda_.1} parent=139 // pred_fallthru
          _
        // Predicated region
        $region153: #{_lambda_.1} parent=139 // pred_check
          %p1117 = pneg %p173
        $region154: #{_lambda_.1} parent=139 // pred_check_branch
          %1119 = sbr.rel (%p1117) target = $region156
        $region155: #{_lambda_.1} parent=139 // pred_region
          %1121 = dma.done [#allocation9], 1024
        $region156: #{_lambda_.1} parent=139 // pred_fallthru
          _
        // Predicated region
        $region157: #{_lambda_.1} parent=139 // pred_check
          %p1122 = pneg %p194
        $region158: #{_lambda_.1} parent=139 // pred_check_branch
          %1124 = sbr.rel (%p1122) target = $region160
        $region159: #{_lambda_.1} parent=139 // pred_region
          %1126 = dma.done [#allocation9], 16
        $region160: #{_lambda_.1} parent=139 // pred_fallthru
          _
        // Predicated region
        $region161: #{_lambda_.1} parent=139 // pred_check
          %p1127 = pneg %p215
        $region162: #{_lambda_.1} parent=139 // pred_check_branch
          %1129 = sbr.rel (%p1127) target = $region164
        $region163: #{_lambda_.1} parent=139 // pred_region
          %1131 = dma.done [#allocation12], 16
        $region164: #{_lambda_.1} parent=139 // pred_fallthru
          _
        // Predicated region
        $region165: #{_lambda_.1} parent=139 // pred_check
          %p1132 = pneg %p236
        $region166: #{_lambda_.1} parent=139 // pred_check_branch
          %1134 = sbr.rel (%p1132) target = $region168
        $region167: #{_lambda_.1} parent=139 // pred_region
          %1136 = dma.done [#allocation12], 16
        $region168: #{_lambda_.1} parent=139 // pred_fallthru
          _
        // Predicated region
        $region169: #{_lambda_.1} parent=139 // pred_check
          %p1137 = pneg %p257
        $region170: #{_lambda_.1} parent=139 // pred_check_branch
          %1139 = sbr.rel (%p1137) target = $region172
        $region171: #{_lambda_.1} parent=139 // pred_region
          %1141 = dma.done [#allocation15], 2048
        $region172: #{_lambda_.1} parent=139 // pred_fallthru
          _
        // Predicated region
        $region173: #{_lambda_.1} parent=139 // pred_check
          %p1142 = pneg %p299
        $region174: #{_lambda_.1} parent=139 // pred_check_branch
          %1144 = sbr.rel (%p1142) target = $region176
        $region175: #{_lambda_.1} parent=139 // pred_region
          %1146 = dma.done [#allocation15], 2048
        $region176: #{_lambda_.1} parent=139 // pred_fallthru
          _
        // Predicated region
        $region177: #{_lambda_.1} parent=139 // pred_check
          %p1147 = pneg %p320
        $region178: #{_lambda_.1} parent=139 // pred_check_branch
          %1149 = sbr.rel (%p1147) target = $region180
        $region179: #{_lambda_.1} parent=139 // pred_region
          %1151 = dma.done [#allocation18], 32
        $region180: #{_lambda_.1} parent=139 // pred_fallthru
          _
        // Predicated region
        $region181: #{_lambda_.1} parent=139 // pred_check
          %p1152 = pneg %p341
        $region182: #{_lambda_.1} parent=139 // pred_check_branch
          %1154 = sbr.rel (%p1152) target = $region184
        $region183: #{_lambda_.1} parent=139 // pred_region
          %1156 = dma.done [#allocation18], 2048
        $region184: #{_lambda_.1} parent=139 // pred_fallthru
          _
        // Predicated region
        $region185: #{_lambda_.1} parent=139 // pred_check
          %p1157 = pneg %p383
        $region186: #{_lambda_.1} parent=139 // pred_check_branch
          %1159 = sbr.rel (%p1157) target = $region188
        $region187: #{_lambda_.1} parent=139 // pred_region
          %1161 = dma.done [#allocation21], 2048
        $region188: #{_lambda_.1} parent=139 // pred_fallthru
          _
        // Predicated region
        $region189: #{_lambda_.1} parent=139 // pred_check
          %p1162 = pneg %p404
        $region190: #{_lambda_.1} parent=139 // pred_check_branch
          %1164 = sbr.rel (%p1162) target = $region192
        $region191: #{_lambda_.1} parent=139 // pred_region
          %1166 = dma.done [#allocation21], 32
        $region192: #{_lambda_.1} parent=139 // pred_fallthru
          _
        // Predicated region
        $region193: #{_lambda_.1} parent=139 // pred_check
          %p1167 = pneg %p467
        $region194: #{_lambda_.1} parent=139 // pred_check_branch
          %1169 = sbr.rel (%p1167) target = $region196
        $region195: #{_lambda_.1} parent=139 // pred_region
          %1171 = dma.done [#allocation24], 2048
        $region196: #{_lambda_.1} parent=139 // pred_fallthru
          _
        // Predicated region
        $region197: #{_lambda_.1} parent=139 // pred_check
          %p1172 = pneg %p488
        $region198: #{_lambda_.1} parent=139 // pred_check_branch
          %1174 = sbr.rel (%p1172) target = $region200
        $region199: #{_lambda_.1} parent=139 // pred_region
          %1176 = dma.done [#allocation24], 32
        $region200: #{_lambda_.1} parent=139 // pred_fallthru
          _
        // Predicated region
        $region201: #{_lambda_.1} parent=139 // pred_check
          %p1177 = pneg %p509
        $region202: #{_lambda_.1} parent=139 // pred_check_branch
          %1179 = sbr.rel (%p1177) target = $region204
        $region203: #{_lambda_.1} parent=139 // pred_region
          %1181 = dma.done [#allocation27], 2048
        $region204: #{_lambda_.1} parent=139 // pred_fallthru
          _
        // Predicated region
        $region205: #{_lambda_.1} parent=139 // pred_check
          %p1182 = pneg %p530
        $region206: #{_lambda_.1} parent=139 // pred_check_branch
          %1184 = sbr.rel (%p1182) target = $region208
        $region207: #{_lambda_.1} parent=139 // pred_region
          %1186 = dma.done [#allocation27], 32
        $region208: #{_lambda_.1} parent=139 // pred_fallthru
          _
        // Predicated region
        $region209: #{_lambda_.1} parent=139 // pred_check
          %p1187 = pneg %p593
        $region210: #{_lambda_.1} parent=139 // pred_check_branch
          %1189 = sbr.rel (%p1187) target = $region212
        $region211: #{_lambda_.1} parent=139 // pred_region
          %1191 = dma.done [#allocation30], 4096
        $region212: #{_lambda_.1} parent=139 // pred_fallthru
          _
        // Predicated region
        $region213: #{_lambda_.1} parent=139 // pred_check
          %p1192 = pneg %p614
        $region214: #{_lambda_.1} parent=139 // pred_check_branch
          %1194 = sbr.rel (%p1192) target = $region216
        $region215: #{_lambda_.1} parent=139 // pred_region
          %1196 = dma.done [#allocation30], 64
        $region216: #{_lambda_.1} parent=139 // pred_fallthru
          _
        // Predicated region
        $region217: #{_lambda_.1} parent=139 // pred_check
          %p1197 = pneg %p635
        $region218: #{_lambda_.1} parent=139 // pred_check_branch
          %1199 = sbr.rel (%p1197) target = $region220
        $region219: #{_lambda_.1} parent=139 // pred_region
          %1201 = dma.done [#allocation33], 4096
        $region220: #{_lambda_.1} parent=139 // pred_fallthru
          _
        // Predicated region
        $region221: #{_lambda_.1} parent=139 // pred_check
          %p1202 = pneg %p656
        $region222: #{_lambda_.1} parent=139 // pred_check_branch
          %1204 = sbr.rel (%p1202) target = $region224
        $region223: #{_lambda_.1} parent=139 // pred_region
          %1206 = dma.done [#allocation33], 32
        $region224: #{_lambda_.1} parent=139 // pred_fallthru
          _
        // Predicated region
        $region225: #{_lambda_.1} parent=139 // pred_check
          %p1207 = pneg %p719
        $region226: #{_lambda_.1} parent=139 // pred_check_branch
          %1209 = sbr.rel (%p1207) target = $region228
        $region227: #{_lambda_.1} parent=139 // pred_region
          %1211 = dma.done [#allocation36], 2048
        $region228: #{_lambda_.1} parent=139 // pred_fallthru
          _
        %s1212 = sand.u32 %s97, 1
        %s1213 = scalar_lea.sflag [#allocation3], %s1212
        %s1214 = sand.u32 %s97, 1
        %s1215 = scalar_lea.vmem [#allocation2], %s1214
        %p1216 = pneg %p110
        %p1217 = pneg %p107
        %p1218 = pneg %p131
        %p1219 = pneg %p128
        %p1220 = pneg %p152
        %p1221 = pneg %p149
        %p1222 = pneg %p173
        %p1223 = pneg %p170
        %p1224 = pneg %p194
        %p1225 = pneg %p191
        %p1226 = pneg %p215
        %p1227 = pneg %p212
        %p1228 = pneg %p236
        %p1229 = pneg %p233
        %p1230 = pneg %p257
        %p1231 = pneg %p254
        %p1232 = pneg %p278
        %p1233 = pneg %p275
        %p1234 = pneg %p299
        %p1235 = pneg %p296
        %p1236 = pneg %p320
        %p1237 = pneg %p317
        %p1238 = pneg %p341
        %p1239 = pneg %p338
        %p1240 = pneg %p362
        %p1241 = pneg %p359
        %p1242 = pneg %p383
        %p1243 = pneg %p380
        %p1244 = pneg %p404
        %p1245 = pneg %p401
        %p1246 = pneg %p425
        %p1247 = pneg %p422
        %p1248 = pneg %p446
        %p1249 = pneg %p443
        %p1250 = pneg %p467
        %p1251 = pneg %p464
        %p1252 = pneg %p488
        %p1253 = pneg %p485
        %p1254 = pneg %p509
        %p1255 = pneg %p506
        %p1256 = pneg %p530
        %p1257 = pneg %p527
        %p1258 = pneg %p551
        %p1259 = pneg %p548
        %p1260 = pneg %p572
        %p1261 = pneg %p569
        %p1262 = pneg %p593
        %p1263 = pneg %p590
        %p1264 = pneg %p614
        %p1265 = pneg %p611
        %p1266 = pneg %p635
        %p1267 = pneg %p632
        %p1268 = pneg %p656
        %p1269 = pneg %p653
        %p1270 = pneg %p677
        %p1271 = pneg %p674
        %p1272 = pneg %p698
        %p1273 = pneg %p695
        %p1274 = pneg %p719
        %p1275 = pneg %p716
        %p1276 = pneg %p745
        %p1277 = pneg %p742
        %s1278 = sand.u32 %s732, 1
        %s1279 = scalar_lea.sflag [#allocation4], %s1278
        %s1280 = sand.u32 %s732, 1
        %s1281 = smul.addr %s1280, 16
        %s1282 = scalar_lea.vmem [#allocation37], %s1281
        %v1284 = vld [vmem:[%s1101] sm:$0x1]
        %v1285 = vpack.c.bf16 %v1284, %v1284
        %v1286 = vld [vmem:[#allocation5] sm:$0xf]
        %v1287 = vld [vmem:[#allocation5 + $0x4] sm:$0xf]
        %v1288 = vld [vmem:[#allocation5 + $0x8] sm:$0xf]
        %v1289 = vld [vmem:[#allocation5 + $0xc] sm:$0xf]
        %v1290 = vld [vmem:[#allocation5 + $0x10] sm:$0xf]
        %v1291 = vld [vmem:[#allocation5 + $0x14] sm:$0xf]
        %v1292 = vld [vmem:[#allocation5 + $0x18] sm:$0xf]
        %v1293 = vld [vmem:[#allocation5 + $0x1c] sm:$0xf]
        %v1294 = vld [vmem:[#allocation5 + $0x20] sm:$0xf]
        %v1295 = vld [vmem:[#allocation5 + $0x24] sm:$0xf]
        %v1296 = vld [vmem:[#allocation5 + $0x28] sm:$0xf]
        %v1297 = vld [vmem:[#allocation5 + $0x2c] sm:$0xf]
        %v1298 = vld [vmem:[#allocation5 + $0x30] sm:$0xf]
        %v1299 = vld [vmem:[#allocation5 + $0x34] sm:$0xf]
        %v1300 = vld [vmem:[#allocation5 + $0x38] sm:$0xf]
        %v1301 = vld [vmem:[#allocation5 + $0x3c] sm:$0xf]
        %v1302 = vld [vmem:[#allocation7] sm:$0x1]
        %v1303 = vld [vmem:[#allocation8] sm:$0xf]
        %v1304 = vld [vmem:[#allocation8 + $0x4] sm:$0xf]
        %v1305 = vld [vmem:[#allocation8 + $0x8] sm:$0xf]
        %v1306 = vld [vmem:[#allocation8 + $0xc] sm:$0xf]
        %v1307 = vld [vmem:[#allocation8 + $0x10] sm:$0xf]
        %v1308 = vld [vmem:[#allocation8 + $0x14] sm:$0xf]
        %v1309 = vld [vmem:[#allocation8 + $0x18] sm:$0xf]
        %v1310 = vld [vmem:[#allocation8 + $0x1c] sm:$0xf]
        %v1311 = vld [vmem:[#allocation8 + $0x20] sm:$0xf]
        %v1312 = vld [vmem:[#allocation8 + $0x24] sm:$0xf]
        %v1313 = vld [vmem:[#allocation8 + $0x28] sm:$0xf]
        %v1314 = vld [vmem:[#allocation8 + $0x2c] sm:$0xf]
        %v1315 = vld [vmem:[#allocation8 + $0x30] sm:$0xf]
        %v1316 = vld [vmem:[#allocation8 + $0x34] sm:$0xf]
        %v1317 = vld [vmem:[#allocation8 + $0x38] sm:$0xf]
        %v1318 = vld [vmem:[#allocation8 + $0x3c] sm:$0xf]
        %v1319 = vld [vmem:[#allocation10] sm:$0x1]
        %v1336 = vunpack.c.l.b16 %v1286
        %v1337 = vunpack.c.l.b16 %v1287
        %v1338 = vunpack.c.l.b16 %v1288
        %v1339 = vunpack.c.l.b16 %v1289
        %v1340 = vunpack.c.l.b16 %v1290
        %v1341 = vunpack.c.l.b16 %v1291
        %v1342 = vunpack.c.l.b16 %v1292
        %v1343 = vunpack.c.l.b16 %v1293
        %v1344 = vunpack.c.l.b16 %v1294
        %v1345 = vunpack.c.l.b16 %v1295
        %v1346 = vunpack.c.l.b16 %v1296
        %v1347 = vunpack.c.l.b16 %v1297
        %v1348 = vunpack.c.l.b16 %v1298
        %v1349 = vunpack.c.l.b16 %v1299
        %v1350 = vunpack.c.l.b16 %v1300
        %v1351 = vunpack.c.l.b16 %v1301
        %v1352 = vpack.c.b16 %v1337, %v1336
        %v1353 = vpack.c.b16 %v1339, %v1338
        %v1354 = vpack.c.b16 %v1341, %v1340
        %v1355 = vpack.c.b16 %v1343, %v1342
        %v1356 = vpack.c.b16 %v1345, %v1344
        %v1357 = vpack.c.b16 %v1347, %v1346
        %v1358 = vpack.c.b16 %v1349, %v1348
        %v1359 = vpack.c.b16 %v1351, %v1350
        %1368 = vmatpush.bf16.msra.mxu0 %v1359
        %1369 = vmatpush.bf16.msra.mxu0 %v1358
        %1370 = vmatpush.bf16.msra.mxu0 %v1357
        %1371 = vmatpush.bf16.msra.mxu0 %v1356
        %1372 = vmatpush.bf16.msra.mxu0 %v1355
        %1373 = vmatpush.bf16.msra.mxu0 %v1354
        %1374 = vmatpush.bf16.msra.mxu0 %v1353
        %1375 = vmatpush.bf16.msra.mxu0 %v1352
        %1376 = vmatmul.bf16.gmra.mxu0 %v1285
        %v1377 = vpop.f32.mrf.mxu0
        %v1378 = vadd.f32 %v1302, %v1377
        %v1379 = vpop.f32.mrf.mxu0
        %1380 = vdwg.mxu0
        %v1381 = vpack.c.bf16 %v1378, %v1378
        %v1398 = vunpack.c.l.b16 %v1303
        %v1399 = vunpack.c.l.b16 %v1304
        %v1400 = vunpack.c.l.b16 %v1305
        %v1401 = vunpack.c.l.b16 %v1306
        %v1402 = vunpack.c.l.b16 %v1307
        %v1403 = vunpack.c.l.b16 %v1308
        %v1404 = vunpack.c.l.b16 %v1309
        %v1405 = vunpack.c.l.b16 %v1310
        %v1406 = vunpack.c.l.b16 %v1311
        %v1407 = vunpack.c.l.b16 %v1312
        %v1408 = vunpack.c.l.b16 %v1313
        %v1409 = vunpack.c.l.b16 %v1314
        %v1410 = vunpack.c.l.b16 %v1315
        %v1411 = vunpack.c.l.b16 %v1316
        %v1412 = vunpack.c.l.b16 %v1317
        %v1413 = vunpack.c.l.b16 %v1318
        %v1414 = vpack.c.b16 %v1399, %v1398
        %v1415 = vpack.c.b16 %v1401, %v1400
        %v1416 = vpack.c.b16 %v1403, %v1402
        %v1417 = vpack.c.b16 %v1405, %v1404
        %v1418 = vpack.c.b16 %v1407, %v1406
        %v1419 = vpack.c.b16 %v1409, %v1408
        %v1420 = vpack.c.b16 %v1411, %v1410
        %v1421 = vpack.c.b16 %v1413, %v1412
        %1430 = vmatpush.bf16.msra.mxu0 %v1421
        %1431 = vmatpush.bf16.msra.mxu0 %v1420
        %1432 = vmatpush.bf16.msra.mxu0 %v1419
        %1433 = vmatpush.bf16.msra.mxu0 %v1418
        %1434 = vmatpush.bf16.msra.mxu0 %v1417
        %1435 = vmatpush.bf16.msra.mxu0 %v1416
        %1436 = vmatpush.bf16.msra.mxu0 %v1415
        %1437 = vmatpush.bf16.msra.mxu0 %v1414
        %1438 = vmatmul.bf16.gmra.mxu0 %v1381
        %v1439 = vpop.f32.mrf.mxu0
        %v1440 = vadd.f32 %v1319, %v1439
        %v1441 = vpop.f32.mrf.mxu0
        %1442 = vdwg.mxu0
        %v1443 = vld [vmem:[#allocation11] sm:$0x1]
        %v1444 = vld [vmem:[#allocation13] sm:$0x1]
        %vm1445 = vcmask 1040384
        %v1446 = vsel %vm1445, %v1440, 0.0
        %1447 = vadd.xlane.f32.xlu0 %v1446
        %v1448 = vpop.xlane.xlu0 %1447
        %v1449 = vrcp.pop 128.0
        %v1450 = vmul.f32 128.0, %v1449
        %v1451 = vsub.f32 1.0, %v1450
        %v1452 = vmul.f32 %v1449, %v1451
        %v1453 = vadd.f32 %v1449, %v1452
        %vm1454 = vweird.f32 %v1449
        %v1455 = vsel %vm1454, %v1449, %v1453
        %v1456 = vmul.f32 %v1448, %v1455
        %v1457 = vsub.f32 %v1440, %v1456
        %v1458 = vmul.f32 %v1457, %v1457
        %v1459 = vsel %vm1445, %v1458, 0.0
        %1460 = vadd.xlane.f32.xlu0 %v1459
        %v1461 = vpop.xlane.xlu0 %1460
        %v1462 = vmul.f32 %v1461, %v1455
        %v1463 = vadd.f32 %v1462, 1e-05
        %v1464 = vrsqrt.pop %v1463
        %v1465 = vmul.f32 %v1464, %v1463
        %v1466 = vmul.f32 %v1465, %v1464
        %v1467 = vmul.f32 0.5, %v1466
        %v1468 = vsub.f32 1.5, %v1467
        %v1469 = vmul.f32 %v1464, %v1468
        %vm1470 = vweird.f32 %v1463
        %vm1471 = vweird.f32 %v1464
        %vm1472 = vmor %vm1470, %vm1471
        %v1473 = vsel %vm1472, %v1464, %v1469
        %v1474 = vmul.f32 %v1457, %v1473
        %v1475 = vmul.f32 %v1474, %v1443
        %v1476 = vadd.f32 %v1475, %v1444
        %v1477 = vperm.slane %v1476, 0
        %v1478 = vlaneseq
        %v1479 = vshrl.u32 %v1478, 7
        %v1480 = vadd.s32 %v1479, 8
        %v1481 = vlaneseq
        %v1482 = vand.u32 %v1481, 127
        %vm1483 = vcmp.le.s32.totalorder %v1482, %v1479
        %vm1484 = vcmp.le.s32.totalorder %v1482, %v1480
        %v1485 = vpack.c.bf16 %v1477, %v1477
        %v1486 = vld [vmem:[#allocation14] sm:$0xf]
        %v1487 = vld [vmem:[#allocation14 + $0x4] sm:$0xf]
        %v1488 = vld [vmem:[#allocation14 + $0x8] sm:$0xf]
        %v1489 = vld [vmem:[#allocation14 + $0xc] sm:$0xf]
        %v1490 = vld [vmem:[#allocation14 + $0x10] sm:$0xf]
        %v1491 = vld [vmem:[#allocation14 + $0x14] sm:$0xf]
        %v1492 = vld [vmem:[#allocation14 + $0x18] sm:$0xf]
        %v1493 = vld [vmem:[#allocation14 + $0x1c] sm:$0xf]
        %v1494 = vld [vmem:[#allocation14 + $0x20] sm:$0xf]
        %v1495 = vld [vmem:[#allocation14 + $0x24] sm:$0xf]
        %v1496 = vld [vmem:[#allocation14 + $0x28] sm:$0xf]
        %v1497 = vld [vmem:[#allocation14 + $0x2c] sm:$0xf]
        %v1498 = vld [vmem:[#allocation14 + $0x30] sm:$0xf]
        %v1499 = vld [vmem:[#allocation14 + $0x34] sm:$0xf]
        %v1500 = vld [vmem:[#allocation14 + $0x38] sm:$0xf]
        %v1501 = vld [vmem:[#allocation14 + $0x3c] sm:$0xf]
        %v1502 = vld [vmem:[%s17] sm:$0x1]
        %v1504 = vperm.slane %v1502, 0
        %v1522 = vunpack.c.l.b16 %v1486
        %v1523 = vunpack.c.l.b16 %v1487
        %v1524 = vunpack.c.l.b16 %v1488
        %v1525 = vunpack.c.l.b16 %v1489
        %v1526 = vunpack.c.l.b16 %v1490
        %v1527 = vunpack.c.l.b16 %v1491
        %v1528 = vunpack.c.l.b16 %v1492
        %v1529 = vunpack.c.l.b16 %v1493
        %v1530 = vunpack.c.l.b16 %v1494
        %v1531 = vunpack.c.l.b16 %v1495
        %v1532 = vunpack.c.l.b16 %v1496
        %v1533 = vunpack.c.l.b16 %v1497
        %v1534 = vunpack.c.l.b16 %v1498
        %v1535 = vunpack.c.l.b16 %v1499
        %v1536 = vunpack.c.l.b16 %v1500
        %v1537 = vunpack.c.l.b16 %v1501
        %v1538 = vpack.c.b16 %v1523, %v1522
        %v1539 = vpack.c.b16 %v1525, %v1524
        %v1540 = vpack.c.b16 %v1527, %v1526
        %v1541 = vpack.c.b16 %v1529, %v1528
        %v1542 = vpack.c.b16 %v1531, %v1530
        %v1543 = vpack.c.b16 %v1533, %v1532
        %v1544 = vpack.c.b16 %v1535, %v1534
        %v1545 = vpack.c.b16 %v1537, %v1536
        %1554 = vmatpush.bf16.msra.mxu0 %v1545
        %1555 = vmatpush.bf16.msra.mxu0 %v1544
        %1556 = vmatpush.bf16.msra.mxu0 %v1543
        %1557 = vmatpush.bf16.msra.mxu0 %v1542
        %1558 = vmatpush.bf16.msra.mxu0 %v1541
        %1559 = vmatpush.bf16.msra.mxu0 %v1540
        %1560 = vmatpush.bf16.msra.mxu0 %v1539
        %1561 = vmatpush.bf16.msra.mxu0 %v1538
        %1562 = vmatmul.bf16.gmra.mxu0 %v1485
        %v1563 = vpop.f32.mrf.mxu0
        %v1564 = vadd.f32 %v1504, %v1563
        %v1565 = vpop.f32.mrf.mxu0
        %v1566 = vadd.f32 %v1504, %v1565
        %1567 = vdwg.mxu0
        %v1568 = vld [vmem:[#allocation16] sm:$0xf]
        %v1569 = vld [vmem:[#allocation16 + $0x4] sm:$0xf]
        %v1570 = vld [vmem:[#allocation16 + $0x8] sm:$0xf]
        %v1571 = vld [vmem:[#allocation16 + $0xc] sm:$0xf]
        %v1572 = vld [vmem:[#allocation16 + $0x10] sm:$0xf]
        %v1573 = vld [vmem:[#allocation16 + $0x14] sm:$0xf]
        %v1574 = vld [vmem:[#allocation16 + $0x18] sm:$0xf]
        %v1575 = vld [vmem:[#allocation16 + $0x1c] sm:$0xf]
        %v1576 = vld [vmem:[#allocation16 + $0x20] sm:$0xf]
        %v1577 = vld [vmem:[#allocation16 + $0x24] sm:$0xf]
        %v1578 = vld [vmem:[#allocation16 + $0x28] sm:$0xf]
        %v1579 = vld [vmem:[#allocation16 + $0x2c] sm:$0xf]
        %v1580 = vld [vmem:[#allocation16 + $0x30] sm:$0xf]
        %v1581 = vld [vmem:[#allocation16 + $0x34] sm:$0xf]
        %v1582 = vld [vmem:[#allocation16 + $0x38] sm:$0xf]
        %v1583 = vld [vmem:[#allocation16 + $0x3c] sm:$0xf]
        %v1584 = vld [vmem:[#allocation17] sm:$0x1]
        %v1586 = vperm.slane %v1584, 0
        %v1604 = vunpack.c.l.b16 %v1568
        %v1605 = vunpack.c.l.b16 %v1569
        %v1606 = vunpack.c.l.b16 %v1570
        %v1607 = vunpack.c.l.b16 %v1571
        %v1608 = vunpack.c.l.b16 %v1572
        %v1609 = vunpack.c.l.b16 %v1573
        %v1610 = vunpack.c.l.b16 %v1574
        %v1611 = vunpack.c.l.b16 %v1575
        %v1612 = vunpack.c.l.b16 %v1576
        %v1613 = vunpack.c.l.b16 %v1577
        %v1614 = vunpack.c.l.b16 %v1578
        %v1615 = vunpack.c.l.b16 %v1579
        %v1616 = vunpack.c.l.b16 %v1580
        %v1617 = vunpack.c.l.b16 %v1581
        %v1618 = vunpack.c.l.b16 %v1582
        %v1619 = vunpack.c.l.b16 %v1583
        %v1620 = vpack.c.b16 %v1605, %v1604
        %v1621 = vpack.c.b16 %v1607, %v1606
        %v1622 = vpack.c.b16 %v1609, %v1608
        %v1623 = vpack.c.b16 %v1611, %v1610
        %v1624 = vpack.c.b16 %v1613, %v1612
        %v1625 = vpack.c.b16 %v1615, %v1614
        %v1626 = vpack.c.b16 %v1617, %v1616
        %v1627 = vpack.c.b16 %v1619, %v1618
        %1636 = vmatpush.bf16.msra.mxu0 %v1627
        %1637 = vmatpush.bf16.msra.mxu0 %v1626
        %1638 = vmatpush.bf16.msra.mxu0 %v1625
        %1639 = vmatpush.bf16.msra.mxu0 %v1624
        %1640 = vmatpush.bf16.msra.mxu0 %v1623
        %1641 = vmatpush.bf16.msra.mxu0 %v1622
        %1642 = vmatpush.bf16.msra.mxu0 %v1621
        %1643 = vmatpush.bf16.msra.mxu0 %v1620
        %1644 = vmatmul.bf16.gmra.mxu0 %v1485
        %v1645 = vpop.f32.mrf.mxu0
        %v1646 = vadd.f32 %v1586, %v1645
        %v1647 = vpop.f32.mrf.mxu0
        %v1648 = vadd.f32 %v1586, %v1647
        %1649 = vdwg.mxu0
        %v1650 = vld [vmem:[#allocation19] sm:$0xf]
        %v1651 = vld [vmem:[#allocation19 + $0x4] sm:$0xf]
        %v1652 = vld [vmem:[#allocation19 + $0x8] sm:$0xf]
        %v1653 = vld [vmem:[#allocation19 + $0xc] sm:$0xf]
        %v1654 = vld [vmem:[#allocation19 + $0x10] sm:$0xf]
        %v1655 = vld [vmem:[#allocation19 + $0x14] sm:$0xf]
        %v1656 = vld [vmem:[#allocation19 + $0x18] sm:$0xf]
        %v1657 = vld [vmem:[#allocation19 + $0x1c] sm:$0xf]
        %v1658 = vld [vmem:[#allocation19 + $0x20] sm:$0xf]
        %v1659 = vld [vmem:[#allocation19 + $0x24] sm:$0xf]
        %v1660 = vld [vmem:[#allocation19 + $0x28] sm:$0xf]
        %v1661 = vld [vmem:[#allocation19 + $0x2c] sm:$0xf]
        %v1662 = vld [vmem:[#allocation19 + $0x30] sm:$0xf]
        %v1663 = vld [vmem:[#allocation19 + $0x34] sm:$0xf]
        %v1664 = vld [vmem:[#allocation19 + $0x38] sm:$0xf]
        %v1665 = vld [vmem:[#allocation19 + $0x3c] sm:$0xf]
        %v1666 = vld [vmem:[%s25] sm:$0x1]
        %v1668 = vperm.slane %v1666, 0
        %v1686 = vunpack.c.l.b16 %v1650
        %v1687 = vunpack.c.l.b16 %v1651
        %v1688 = vunpack.c.l.b16 %v1652
        %v1689 = vunpack.c.l.b16 %v1653
        %v1690 = vunpack.c.l.b16 %v1654
        %v1691 = vunpack.c.l.b16 %v1655
        %v1692 = vunpack.c.l.b16 %v1656
        %v1693 = vunpack.c.l.b16 %v1657
        %v1694 = vunpack.c.l.b16 %v1658
        %v1695 = vunpack.c.l.b16 %v1659
        %v1696 = vunpack.c.l.b16 %v1660
        %v1697 = vunpack.c.l.b16 %v1661
        %v1698 = vunpack.c.l.b16 %v1662
        %v1699 = vunpack.c.l.b16 %v1663
        %v1700 = vunpack.c.l.b16 %v1664
        %v1701 = vunpack.c.l.b16 %v1665
        %v1702 = vpack.c.b16 %v1687, %v1686
        %v1703 = vpack.c.b16 %v1689, %v1688
        %v1704 = vpack.c.b16 %v1691, %v1690
        %v1705 = vpack.c.b16 %v1693, %v1692
        %v1706 = vpack.c.b16 %v1695, %v1694
        %v1707 = vpack.c.b16 %v1697, %v1696
        %v1708 = vpack.c.b16 %v1699, %v1698
        %v1709 = vpack.c.b16 %v1701, %v1700
        %1718 = vmatpush.bf16.msra.mxu0 %v1709
        %1719 = vmatpush.bf16.msra.mxu0 %v1708
        %1720 = vmatpush.bf16.msra.mxu0 %v1707
        %1721 = vmatpush.bf16.msra.mxu0 %v1706
        %1722 = vmatpush.bf16.msra.mxu0 %v1705
        %1723 = vmatpush.bf16.msra.mxu0 %v1704
        %1724 = vmatpush.bf16.msra.mxu0 %v1703
        %1725 = vmatpush.bf16.msra.mxu0 %v1702
        %1726 = vmatmul.bf16.gmra.mxu0 %v1485
        %v1727 = vpop.f32.mrf.mxu0
        %v1728 = vadd.f32 %v1668, %v1727
        %v1729 = vpop.f32.mrf.mxu0
        %v1730 = vadd.f32 %v1668, %v1729
        %1731 = vdwg.mxu0
        %v1732 = vpack.c.bf16 %v1566, %v1564
        %v1733 = vpack.c.bf16 %v1648, %v1646
        %v1734 = vpack.c.bf16 %v1730, %v1728
        %vm1735 = vcmask 261120
        %v1737 = vsel %vm1735, %v1732, 0
        %v1740 = vsel %vm1735, %v1733, 0
        %1742 = vmatpush.bf16.xpose.msra.mxu0 0
        %1743 = vmatpush.bf16.xpose.msra.mxu0 0
        %1744 = vmatpush.bf16.xpose.msra.mxu0 0
        %1745 = vmatpush.bf16.xpose.msra.mxu0 0
        %1746 = vmatpush.bf16.xpose.msra.mxu0 0
        %1747 = vmatpush.bf16.xpose.msra.mxu0 0
        %1748 = vmatpush.bf16.xpose.msra.mxu0 0
        %1749 = vmatpush.bf16.xpose.msra.mxu0 %v1740
        %1750 = vmatmul.bf16.gmra.mxu0 %v1737
        %v1751 = vpop.f32.mrf.mxu0
        %v1752 = vadd.f32 0.0, %v1751
        %v1753 = vpop.f32.mrf.mxu0
        %v1754 = vadd.f32 0.0, %v1753
        %1755 = vdwg.mxu0
        %v1756 = vsel %vm1483, %v1752, -inf
        %v1757 = vsel %vm1484, %v1754, -inf
        %vm1758 = vcmask 130048
        %v1759 = vsel %vm1758, %v1756, -inf
        %1760 = vmax.xlane.f32.xlu0 %v1759
        %v1761 = vpop.xlane.xlu0 %1760
        %v1762 = vsel %vm1758, %v1757, -inf
        %1763 = vmax.xlane.f32.xlu0 %v1762
        %v1764 = vpop.xlane.xlu0 %1763
        %v1765 = vsub.f32 %v1756, %v1761
        %v1766 = vsub.f32 %v1757, %v1764
        %v1767 = vmul.f32 %v1765, 1.442695
        %v1768 = vpow.pop %v1767
        %v1769 = vmul.f32 %v1766, 1.442695
        %v1770 = vpow.pop %v1769
        %v1771 = vsel %vm1758, %v1768, 0.0
        %1772 = vadd.xlane.f32.xlu0 %v1771
        %v1773 = vpop.xlane.xlu0 %1772
        %v1774 = vsel %vm1758, %v1770, 0.0
        %1775 = vadd.xlane.f32.xlu0 %v1774
        %v1776 = vpop.xlane.xlu0 %1775
        %v1777 = vrcp.pop %v1773
        %v1778 = vmul.f32 %v1773, %v1777
        %v1779 = vsub.f32 1.0, %v1778
        %v1780 = vmul.f32 %v1777, %v1779
        %v1781 = vadd.f32 %v1777, %v1780
        %vm1782 = vweird.f32 %v1773
        %vm1783 = vweird.f32 %v1777
        %vm1784 = vmor %vm1782, %vm1783
        %v1785 = vsel %vm1784, %v1777, %v1781
        %v1786 = vand.u32 2147483647, %v1773
        %vm1787 = vcmp.eq.f32.partialorder %v1786, 8.507059e+37
        %v1788 = vand.u32 %v1773, 2147483648
        %v1789 = vor.u32 1.1754944e-38, %v1788
        %v1790 = vsel %vm1787, %v1789, %v1785
        %v1791 = vmul.f32 %v1768, %v1790
        %v1792 = vrcp.pop %v1776
        %v1793 = vmul.f32 %v1776, %v1792
        %v1794 = vsub.f32 1.0, %v1793
        %v1795 = vmul.f32 %v1792, %v1794
        %v1796 = vadd.f32 %v1792, %v1795
        %vm1797 = vweird.f32 %v1776
        %vm1798 = vweird.f32 %v1792
        %vm1799 = vmor %vm1797, %vm1798
        %v1800 = vsel %vm1799, %v1792, %v1796
        %v1801 = vand.u32 2147483647, %v1776
        %vm1802 = vcmp.eq.f32.partialorder %v1801, 8.507059e+37
        %v1803 = vand.u32 %v1776, 2147483648
        %v1804 = vor.u32 1.1754944e-38, %v1803
        %v1805 = vsel %vm1802, %v1804, %v1800
        %v1806 = vmul.f32 %v1770, %v1805
        %v1807 = vpack.c.bf16 %v1806, %v1791
        %v1809 = vsel %vm1758, %v1807, 0
        %1811 = vmatpush.bf16.msra.mxu0 0
        %1812 = vmatpush.bf16.msra.mxu0 0
        %1813 = vmatpush.bf16.msra.mxu0 0
        %1814 = vmatpush.bf16.msra.mxu0 0
        %1815 = vmatpush.bf16.msra.mxu0 0
        %1816 = vmatpush.bf16.msra.mxu0 0
        %1817 = vmatpush.bf16.msra.mxu0 0
        %1818 = vmatpush.bf16.msra.mxu0 %v1734
        %1819 = vmatmul.bf16.gmra.mxu0 %v1809
        %v1820 = vpop.f32.mrf.mxu0
        %v1821 = vadd.f32 0.0, %v1820
        %v1822 = vpop.f32.mrf.mxu0
        %v1823 = vadd.f32 0.0, %v1822
        %1824 = vdwg.mxu0
        %1826 = vrot.lane.b32.xlu0 %v1732, 96
        %v1827 = vpop.permute.xlu0 %1826
        %1829 = vrot.lane.b32.xlu0 %v1733, 96
        %v1830 = vpop.permute.xlu0 %1829
        %v1832 = vsel %vm1735, %v1827, 0
        %v1835 = vsel %vm1735, %v1830, 0
        %1837 = vmatpush.bf16.xpose.msra.mxu0 0
        %1838 = vmatpush.bf16.xpose.msra.mxu0 0
        %1839 = vmatpush.bf16.xpose.msra.mxu0 0
        %1840 = vmatpush.bf16.xpose.msra.mxu0 0
        %1841 = vmatpush.bf16.xpose.msra.mxu0 0
        %1842 = vmatpush.bf16.xpose.msra.mxu0 0
        %1843 = vmatpush.bf16.xpose.msra.mxu0 0
        %1844 = vmatpush.bf16.xpose.msra.mxu0 %v1835
        %1845 = vmatmul.bf16.gmra.mxu0 %v1832
        %v1846 = vpop.f32.mrf.mxu0
        %v1847 = vadd.f32 0.0, %v1846
        %v1848 = vpop.f32.mrf.mxu0
        %v1849 = vadd.f32 0.0, %v1848
        %1850 = vdwg.mxu0
        %v1851 = vsel %vm1483, %v1847, -inf
        %v1852 = vsel %vm1484, %v1849, -inf
        %v1853 = vsel %vm1758, %v1851, -inf
        %1854 = vmax.xlane.f32.xlu0 %v1853
        %v1855 = vpop.xlane.xlu0 %1854
        %v1856 = vsel %vm1758, %v1852, -inf
        %1857 = vmax.xlane.f32.xlu0 %v1856
        %v1858 = vpop.xlane.xlu0 %1857
        %v1859 = vsub.f32 %v1851, %v1855
        %v1860 = vsub.f32 %v1852, %v1858
        %v1861 = vmul.f32 %v1859, 1.442695
        %v1862 = vpow.pop %v1861
        %v1863 = vmul.f32 %v1860, 1.442695
        %v1864 = vpow.pop %v1863
        %v1865 = vsel %vm1758, %v1862, 0.0
        %1866 = vadd.xlane.f32.xlu0 %v1865
        %v1867 = vpop.xlane.xlu0 %1866
        %v1868 = vsel %vm1758, %v1864, 0.0
        %1869 = vadd.xlane.f32.xlu0 %v1868
        %v1870 = vpop.xlane.xlu0 %1869
        %v1871 = vrcp.pop %v1867
        %v1872 = vmul.f32 %v1867, %v1871
        %v1873 = vsub.f32 1.0, %v1872
        %v1874 = vmul.f32 %v1871, %v1873
        %v1875 = vadd.f32 %v1871, %v1874
        %vm1876 = vweird.f32 %v1867
        %vm1877 = vweird.f32 %v1871
        %vm1878 = vmor %vm1876, %vm1877
        %v1879 = vsel %vm1878, %v1871, %v1875
        %v1880 = vand.u32 2147483647, %v1867
        %vm1881 = vcmp.eq.f32.partialorder %v1880, 8.507059e+37
        %v1882 = vand.u32 %v1867, 2147483648
        %v1883 = vor.u32 1.1754944e-38, %v1882
        %v1884 = vsel %vm1881, %v1883, %v1879
        %v1885 = vmul.f32 %v1862, %v1884
        %v1886 = vrcp.pop %v1870
        %v1887 = vmul.f32 %v1870, %v1886
        %v1888 = vsub.f32 1.0, %v1887
        %v1889 = vmul.f32 %v1886, %v1888
        %v1890 = vadd.f32 %v1886, %v1889
        %vm1891 = vweird.f32 %v1870
        %vm1892 = vweird.f32 %v1886
        %vm1893 = vmor %vm1891, %vm1892
        %v1894 = vsel %vm1893, %v1886, %v1890
        %v1895 = vand.u32 2147483647, %v1870
        %vm1896 = vcmp.eq.f32.partialorder %v1895, 8.507059e+37
        %v1897 = vand.u32 %v1870, 2147483648
        %v1898 = vor.u32 1.1754944e-38, %v1897
        %v1899 = vsel %vm1896, %v1898, %v1894
        %v1900 = vmul.f32 %v1864, %v1899
        %v1901 = vpack.c.bf16 %v1900, %v1885
        %1903 = vrot.lane.b32.xlu0 %v1734, 96
        %v1904 = vpop.permute.xlu0 %1903
        %v1907 = vsel %vm1758, %v1901, 0
        %1909 = vmatpush.bf16.msra.mxu0 0
        %1910 = vmatpush.bf16.msra.mxu0 0
        %1911 = vmatpush.bf16.msra.mxu0 0
        %1912 = vmatpush.bf16.msra.mxu0 0
        %1913 = vmatpush.bf16.msra.mxu0 0
        %1914 = vmatpush.bf16.msra.mxu0 0
        %1915 = vmatpush.bf16.msra.mxu0 0
        %1916 = vmatpush.bf16.msra.mxu0 %v1904
        %1917 = vmatmul.bf16.gmra.mxu0 %v1907
        %v1918 = vpop.f32.mrf.mxu0
        %v1919 = vadd.f32 0.0, %v1918
        %v1920 = vpop.f32.mrf.mxu0
        %v1921 = vadd.f32 0.0, %v1920
        %1922 = vdwg.mxu0
        %1923 = vrot.lane.b32.xlu0 %v1732, 64
        %v1924 = vpop.permute.xlu0 %1923
        %1925 = vrot.lane.b32.xlu0 %v1733, 64
        %v1926 = vpop.permute.xlu0 %1925
        %v1928 = vsel %vm1735, %v1924, 0
        %v1931 = vsel %vm1735, %v1926, 0
        %1933 = vmatpush.bf16.xpose.msra.mxu0 0
        %1934 = vmatpush.bf16.xpose.msra.mxu0 0
        %1935 = vmatpush.bf16.xpose.msra.mxu0 0
        %1936 = vmatpush.bf16.xpose.msra.mxu0 0
        %1937 = vmatpush.bf16.xpose.msra.mxu0 0
        %1938 = vmatpush.bf16.xpose.msra.mxu0 0
        %1939 = vmatpush.bf16.xpose.msra.mxu0 0
        %1940 = vmatpush.bf16.xpose.msra.mxu0 %v1931
        %1941 = vmatmul.bf16.gmra.mxu0 %v1928
        %v1942 = vpop.f32.mrf.mxu0
        %v1943 = vadd.f32 0.0, %v1942
        %v1944 = vpop.f32.mrf.mxu0
        %v1945 = vadd.f32 0.0, %v1944
        %1946 = vdwg.mxu0
        %v1947 = vsel %vm1483, %v1943, -inf
        %v1948 = vsel %vm1484, %v1945, -inf
        %v1949 = vsel %vm1758, %v1947, -inf
        %1950 = vmax.xlane.f32.xlu0 %v1949
        %v1951 = vpop.xlane.xlu0 %1950
        %v1952 = vsel %vm1758, %v1948, -inf
        %1953 = vmax.xlane.f32.xlu0 %v1952
        %v1954 = vpop.xlane.xlu0 %1953
        %v1955 = vsub.f32 %v1947, %v1951
        %v1956 = vsub.f32 %v1948, %v1954
        %v1957 = vmul.f32 %v1955, 1.442695
        %v1958 = vpow.pop %v1957
        %v1959 = vmul.f32 %v1956, 1.442695
        %v1960 = vpow.pop %v1959
        %v1961 = vsel %vm1758, %v1958, 0.0
        %1962 = vadd.xlane.f32.xlu0 %v1961
        %v1963 = vpop.xlane.xlu0 %1962
        %v1964 = vsel %vm1758, %v1960, 0.0
        %1965 = vadd.xlane.f32.xlu0 %v1964
        %v1966 = vpop.xlane.xlu0 %1965
        %v1967 = vrcp.pop %v1963
        %v1968 = vmul.f32 %v1963, %v1967
        %v1969 = vsub.f32 1.0, %v1968
        %v1970 = vmul.f32 %v1967, %v1969
        %v1971 = vadd.f32 %v1967, %v1970
        %vm1972 = vweird.f32 %v1963
        %vm1973 = vweird.f32 %v1967
        %vm1974 = vmor %vm1972, %vm1973
        %v1975 = vsel %vm1974, %v1967, %v1971
        %v1976 = vand.u32 2147483647, %v1963
        %vm1977 = vcmp.eq.f32.partialorder %v1976, 8.507059e+37
        %v1978 = vand.u32 %v1963, 2147483648
        %v1979 = vor.u32 1.1754944e-38, %v1978
        %v1980 = vsel %vm1977, %v1979, %v1975
        %v1981 = vmul.f32 %v1958, %v1980
        %v1982 = vrcp.pop %v1966
        %v1983 = vmul.f32 %v1966, %v1982
        %v1984 = vsub.f32 1.0, %v1983
        %v1985 = vmul.f32 %v1982, %v1984
        %v1986 = vadd.f32 %v1982, %v1985
        %vm1987 = vweird.f32 %v1966
        %vm1988 = vweird.f32 %v1982
        %vm1989 = vmor %vm1987, %vm1988
        %v1990 = vsel %vm1989, %v1982, %v1986
        %v1991 = vand.u32 2147483647, %v1966
        %vm1992 = vcmp.eq.f32.partialorder %v1991, 8.507059e+37
        %v1993 = vand.u32 %v1966, 2147483648
        %v1994 = vor.u32 1.1754944e-38, %v1993
        %v1995 = vsel %vm1992, %v1994, %v1990
        %v1996 = vmul.f32 %v1960, %v1995
        %v1997 = vpack.c.bf16 %v1996, %v1981
        %1998 = vrot.lane.b32.xlu0 %v1734, 64
        %v1999 = vpop.permute.xlu0 %1998
        %v2002 = vsel %vm1758, %v1997, 0
        %2004 = vmatpush.bf16.msra.mxu0 0
        %2005 = vmatpush.bf16.msra.mxu0 0
        %2006 = vmatpush.bf16.msra.mxu0 0
        %2007 = vmatpush.bf16.msra.mxu0 0
        %2008 = vmatpush.bf16.msra.mxu0 0
        %2009 = vmatpush.bf16.msra.mxu0 0
        %2010 = vmatpush.bf16.msra.mxu0 0
        %2011 = vmatpush.bf16.msra.mxu0 %v1999
        %2012 = vmatmul.bf16.gmra.mxu0 %v2002
        %v2013 = vpop.f32.mrf.mxu0
        %v2014 = vadd.f32 0.0, %v2013
        %v2015 = vpop.f32.mrf.mxu0
        %v2016 = vadd.f32 0.0, %v2015
        %2017 = vdwg.mxu0
        %2018 = vrot.lane.b32.xlu0 %v1732, 32
        %v2019 = vpop.permute.xlu0 %2018
        %2020 = vrot.lane.b32.xlu0 %v1733, 32
        %v2021 = vpop.permute.xlu0 %2020
        %v2023 = vsel %vm1735, %v2019, 0
        %v2026 = vsel %vm1735, %v2021, 0
        %2028 = vmatpush.bf16.xpose.msra.mxu0 0
        %2029 = vmatpush.bf16.xpose.msra.mxu0 0
        %2030 = vmatpush.bf16.xpose.msra.mxu0 0
        %2031 = vmatpush.bf16.xpose.msra.mxu0 0
        %2032 = vmatpush.bf16.xpose.msra.mxu0 0
        %2033 = vmatpush.bf16.xpose.msra.mxu0 0
        %2034 = vmatpush.bf16.xpose.msra.mxu0 0
        %2035 = vmatpush.bf16.xpose.msra.mxu0 %v2026
        %2036 = vmatmul.bf16.gmra.mxu0 %v2023
        %v2037 = vpop.f32.mrf.mxu0
        %v2038 = vadd.f32 0.0, %v2037
        %v2039 = vpop.f32.mrf.mxu0
        %v2040 = vadd.f32 0.0, %v2039
        %2041 = vdwg.mxu0
        %v2042 = vsel %vm1483, %v2038, -inf
        %v2043 = vsel %vm1484, %v2040, -inf
        %v2044 = vsel %vm1758, %v2042, -inf
        %2045 = vmax.xlane.f32.xlu0 %v2044
        %v2046 = vpop.xlane.xlu0 %2045
        %v2047 = vsel %vm1758, %v2043, -inf
        %2048 = vmax.xlane.f32.xlu0 %v2047
        %v2049 = vpop.xlane.xlu0 %2048
        %v2050 = vsub.f32 %v2042, %v2046
        %v2051 = vsub.f32 %v2043, %v2049
        %v2052 = vmul.f32 %v2050, 1.442695
        %v2053 = vpow.pop %v2052
        %v2054 = vmul.f32 %v2051, 1.442695
        %v2055 = vpow.pop %v2054
        %v2056 = vsel %vm1758, %v2053, 0.0
        %2057 = vadd.xlane.f32.xlu0 %v2056
        %v2058 = vpop.xlane.xlu0 %2057
        %v2059 = vsel %vm1758, %v2055, 0.0
        %2060 = vadd.xlane.f32.xlu0 %v2059
        %v2061 = vpop.xlane.xlu0 %2060
        %v2062 = vrcp.pop %v2058
        %v2063 = vmul.f32 %v2058, %v2062
        %v2064 = vsub.f32 1.0, %v2063
        %v2065 = vmul.f32 %v2062, %v2064
        %v2066 = vadd.f32 %v2062, %v2065
        %vm2067 = vweird.f32 %v2058
        %vm2068 = vweird.f32 %v2062
        %vm2069 = vmor %vm2067, %vm2068
        %v2070 = vsel %vm2069, %v2062, %v2066
        %v2071 = vand.u32 2147483647, %v2058
        %vm2072 = vcmp.eq.f32.partialorder %v2071, 8.507059e+37
        %v2073 = vand.u32 %v2058, 2147483648
        %v2074 = vor.u32 1.1754944e-38, %v2073
        %v2075 = vsel %vm2072, %v2074, %v2070
        %v2076 = vmul.f32 %v2053, %v2075
        %v2077 = vrcp.pop %v2061
        %v2078 = vmul.f32 %v2061, %v2077
        %v2079 = vsub.f32 1.0, %v2078
        %v2080 = vmul.f32 %v2077, %v2079
        %v2081 = vadd.f32 %v2077, %v2080
        %vm2082 = vweird.f32 %v2061
        %vm2083 = vweird.f32 %v2077
        %vm2084 = vmor %vm2082, %vm2083
        %v2085 = vsel %vm2084, %v2077, %v2081
        %v2086 = vand.u32 2147483647, %v2061
        %vm2087 = vcmp.eq.f32.partialorder %v2086, 8.507059e+37
        %v2088 = vand.u32 %v2061, 2147483648
        %v2089 = vor.u32 1.1754944e-38, %v2088
        %v2090 = vsel %vm2087, %v2089, %v2085
        %v2091 = vmul.f32 %v2055, %v2090
        %v2092 = vpack.c.bf16 %v2091, %v2076
        %2093 = vrot.lane.b32.xlu0 %v1734, 32
        %v2094 = vpop.permute.xlu0 %2093
        %v2097 = vsel %vm1758, %v2092, 0
        %2099 = vmatpush.bf16.msra.mxu0 0
        %2100 = vmatpush.bf16.msra.mxu0 0
        %2101 = vmatpush.bf16.msra.mxu0 0
        %2102 = vmatpush.bf16.msra.mxu0 0
        %2103 = vmatpush.bf16.msra.mxu0 0
        %2104 = vmatpush.bf16.msra.mxu0 0
        %2105 = vmatpush.bf16.msra.mxu0 0
        %2106 = vmatpush.bf16.msra.mxu0 %v2094
        %2107 = vmatmul.bf16.gmra.mxu0 %v2097
        %v2108 = vpop.f32.mrf.mxu0
        %v2109 = vadd.f32 0.0, %v2108
        %v2110 = vpop.f32.mrf.mxu0
        %v2111 = vadd.f32 0.0, %v2110
        %2112 = vdwg.mxu0
        %2115 = vrot.lane.b32.xlu0 %v1919, 32
        %v2116 = vpop.permute.xlu0 %2115
        %2117 = vrot.lane.b32.xlu0 %v1921, 32
        %v2118 = vpop.permute.xlu0 %2117
        %2123 = vrot.lane.b32.xlu0 %v2014, 64
        %v2124 = vpop.permute.xlu0 %2123
        %2125 = vrot.lane.b32.xlu0 %v2016, 64
        %v2126 = vpop.permute.xlu0 %2125
        %2131 = vrot.lane.b32.xlu0 %v2109, 96
        %v2132 = vpop.permute.xlu0 %2131
        %2133 = vrot.lane.b32.xlu0 %v2111, 96
        %v2134 = vpop.permute.xlu0 %2133
        %v2137 = vsel %vm1735, %v1821, %v2116
        %v2138 = vsel %vm1735, %v1823, %v2118
        %vm2139 = vcmask 523264
        %v2140 = vsel %vm2139, %v2137, %v2124
        %v2141 = vsel %vm2139, %v2138, %v2126
        %vm2142 = vcmask 785408
        %v2143 = vsel %vm2142, %v2140, %v2132
        %v2144 = vsel %vm2142, %v2141, %v2134
        %v2145 = vpack.c.bf16 %v2144, %v2143
        %v2146 = vld [vmem:[#allocation20] sm:$0xf]
        %v2147 = vld [vmem:[#allocation20 + $0x4] sm:$0xf]
        %v2148 = vld [vmem:[#allocation20 + $0x8] sm:$0xf]
        %v2149 = vld [vmem:[#allocation20 + $0xc] sm:$0xf]
        %v2150 = vld [vmem:[#allocation20 + $0x10] sm:$0xf]
        %v2151 = vld [vmem:[#allocation20 + $0x14] sm:$0xf]
        %v2152 = vld [vmem:[#allocation20 + $0x18] sm:$0xf]
        %v2153 = vld [vmem:[#allocation20 + $0x1c] sm:$0xf]
        %v2154 = vld [vmem:[#allocation20 + $0x20] sm:$0xf]
        %v2155 = vld [vmem:[#allocation20 + $0x24] sm:$0xf]
        %v2156 = vld [vmem:[#allocation20 + $0x28] sm:$0xf]
        %v2157 = vld [vmem:[#allocation20 + $0x2c] sm:$0xf]
        %v2158 = vld [vmem:[#allocation20 + $0x30] sm:$0xf]
        %v2159 = vld [vmem:[#allocation20 + $0x34] sm:$0xf]
        %v2160 = vld [vmem:[#allocation20 + $0x38] sm:$0xf]
        %v2161 = vld [vmem:[#allocation20 + $0x3c] sm:$0xf]
        %v2162 = vld [vmem:[#allocation22] sm:$0x1]
        %v2164 = vperm.slane %v2162, 0
        %v2182 = vunpack.c.l.b16 %v2146
        %v2183 = vunpack.c.l.b16 %v2147
        %v2184 = vunpack.c.l.b16 %v2148
        %v2185 = vunpack.c.l.b16 %v2149
        %v2186 = vunpack.c.l.b16 %v2150
        %v2187 = vunpack.c.l.b16 %v2151
        %v2188 = vunpack.c.l.b16 %v2152
        %v2189 = vunpack.c.l.b16 %v2153
        %v2190 = vunpack.c.l.b16 %v2154
        %v2191 = vunpack.c.l.b16 %v2155
        %v2192 = vunpack.c.l.b16 %v2156
        %v2193 = vunpack.c.l.b16 %v2157
        %v2194 = vunpack.c.l.b16 %v2158
        %v2195 = vunpack.c.l.b16 %v2159
        %v2196 = vunpack.c.l.b16 %v2160
        %v2197 = vunpack.c.l.b16 %v2161
        %v2198 = vpack.c.b16 %v2183, %v2182
        %v2199 = vpack.c.b16 %v2185, %v2184
        %v2200 = vpack.c.b16 %v2187, %v2186
        %v2201 = vpack.c.b16 %v2189, %v2188
        %v2202 = vpack.c.b16 %v2191, %v2190
        %v2203 = vpack.c.b16 %v2193, %v2192
        %v2204 = vpack.c.b16 %v2195, %v2194
        %v2205 = vpack.c.b16 %v2197, %v2196
        %2214 = vmatpush.bf16.msra.mxu0 %v2205
        %2215 = vmatpush.bf16.msra.mxu0 %v2204
        %2216 = vmatpush.bf16.msra.mxu0 %v2203
        %2217 = vmatpush.bf16.msra.mxu0 %v2202
        %2218 = vmatpush.bf16.msra.mxu0 %v2201
        %2219 = vmatpush.bf16.msra.mxu0 %v2200
        %2220 = vmatpush.bf16.msra.mxu0 %v2199
        %2221 = vmatpush.bf16.msra.mxu0 %v2198
        %2222 = vmatmul.bf16.gmra.mxu0 %v2145
        %v2223 = vpop.f32.mrf.mxu0
        %v2224 = vadd.f32 %v2164, %v2223
        %v2225 = vpop.f32.mrf.mxu0
        %v2226 = vadd.f32 %v2164, %v2225
        %2227 = vdwg.mxu0
        %v2228 = vadd.f32 %v1477, %v2224
        %v2229 = vadd.f32 %v1477, %v2226
        %v2230 = vld [vmem:[%s31] sm:$0x1]
        %v2231 = vld [vmem:[%s33] sm:$0x1]
        %2232 = vadd.xlane.f32.xlu0 %v2228
        %v2233 = vpop.xlane.xlu0 %2232
        %2234 = vadd.xlane.f32.xlu0 %v2229
        %v2235 = vpop.xlane.xlu0 %2234
        %v2236 = vmul.f32 %v2233, %v1455
        %v2237 = vmul.f32 %v2235, %v1455
        %v2238 = vsub.f32 %v2228, %v2236
        %v2239 = vsub.f32 %v2229, %v2237
        %v2240 = vmul.f32 %v2238, %v2238
        %v2241 = vmul.f32 %v2239, %v2239
        %2242 = vadd.xlane.f32.xlu0 %v2240
        %v2243 = vpop.xlane.xlu0 %2242
        %2244 = vadd.xlane.f32.xlu0 %v2241
        %v2245 = vpop.xlane.xlu0 %2244
        %v2246 = vmul.f32 %v2243, %v1455
        %v2247 = vmul.f32 %v2245, %v1455
        %v2248 = vadd.f32 %v2246, 1e-05
        %v2249 = vadd.f32 %v2247, 1e-05
        %v2250 = vrsqrt.pop %v2248
        %v2251 = vmul.f32 %v2250, %v2248
        %v2252 = vmul.f32 %v2251, %v2250
        %v2253 = vmul.f32 0.5, %v2252
        %v2254 = vsub.f32 1.5, %v2253
        %v2255 = vmul.f32 %v2250, %v2254
        %vm2256 = vweird.f32 %v2248
        %vm2257 = vweird.f32 %v2250
        %vm2258 = vmor %vm2256, %vm2257
        %v2259 = vsel %vm2258, %v2250, %v2255
        %v2260 = vrsqrt.pop %v2249
        %v2261 = vmul.f32 %v2260, %v2249
        %v2262 = vmul.f32 %v2261, %v2260
        %v2263 = vmul.f32 0.5, %v2262
        %v2264 = vsub.f32 1.5, %v2263
        %v2265 = vmul.f32 %v2260, %v2264
        %vm2266 = vweird.f32 %v2249
        %vm2267 = vweird.f32 %v2260
        %vm2268 = vmor %vm2266, %vm2267
        %v2269 = vsel %vm2268, %v2260, %v2265
        %v2270 = vmul.f32 %v2238, %v2259
        %v2271 = vmul.f32 %v2239, %v2269
        %v2273 = vperm.slane %v2230, 0
        %v2275 = vmul.f32 %v2270, %v2273
        %v2276 = vmul.f32 %v2271, %v2273
        %v2278 = vperm.slane %v2231, 0
        %v2280 = vadd.f32 %v2275, %v2278
        %v2281 = vadd.f32 %v2276, %v2278
        %v2282 = vld [vmem:[#allocation23] sm:$0xf]
        %v2283 = vld [vmem:[#allocation23 + $0x4] sm:$0xf]
        %v2284 = vld [vmem:[#allocation23 + $0x8] sm:$0xf]
        %v2285 = vld [vmem:[#allocation23 + $0xc] sm:$0xf]
        %v2286 = vld [vmem:[#allocation23 + $0x10] sm:$0xf]
        %v2287 = vld [vmem:[#allocation23 + $0x14] sm:$0xf]
        %v2288 = vld [vmem:[#allocation23 + $0x18] sm:$0xf]
        %v2289 = vld [vmem:[#allocation23 + $0x1c] sm:$0xf]
        %v2290 = vld [vmem:[#allocation23 + $0x20] sm:$0xf]
        %v2291 = vld [vmem:[#allocation23 + $0x24] sm:$0xf]
        %v2292 = vld [vmem:[#allocation23 + $0x28] sm:$0xf]
        %v2293 = vld [vmem:[#allocation23 + $0x2c] sm:$0xf]
        %v2294 = vld [vmem:[#allocation23 + $0x30] sm:$0xf]
        %v2295 = vld [vmem:[#allocation23 + $0x34] sm:$0xf]
        %v2296 = vld [vmem:[#allocation23 + $0x38] sm:$0xf]
        %v2297 = vld [vmem:[#allocation23 + $0x3c] sm:$0xf]
        %v2298 = vld [vmem:[#allocation25] sm:$0x1]
        %v2299 = vld [vmem:[#allocation26] sm:$0xf]
        %v2300 = vld [vmem:[#allocation26 + $0x4] sm:$0xf]
        %v2301 = vld [vmem:[#allocation26 + $0x8] sm:$0xf]
        %v2302 = vld [vmem:[#allocation26 + $0xc] sm:$0xf]
        %v2303 = vld [vmem:[#allocation26 + $0x10] sm:$0xf]
        %v2304 = vld [vmem:[#allocation26 + $0x14] sm:$0xf]
        %v2305 = vld [vmem:[#allocation26 + $0x18] sm:$0xf]
        %v2306 = vld [vmem:[#allocation26 + $0x1c] sm:$0xf]
        %v2307 = vld [vmem:[#allocation26 + $0x20] sm:$0xf]
        %v2308 = vld [vmem:[#allocation26 + $0x24] sm:$0xf]
        %v2309 = vld [vmem:[#allocation26 + $0x28] sm:$0xf]
        %v2310 = vld [vmem:[#allocation26 + $0x2c] sm:$0xf]
        %v2311 = vld [vmem:[#allocation26 + $0x30] sm:$0xf]
        %v2312 = vld [vmem:[#allocation26 + $0x34] sm:$0xf]
        %v2313 = vld [vmem:[#allocation26 + $0x38] sm:$0xf]
        %v2314 = vld [vmem:[#allocation26 + $0x3c] sm:$0xf]
        %v2315 = vld [vmem:[#allocation28] sm:$0x1]
        %v2332 = vunpack.c.l.b16 %v2282
        %v2333 = vunpack.c.l.b16 %v2283
        %v2334 = vunpack.c.l.b16 %v2284
        %v2335 = vunpack.c.l.b16 %v2285
        %v2336 = vunpack.c.l.b16 %v2286
        %v2337 = vunpack.c.l.b16 %v2287
        %v2338 = vunpack.c.l.b16 %v2288
        %v2339 = vunpack.c.l.b16 %v2289
        %v2340 = vunpack.c.l.b16 %v2290
        %v2341 = vunpack.c.l.b16 %v2291
        %v2342 = vunpack.c.l.b16 %v2292
        %v2343 = vunpack.c.l.b16 %v2293
        %v2344 = vunpack.c.l.b16 %v2294
        %v2345 = vunpack.c.l.b16 %v2295
        %v2346 = vunpack.c.l.b16 %v2296
        %v2347 = vunpack.c.l.b16 %v2297
        %v2348 = vpack.c.b16 %v2333, %v2332
        %v2349 = vpack.c.b16 %v2335, %v2334
        %v2350 = vpack.c.b16 %v2337, %v2336
        %v2351 = vpack.c.b16 %v2339, %v2338
        %v2352 = vpack.c.b16 %v2341, %v2340
        %v2353 = vpack.c.b16 %v2343, %v2342
        %v2354 = vpack.c.b16 %v2345, %v2344
        %v2355 = vpack.c.b16 %v2347, %v2346
        %2364 = vmatpush.bf16.msra.mxu0 %v2355
        %2365 = vmatpush.bf16.msra.mxu0 %v2354
        %2366 = vmatpush.bf16.msra.mxu0 %v2353
        %2367 = vmatpush.bf16.msra.mxu0 %v2352
        %2368 = vmatpush.bf16.msra.mxu0 %v2351
        %2369 = vmatpush.bf16.msra.mxu0 %v2350
        %2370 = vmatpush.bf16.msra.mxu0 %v2349
        %2371 = vmatpush.bf16.msra.mxu0 %v2348
        %2372 = vmatmul.bf16.gmra.mxu0 %v1285
        %v2373 = vpop.f32.mrf.mxu0
        %v2374 = vadd.f32 %v2298, %v2373
        %v2375 = vpop.f32.mrf.mxu0
        %2376 = vdwg.mxu0
        %v2377 = vpack.c.bf16 %v2374, %v2374
        %v2394 = vunpack.c.l.b16 %v2299
        %v2395 = vunpack.c.l.b16 %v2300
        %v2396 = vunpack.c.l.b16 %v2301
        %v2397 = vunpack.c.l.b16 %v2302
        %v2398 = vunpack.c.l.b16 %v2303
        %v2399 = vunpack.c.l.b16 %v2304
        %v2400 = vunpack.c.l.b16 %v2305
        %v2401 = vunpack.c.l.b16 %v2306
        %v2402 = vunpack.c.l.b16 %v2307
        %v2403 = vunpack.c.l.b16 %v2308
        %v2404 = vunpack.c.l.b16 %v2309
        %v2405 = vunpack.c.l.b16 %v2310
        %v2406 = vunpack.c.l.b16 %v2311
        %v2407 = vunpack.c.l.b16 %v2312
        %v2408 = vunpack.c.l.b16 %v2313
        %v2409 = vunpack.c.l.b16 %v2314
        %v2410 = vpack.c.b16 %v2395, %v2394
        %v2411 = vpack.c.b16 %v2397, %v2396
        %v2412 = vpack.c.b16 %v2399, %v2398
        %v2413 = vpack.c.b16 %v2401, %v2400
        %v2414 = vpack.c.b16 %v2403, %v2402
        %v2415 = vpack.c.b16 %v2405, %v2404
        %v2416 = vpack.c.b16 %v2407, %v2406
        %v2417 = vpack.c.b16 %v2409, %v2408
        %2426 = vmatpush.bf16.msra.mxu0 %v2417
        %2427 = vmatpush.bf16.msra.mxu0 %v2416
        %2428 = vmatpush.bf16.msra.mxu0 %v2415
        %2429 = vmatpush.bf16.msra.mxu0 %v2414
        %2430 = vmatpush.bf16.msra.mxu0 %v2413
        %2431 = vmatpush.bf16.msra.mxu0 %v2412
        %2432 = vmatpush.bf16.msra.mxu0 %v2411
        %2433 = vmatpush.bf16.msra.mxu0 %v2410
        %2434 = vmatmul.bf16.gmra.mxu0 %v2377
        %v2435 = vpop.f32.mrf.mxu0
        %v2436 = vadd.f32 %v2315, %v2435
        %v2437 = vpop.f32.mrf.mxu0
        %2438 = vdwg.mxu0
        %v2439 = vperm.slane %v2436, 0
        %v2440 = vadd.f32 %v2280, %v2439
        %v2441 = vadd.f32 %v2281, %v2439
        %v2442 = vld [vmem:[%s43] sm:$0x1]
        %v2443 = vld [vmem:[%s45] sm:$0x1]
        %2444 = vadd.xlane.f32.xlu0 %v2440
        %v2445 = vpop.xlane.xlu0 %2444
        %2446 = vadd.xlane.f32.xlu0 %v2441
        %v2447 = vpop.xlane.xlu0 %2446
        %v2448 = vmul.f32 %v2445, %v1455
        %v2449 = vmul.f32 %v2447, %v1455
        %v2450 = vsub.f32 %v2440, %v2448
        %v2451 = vsub.f32 %v2441, %v2449
        %v2452 = vmul.f32 %v2450, %v2450
        %v2453 = vmul.f32 %v2451, %v2451
        %2454 = vadd.xlane.f32.xlu0 %v2452
        %v2455 = vpop.xlane.xlu0 %2454
        %2456 = vadd.xlane.f32.xlu0 %v2453
        %v2457 = vpop.xlane.xlu0 %2456
        %v2458 = vmul.f32 %v2455, %v1455
        %v2459 = vmul.f32 %v2457, %v1455
        %v2460 = vadd.f32 %v2458, 1e-05
        %v2461 = vadd.f32 %v2459, 1e-05
        %v2462 = vrsqrt.pop %v2460
        %v2463 = vmul.f32 %v2462, %v2460
        %v2464 = vmul.f32 %v2463, %v2462
        %v2465 = vmul.f32 0.5, %v2464
        %v2466 = vsub.f32 1.5, %v2465
        %v2467 = vmul.f32 %v2462, %v2466
        %vm2468 = vweird.f32 %v2460
        %vm2469 = vweird.f32 %v2462
        %vm2470 = vmor %vm2468, %vm2469
        %v2471 = vsel %vm2470, %v2462, %v2467
        %v2472 = vrsqrt.pop %v2461
        %v2473 = vmul.f32 %v2472, %v2461
        %v2474 = vmul.f32 %v2473, %v2472
        %v2475 = vmul.f32 0.5, %v2474
        %v2476 = vsub.f32 1.5, %v2475
        %v2477 = vmul.f32 %v2472, %v2476
        %vm2478 = vweird.f32 %v2461
        %vm2479 = vweird.f32 %v2472
        %vm2480 = vmor %vm2478, %vm2479
        %v2481 = vsel %vm2480, %v2472, %v2477
        %v2482 = vmul.f32 %v2450, %v2471
        %v2483 = vmul.f32 %v2451, %v2481
        %v2485 = vperm.slane %v2442, 0
        %v2487 = vmul.f32 %v2482, %v2485
        %v2488 = vmul.f32 %v2483, %v2485
        %v2490 = vperm.slane %v2443, 0
        %v2492 = vadd.f32 %v2487, %v2490
        %v2493 = vadd.f32 %v2488, %v2490
        %v2494 = vpack.c.bf16 %v2493, %v2492
        %v2495 = vld [vmem:[#allocation29] sm:$0xff]
        %v2496 = vld [vmem:[#allocation29 + $0x8] sm:$0xff]
        %v2497 = vld [vmem:[#allocation29 + $0x10] sm:$0xff]
        %v2498 = vld [vmem:[#allocation29 + $0x18] sm:$0xff]
        %v2499 = vld [vmem:[#allocation29 + $0x20] sm:$0xff]
        %v2500 = vld [vmem:[#allocation29 + $0x28] sm:$0xff]
        %v2501 = vld [vmem:[#allocation29 + $0x30] sm:$0xff]
        %v2502 = vld [vmem:[#allocation29 + $0x38] sm:$0xff]
        %v2503 = vld [vmem:[#allocation29 + $0x40] sm:$0xff]
        %v2504 = vld [vmem:[#allocation29 + $0x48] sm:$0xff]
        %v2505 = vld [vmem:[#allocation29 + $0x50] sm:$0xff]
        %v2506 = vld [vmem:[#allocation29 + $0x58] sm:$0xff]
        %v2507 = vld [vmem:[#allocation29 + $0x60] sm:$0xff]
        %v2508 = vld [vmem:[#allocation29 + $0x68] sm:$0xff]
        %v2509 = vld [vmem:[#allocation29 + $0x70] sm:$0xff]
        %v2510 = vld [vmem:[#allocation29 + $0x78] sm:$0xff]
        %v2511 = vld [vmem:[#allocation31] sm:$0x3]
        %v2513 = vperm.slane %v2511, 0
        %v2514 = vperm.slane %v2511, 1
        %v2533 = vunpack.c.l.b16 %v2495
        %v2534 = vunpack.c.h.b16 %v2495
        %v2535 = vunpack.c.l.b16 %v2496
        %v2536 = vunpack.c.h.b16 %v2496
        %v2537 = vunpack.c.l.b16 %v2497
        %v2538 = vunpack.c.h.b16 %v2497
        %v2539 = vunpack.c.l.b16 %v2498
        %v2540 = vunpack.c.h.b16 %v2498
        %v2541 = vunpack.c.l.b16 %v2499
        %v2542 = vunpack.c.h.b16 %v2499
        %v2543 = vunpack.c.l.b16 %v2500
        %v2544 = vunpack.c.h.b16 %v2500
        %v2545 = vunpack.c.l.b16 %v2501
        %v2546 = vunpack.c.h.b16 %v2501
        %v2547 = vunpack.c.l.b16 %v2502
        %v2548 = vunpack.c.h.b16 %v2502
        %v2549 = vunpack.c.l.b16 %v2503
        %v2550 = vunpack.c.h.b16 %v2503
        %v2551 = vunpack.c.l.b16 %v2504
        %v2552 = vunpack.c.h.b16 %v2504
        %v2553 = vunpack.c.l.b16 %v2505
        %v2554 = vunpack.c.h.b16 %v2505
        %v2555 = vunpack.c.l.b16 %v2506
        %v2556 = vunpack.c.h.b16 %v2506
        %v2557 = vunpack.c.l.b16 %v2507
        %v2558 = vunpack.c.h.b16 %v2507
        %v2559 = vunpack.c.l.b16 %v2508
        %v2560 = vunpack.c.h.b16 %v2508
        %v2561 = vunpack.c.l.b16 %v2509
        %v2562 = vunpack.c.h.b16 %v2509
        %v2563 = vunpack.c.l.b16 %v2510
        %v2564 = vunpack.c.h.b16 %v2510
        %v2565 = vpack.c.b16 %v2535, %v2533
        %v2566 = vpack.c.b16 %v2536, %v2534
        %v2567 = vpack.c.b16 %v2539, %v2537
        %v2568 = vpack.c.b16 %v2540, %v2538
        %v2569 = vpack.c.b16 %v2543, %v2541
        %v2570 = vpack.c.b16 %v2544, %v2542
        %v2571 = vpack.c.b16 %v2547, %v2545
        %v2572 = vpack.c.b16 %v2548, %v2546
        %v2573 = vpack.c.b16 %v2551, %v2549
        %v2574 = vpack.c.b16 %v2552, %v2550
        %v2575 = vpack.c.b16 %v2555, %v2553
        %v2576 = vpack.c.b16 %v2556, %v2554
        %v2577 = vpack.c.b16 %v2559, %v2557
        %v2578 = vpack.c.b16 %v2560, %v2558
        %v2579 = vpack.c.b16 %v2563, %v2561
        %v2580 = vpack.c.b16 %v2564, %v2562
        %2597 = vmatpush.bf16.msra.mxu0 %v2579
        %2598 = vmatpush.bf16.msra.mxu0 %v2577
        %2599 = vmatpush.bf16.msra.mxu0 %v2575
        %2600 = vmatpush.bf16.msra.mxu0 %v2573
        %2601 = vmatpush.bf16.msra.mxu0 %v2571
        %2602 = vmatpush.bf16.msra.mxu0 %v2569
        %2603 = vmatpush.bf16.msra.mxu0 %v2567
        %2604 = vmatpush.bf16.msra.mxu0 %v2565
        %2605 = vmatmul.bf16.gmra.mxu0 %v2494
        %v2606 = vpop.f32.mrf.mxu0
        %v2607 = vadd.f32 %v2513, %v2606
        %v2608 = vpop.f32.mrf.mxu0
        %v2609 = vadd.f32 %v2513, %v2608
        %2610 = vdwg.mxu0
        %2611 = vmatpush.bf16.msra.mxu0 %v2580
        %2612 = vmatpush.bf16.msra.mxu0 %v2578
        %2613 = vmatpush.bf16.msra.mxu0 %v2576
        %2614 = vmatpush.bf16.msra.mxu0 %v2574
        %2615 = vmatpush.bf16.msra.mxu0 %v2572
        %2616 = vmatpush.bf16.msra.mxu0 %v2570
        %2617 = vmatpush.bf16.msra.mxu0 %v2568
        %2618 = vmatpush.bf16.msra.mxu0 %v2566
        %2619 = vmatmul.bf16.gmra.mxu0 %v2494
        %v2620 = vpop.f32.mrf.mxu0
        %v2621 = vadd.f32 %v2514, %v2620
        %v2622 = vpop.f32.mrf.mxu0
        %v2623 = vadd.f32 %v2514, %v2622
        %2624 = vdwg.mxu0
        %v2625 = vmax.f32 %v2607, 0.0
        %v2626 = vmax.f32 %v2621, 0.0
        %v2627 = vmax.f32 %v2609, 0.0
        %v2628 = vmax.f32 %v2623, 0.0
        %v2629 = vpack.c.bf16 %v2627, %v2625
        %v2630 = vpack.c.bf16 %v2628, %v2626
        %v2631 = vld [vmem:[#allocation32] sm:$0xf]
        %v2632 = vld [vmem:[#allocation32 + $0x4] sm:$0xf]
        %v2633 = vld [vmem:[#allocation32 + $0x8] sm:$0xf]
        %v2634 = vld [vmem:[#allocation32 + $0xc] sm:$0xf]
        %v2635 = vld [vmem:[#allocation32 + $0x10] sm:$0xf]
        %v2636 = vld [vmem:[#allocation32 + $0x14] sm:$0xf]
        %v2637 = vld [vmem:[#allocation32 + $0x18] sm:$0xf]
        %v2638 = vld [vmem:[#allocation32 + $0x1c] sm:$0xf]
        %v2639 = vld [vmem:[#allocation32 + $0x20] sm:$0xf]
        %v2640 = vld [vmem:[#allocation32 + $0x24] sm:$0xf]
        %v2641 = vld [vmem:[#allocation32 + $0x28] sm:$0xf]
        %v2642 = vld [vmem:[#allocation32 + $0x2c] sm:$0xf]
        %v2643 = vld [vmem:[#allocation32 + $0x30] sm:$0xf]
        %v2644 = vld [vmem:[#allocation32 + $0x34] sm:$0xf]
        %v2645 = vld [vmem:[#allocation32 + $0x38] sm:$0xf]
        %v2646 = vld [vmem:[#allocation32 + $0x3c] sm:$0xf]
        %v2647 = vld [vmem:[#allocation32 + $0x40] sm:$0xf]
        %v2648 = vld [vmem:[#allocation32 + $0x44] sm:$0xf]
        %v2649 = vld [vmem:[#allocation32 + $0x48] sm:$0xf]
        %v2650 = vld [vmem:[#allocation32 + $0x4c] sm:$0xf]
        %v2651 = vld [vmem:[#allocation32 + $0x50] sm:$0xf]
        %v2652 = vld [vmem:[#allocation32 + $0x54] sm:$0xf]
        %v2653 = vld [vmem:[#allocation32 + $0x58] sm:$0xf]
        %v2654 = vld [vmem:[#allocation32 + $0x5c] sm:$0xf]
        %v2655 = vld [vmem:[#allocation32 + $0x60] sm:$0xf]
        %v2656 = vld [vmem:[#allocation32 + $0x64] sm:$0xf]
        %v2657 = vld [vmem:[#allocation32 + $0x68] sm:$0xf]
        %v2658 = vld [vmem:[#allocation32 + $0x6c] sm:$0xf]
        %v2659 = vld [vmem:[#allocation32 + $0x70] sm:$0xf]
        %v2660 = vld [vmem:[#allocation32 + $0x74] sm:$0xf]
        %v2661 = vld [vmem:[#allocation32 + $0x78] sm:$0xf]
        %v2662 = vld [vmem:[#allocation32 + $0x7c] sm:$0xf]
        %v2663 = vld [vmem:[#allocation34] sm:$0x1]
        %v2665 = vperm.slane %v2663, 0
        %v2699 = vunpack.c.l.b16 %v2631
        %v2700 = vunpack.c.l.b16 %v2632
        %v2701 = vunpack.c.l.b16 %v2633
        %v2702 = vunpack.c.l.b16 %v2634
        %v2703 = vunpack.c.l.b16 %v2635
        %v2704 = vunpack.c.l.b16 %v2636
        %v2705 = vunpack.c.l.b16 %v2637
        %v2706 = vunpack.c.l.b16 %v2638
        %v2707 = vunpack.c.l.b16 %v2639
        %v2708 = vunpack.c.l.b16 %v2640
        %v2709 = vunpack.c.l.b16 %v2641
        %v2710 = vunpack.c.l.b16 %v2642
        %v2711 = vunpack.c.l.b16 %v2643
        %v2712 = vunpack.c.l.b16 %v2644
        %v2713 = vunpack.c.l.b16 %v2645
        %v2714 = vunpack.c.l.b16 %v2646
        %v2715 = vunpack.c.l.b16 %v2647
        %v2716 = vunpack.c.l.b16 %v2648
        %v2717 = vunpack.c.l.b16 %v2649
        %v2718 = vunpack.c.l.b16 %v2650
        %v2719 = vunpack.c.l.b16 %v2651
        %v2720 = vunpack.c.l.b16 %v2652
        %v2721 = vunpack.c.l.b16 %v2653
        %v2722 = vunpack.c.l.b16 %v2654
        %v2723 = vunpack.c.l.b16 %v2655
        %v2724 = vunpack.c.l.b16 %v2656
        %v2725 = vunpack.c.l.b16 %v2657
        %v2726 = vunpack.c.l.b16 %v2658
        %v2727 = vunpack.c.l.b16 %v2659
        %v2728 = vunpack.c.l.b16 %v2660
        %v2729 = vunpack.c.l.b16 %v2661
        %v2730 = vunpack.c.l.b16 %v2662
        %v2731 = vpack.c.b16 %v2700, %v2699
        %v2732 = vpack.c.b16 %v2702, %v2701
        %v2733 = vpack.c.b16 %v2704, %v2703
        %v2734 = vpack.c.b16 %v2706, %v2705
        %v2735 = vpack.c.b16 %v2708, %v2707
        %v2736 = vpack.c.b16 %v2710, %v2709
        %v2737 = vpack.c.b16 %v2712, %v2711
        %v2738 = vpack.c.b16 %v2714, %v2713
        %v2739 = vpack.c.b16 %v2716, %v2715
        %v2740 = vpack.c.b16 %v2718, %v2717
        %v2741 = vpack.c.b16 %v2720, %v2719
        %v2742 = vpack.c.b16 %v2722, %v2721
        %v2743 = vpack.c.b16 %v2724, %v2723
        %v2744 = vpack.c.b16 %v2726, %v2725
        %v2745 = vpack.c.b16 %v2728, %v2727
        %v2746 = vpack.c.b16 %v2730, %v2729
        %2763 = vmatpush.bf16.msra.mxu0 %v2738
        %2764 = vmatpush.bf16.msra.mxu0 %v2737
        %2765 = vmatpush.bf16.msra.mxu0 %v2736
        %2766 = vmatpush.bf16.msra.mxu0 %v2735
        %2767 = vmatpush.bf16.msra.mxu0 %v2734
        %2768 = vmatpush.bf16.msra.mxu0 %v2733
        %2769 = vmatpush.bf16.msra.mxu0 %v2732
        %2770 = vmatpush.bf16.msra.mxu0 %v2731
        %2771 = vmatmul.bf16.gmra.mxu0 %v2629
        %v2772 = vpop.f32.mrf.mxu0
        %v2773 = vadd.f32 %v2665, %v2772
        %v2774 = vpop.f32.mrf.mxu0
        %v2775 = vadd.f32 %v2665, %v2774
        %2776 = vdwg.mxu0
        %2777 = vmatpush.bf16.msra.mxu0 %v2746
        %2778 = vmatpush.bf16.msra.mxu0 %v2745
        %2779 = vmatpush.bf16.msra.mxu0 %v2744
        %2780 = vmatpush.bf16.msra.mxu0 %v2743
        %2781 = vmatpush.bf16.msra.mxu0 %v2742
        %2782 = vmatpush.bf16.msra.mxu0 %v2741
        %2783 = vmatpush.bf16.msra.mxu0 %v2740
        %2784 = vmatpush.bf16.msra.mxu0 %v2739
        %2785 = vmatmul.bf16.gmra.mxu0 %v2630
        %v2786 = vpop.f32.mrf.mxu0
        %v2787 = vadd.f32 %v2773, %v2786
        %v2788 = vpop.f32.mrf.mxu0
        %v2789 = vadd.f32 %v2775, %v2788
        %2790 = vdwg.mxu0
        %v2791 = vadd.f32 %v2492, %v2787
        %v2792 = vadd.f32 %v2493, %v2789
        %v2793 = vld [vmem:[%s55] sm:$0x1]
        %v2794 = vld [vmem:[%s57] sm:$0x1]
        %2795 = vadd.xlane.f32.xlu0 %v2791
        %v2796 = vpop.xlane.xlu0 %2795
        %2797 = vadd.xlane.f32.xlu0 %v2792
        %v2798 = vpop.xlane.xlu0 %2797
        %v2799 = vmul.f32 %v2796, %v1455
        %v2800 = vmul.f32 %v2798, %v1455
        %v2801 = vsub.f32 %v2791, %v2799
        %v2802 = vsub.f32 %v2792, %v2800
        %v2803 = vmul.f32 %v2801, %v2801
        %v2804 = vmul.f32 %v2802, %v2802
        %2805 = vadd.xlane.f32.xlu0 %v2803
        %v2806 = vpop.xlane.xlu0 %2805
        %2807 = vadd.xlane.f32.xlu0 %v2804
        %v2808 = vpop.xlane.xlu0 %2807
        %v2809 = vmul.f32 %v2806, %v1455
        %v2810 = vmul.f32 %v2808, %v1455
        %v2811 = vadd.f32 %v2809, 1e-05
        %v2812 = vadd.f32 %v2810, 1e-05
        %v2813 = vrsqrt.pop %v2811
        %v2814 = vmul.f32 %v2813, %v2811
        %v2815 = vmul.f32 %v2814, %v2813
        %v2816 = vmul.f32 0.5, %v2815
        %v2817 = vsub.f32 1.5, %v2816
        %v2818 = vmul.f32 %v2813, %v2817
        %vm2819 = vweird.f32 %v2811
        %vm2820 = vweird.f32 %v2813
        %vm2821 = vmor %vm2819, %vm2820
        %v2822 = vsel %vm2821, %v2813, %v2818
        %v2823 = vrsqrt.pop %v2812
        %v2824 = vmul.f32 %v2823, %v2812
        %v2825 = vmul.f32 %v2824, %v2823
        %v2826 = vmul.f32 0.5, %v2825
        %v2827 = vsub.f32 1.5, %v2826
        %v2828 = vmul.f32 %v2823, %v2827
        %vm2829 = vweird.f32 %v2812
        %vm2830 = vweird.f32 %v2823
        %vm2831 = vmor %vm2829, %vm2830
        %v2832 = vsel %vm2831, %v2823, %v2828
        %v2833 = vmul.f32 %v2801, %v2822
        %v2834 = vmul.f32 %v2802, %v2832
        %v2836 = vperm.slane %v2793, 0
        %v2838 = vmul.f32 %v2833, %v2836
        %v2839 = vmul.f32 %v2834, %v2836
        %v2841 = vperm.slane %v2794, 0
        %v2843 = vadd.f32 %v2838, %v2841
        %v2844 = vadd.f32 %v2839, %v2841
        %v2845 = vpack.c.bf16 %v2844, %v2843
        %s2846 = scalar_lea.vmem [#allocation14], 64
        %v2847 = vld [vmem:[%s2846] sm:$0xf]
        %v2848 = vld [vmem:[%s2846 + $0x4] sm:$0xf]
        %v2849 = vld [vmem:[%s2846 + $0x8] sm:$0xf]
        %v2850 = vld [vmem:[%s2846 + $0xc] sm:$0xf]
        %v2851 = vld [vmem:[%s2846 + $0x10] sm:$0xf]
        %v2852 = vld [vmem:[%s2846 + $0x14] sm:$0xf]
        %v2853 = vld [vmem:[%s2846 + $0x18] sm:$0xf]
        %v2854 = vld [vmem:[%s2846 + $0x1c] sm:$0xf]
        %v2855 = vld [vmem:[%s2846 + $0x20] sm:$0xf]
        %v2856 = vld [vmem:[%s2846 + $0x24] sm:$0xf]
        %v2857 = vld [vmem:[%s2846 + $0x28] sm:$0xf]
        %v2858 = vld [vmem:[%s2846 + $0x2c] sm:$0xf]
        %v2859 = vld [vmem:[%s2846 + $0x30] sm:$0xf]
        %v2860 = vld [vmem:[%s2846 + $0x34] sm:$0xf]
        %v2861 = vld [vmem:[%s2846 + $0x38] sm:$0xf]
        %v2862 = vld [vmem:[%s2846 + $0x3c] sm:$0xf]
        %s2863 = scalar_lea.vmem %s17, 1
        %v2864 = vld [vmem:[%s2863] sm:$0x1]
        %v2866 = vperm.slane %v2864, 0
        %v2884 = vunpack.c.l.b16 %v2847
        %v2885 = vunpack.c.l.b16 %v2848
        %v2886 = vunpack.c.l.b16 %v2849
        %v2887 = vunpack.c.l.b16 %v2850
        %v2888 = vunpack.c.l.b16 %v2851
        %v2889 = vunpack.c.l.b16 %v2852
        %v2890 = vunpack.c.l.b16 %v2853
        %v2891 = vunpack.c.l.b16 %v2854
        %v2892 = vunpack.c.l.b16 %v2855
        %v2893 = vunpack.c.l.b16 %v2856
        %v2894 = vunpack.c.l.b16 %v2857
        %v2895 = vunpack.c.l.b16 %v2858
        %v2896 = vunpack.c.l.b16 %v2859
        %v2897 = vunpack.c.l.b16 %v2860
        %v2898 = vunpack.c.l.b16 %v2861
        %v2899 = vunpack.c.l.b16 %v2862
        %v2900 = vpack.c.b16 %v2885, %v2884
        %v2901 = vpack.c.b16 %v2887, %v2886
        %v2902 = vpack.c.b16 %v2889, %v2888
        %v2903 = vpack.c.b16 %v2891, %v2890
        %v2904 = vpack.c.b16 %v2893, %v2892
        %v2905 = vpack.c.b16 %v2895, %v2894
        %v2906 = vpack.c.b16 %v2897, %v2896
        %v2907 = vpack.c.b16 %v2899, %v2898
        %2916 = vmatpush.bf16.msra.mxu0 %v2907
        %2917 = vmatpush.bf16.msra.mxu0 %v2906
        %2918 = vmatpush.bf16.msra.mxu0 %v2905
        %2919 = vmatpush.bf16.msra.mxu0 %v2904
        %2920 = vmatpush.bf16.msra.mxu0 %v2903
        %2921 = vmatpush.bf16.msra.mxu0 %v2902
        %2922 = vmatpush.bf16.msra.mxu0 %v2901
        %2923 = vmatpush.bf16.msra.mxu0 %v2900
        %2924 = vmatmul.bf16.gmra.mxu0 %v2845
        %v2925 = vpop.f32.mrf.mxu0
        %v2926 = vadd.f32 %v2866, %v2925
        %v2927 = vpop.f32.mrf.mxu0
        %v2928 = vadd.f32 %v2866, %v2927
        %2929 = vdwg.mxu0
        %s2930 = scalar_lea.vmem [#allocation16], 64
        %v2931 = vld [vmem:[%s2930] sm:$0xf]
        %v2932 = vld [vmem:[%s2930 + $0x4] sm:$0xf]
        %v2933 = vld [vmem:[%s2930 + $0x8] sm:$0xf]
        %v2934 = vld [vmem:[%s2930 + $0xc] sm:$0xf]
        %v2935 = vld [vmem:[%s2930 + $0x10] sm:$0xf]
        %v2936 = vld [vmem:[%s2930 + $0x14] sm:$0xf]
        %v2937 = vld [vmem:[%s2930 + $0x18] sm:$0xf]
        %v2938 = vld [vmem:[%s2930 + $0x1c] sm:$0xf]
        %v2939 = vld [vmem:[%s2930 + $0x20] sm:$0xf]
        %v2940 = vld [vmem:[%s2930 + $0x24] sm:$0xf]
        %v2941 = vld [vmem:[%s2930 + $0x28] sm:$0xf]
        %v2942 = vld [vmem:[%s2930 + $0x2c] sm:$0xf]
        %v2943 = vld [vmem:[%s2930 + $0x30] sm:$0xf]
        %v2944 = vld [vmem:[%s2930 + $0x34] sm:$0xf]
        %v2945 = vld [vmem:[%s2930 + $0x38] sm:$0xf]
        %v2946 = vld [vmem:[%s2930 + $0x3c] sm:$0xf]
        %s2947 = scalar_lea.vmem [#allocation17], 1
        %v2948 = vld [vmem:[%s2947] sm:$0x1]
        %v2950 = vperm.slane %v2948, 0
        %v2968 = vunpack.c.l.b16 %v2931
        %v2969 = vunpack.c.l.b16 %v2932
        %v2970 = vunpack.c.l.b16 %v2933
        %v2971 = vunpack.c.l.b16 %v2934
        %v2972 = vunpack.c.l.b16 %v2935
        %v2973 = vunpack.c.l.b16 %v2936
        %v2974 = vunpack.c.l.b16 %v2937
        %v2975 = vunpack.c.l.b16 %v2938
        %v2976 = vunpack.c.l.b16 %v2939
        %v2977 = vunpack.c.l.b16 %v2940
        %v2978 = vunpack.c.l.b16 %v2941
        %v2979 = vunpack.c.l.b16 %v2942
        %v2980 = vunpack.c.l.b16 %v2943
        %v2981 = vunpack.c.l.b16 %v2944
        %v2982 = vunpack.c.l.b16 %v2945
        %v2983 = vunpack.c.l.b16 %v2946
        %v2984 = vpack.c.b16 %v2969, %v2968
        %v2985 = vpack.c.b16 %v2971, %v2970
        %v2986 = vpack.c.b16 %v2973, %v2972
        %v2987 = vpack.c.b16 %v2975, %v2974
        %v2988 = vpack.c.b16 %v2977, %v2976
        %v2989 = vpack.c.b16 %v2979, %v2978
        %v2990 = vpack.c.b16 %v2981, %v2980
        %v2991 = vpack.c.b16 %v2983, %v2982
        %3000 = vmatpush.bf16.msra.mxu0 %v2991
        %3001 = vmatpush.bf16.msra.mxu0 %v2990
        %3002 = vmatpush.bf16.msra.mxu0 %v2989
        %3003 = vmatpush.bf16.msra.mxu0 %v2988
        %3004 = vmatpush.bf16.msra.mxu0 %v2987
        %3005 = vmatpush.bf16.msra.mxu0 %v2986
        %3006 = vmatpush.bf16.msra.mxu0 %v2985
        %3007 = vmatpush.bf16.msra.mxu0 %v2984
        %3008 = vmatmul.bf16.gmra.mxu0 %v2845
        %v3009 = vpop.f32.mrf.mxu0
        %v3010 = vadd.f32 %v2950, %v3009
        %v3011 = vpop.f32.mrf.mxu0
        %v3012 = vadd.f32 %v2950, %v3011
        %3013 = vdwg.mxu0
        %s3014 = scalar_lea.vmem [#allocation19], 64
        %v3015 = vld [vmem:[%s3014] sm:$0xf]
        %v3016 = vld [vmem:[%s3014 + $0x4] sm:$0xf]
        %v3017 = vld [vmem:[%s3014 + $0x8] sm:$0xf]
        %v3018 = vld [vmem:[%s3014 + $0xc] sm:$0xf]
        %v3019 = vld [vmem:[%s3014 + $0x10] sm:$0xf]
        %v3020 = vld [vmem:[%s3014 + $0x14] sm:$0xf]
        %v3021 = vld [vmem:[%s3014 + $0x18] sm:$0xf]
        %v3022 = vld [vmem:[%s3014 + $0x1c] sm:$0xf]
        %v3023 = vld [vmem:[%s3014 + $0x20] sm:$0xf]
        %v3024 = vld [vmem:[%s3014 + $0x24] sm:$0xf]
        %v3025 = vld [vmem:[%s3014 + $0x28] sm:$0xf]
        %v3026 = vld [vmem:[%s3014 + $0x2c] sm:$0xf]
        %v3027 = vld [vmem:[%s3014 + $0x30] sm:$0xf]
        %v3028 = vld [vmem:[%s3014 + $0x34] sm:$0xf]
        %v3029 = vld [vmem:[%s3014 + $0x38] sm:$0xf]
        %v3030 = vld [vmem:[%s3014 + $0x3c] sm:$0xf]
        %s3031 = scalar_lea.vmem %s25, 1
        %v3032 = vld [vmem:[%s3031] sm:$0x1]
        %v3034 = vperm.slane %v3032, 0
        %v3052 = vunpack.c.l.b16 %v3015
        %v3053 = vunpack.c.l.b16 %v3016
        %v3054 = vunpack.c.l.b16 %v3017
        %v3055 = vunpack.c.l.b16 %v3018
        %v3056 = vunpack.c.l.b16 %v3019
        %v3057 = vunpack.c.l.b16 %v3020
        %v3058 = vunpack.c.l.b16 %v3021
        %v3059 = vunpack.c.l.b16 %v3022
        %v3060 = vunpack.c.l.b16 %v3023
        %v3061 = vunpack.c.l.b16 %v3024
        %v3062 = vunpack.c.l.b16 %v3025
        %v3063 = vunpack.c.l.b16 %v3026
        %v3064 = vunpack.c.l.b16 %v3027
        %v3065 = vunpack.c.l.b16 %v3028
        %v3066 = vunpack.c.l.b16 %v3029
        %v3067 = vunpack.c.l.b16 %v3030
        %v3068 = vpack.c.b16 %v3053, %v3052
        %v3069 = vpack.c.b16 %v3055, %v3054
        %v3070 = vpack.c.b16 %v3057, %v3056
        %v3071 = vpack.c.b16 %v3059, %v3058
        %v3072 = vpack.c.b16 %v3061, %v3060
        %v3073 = vpack.c.b16 %v3063, %v3062
        %v3074 = vpack.c.b16 %v3065, %v3064
        %v3075 = vpack.c.b16 %v3067, %v3066
        %3084 = vmatpush.bf16.msra.mxu0 %v3075
        %3085 = vmatpush.bf16.msra.mxu0 %v3074
        %3086 = vmatpush.bf16.msra.mxu0 %v3073
        %3087 = vmatpush.bf16.msra.mxu0 %v3072
        %3088 = vmatpush.bf16.msra.mxu0 %v3071
        %3089 = vmatpush.bf16.msra.mxu0 %v3070
        %3090 = vmatpush.bf16.msra.mxu0 %v3069
        %3091 = vmatpush.bf16.msra.mxu0 %v3068
        %3092 = vmatmul.bf16.gmra.mxu0 %v2845
        %v3093 = vpop.f32.mrf.mxu0
        %v3094 = vadd.f32 %v3034, %v3093
        %v3095 = vpop.f32.mrf.mxu0
        %v3096 = vadd.f32 %v3034, %v3095
        %3097 = vdwg.mxu0
        %v3098 = vpack.c.bf16 %v2928, %v2926
        %v3099 = vpack.c.bf16 %v3012, %v3010
        %v3100 = vpack.c.bf16 %v3096, %v3094
        %v3102 = vsel %vm1735, %v3098, 0
        %v3105 = vsel %vm1735, %v3099, 0
        %3107 = vmatpush.bf16.xpose.msra.mxu0 0
        %3108 = vmatpush.bf16.xpose.msra.mxu0 0
        %3109 = vmatpush.bf16.xpose.msra.mxu0 0
        %3110 = vmatpush.bf16.xpose.msra.mxu0 0
        %3111 = vmatpush.bf16.xpose.msra.mxu0 0
        %3112 = vmatpush.bf16.xpose.msra.mxu0 0
        %3113 = vmatpush.bf16.xpose.msra.mxu0 0
        %3114 = vmatpush.bf16.xpose.msra.mxu0 %v3105
        %3115 = vmatmul.bf16.gmra.mxu0 %v3102
        %v3116 = vpop.f32.mrf.mxu0
        %v3117 = vadd.f32 0.0, %v3116
        %v3118 = vpop.f32.mrf.mxu0
        %v3119 = vadd.f32 0.0, %v3118
        %3120 = vdwg.mxu0
        %v3121 = vsel %vm1483, %v3117, -inf
        %v3122 = vsel %vm1484, %v3119, -inf
        %v3123 = vsel %vm1758, %v3121, -inf
        %3124 = vmax.xlane.f32.xlu0 %v3123
        %v3125 = vpop.xlane.xlu0 %3124
        %v3126 = vsel %vm1758, %v3122, -inf
        %3127 = vmax.xlane.f32.xlu0 %v3126
        %v3128 = vpop.xlane.xlu0 %3127
        %v3129 = vsub.f32 %v3121, %v3125
        %v3130 = vsub.f32 %v3122, %v3128
        %v3131 = vmul.f32 %v3129, 1.442695
        %v3132 = vpow.pop %v3131
        %v3133 = vmul.f32 %v3130, 1.442695
        %v3134 = vpow.pop %v3133
        %v3135 = vsel %vm1758, %v3132, 0.0
        %3136 = vadd.xlane.f32.xlu0 %v3135
        %v3137 = vpop.xlane.xlu0 %3136
        %v3138 = vsel %vm1758, %v3134, 0.0
        %3139 = vadd.xlane.f32.xlu0 %v3138
        %v3140 = vpop.xlane.xlu0 %3139
        %v3141 = vrcp.pop %v3137
        %v3142 = vmul.f32 %v3137, %v3141
        %v3143 = vsub.f32 1.0, %v3142
        %v3144 = vmul.f32 %v3141, %v3143
        %v3145 = vadd.f32 %v3141, %v3144
        %vm3146 = vweird.f32 %v3137
        %vm3147 = vweird.f32 %v3141
        %vm3148 = vmor %vm3146, %vm3147
        %v3149 = vsel %vm3148, %v3141, %v3145
        %v3150 = vand.u32 2147483647, %v3137
        %vm3151 = vcmp.eq.f32.partialorder %v3150, 8.507059e+37
        %v3152 = vand.u32 %v3137, 2147483648
        %v3153 = vor.u32 1.1754944e-38, %v3152
        %v3154 = vsel %vm3151, %v3153, %v3149
        %v3155 = vmul.f32 %v3132, %v3154
        %v3156 = vrcp.pop %v3140
        %v3157 = vmul.f32 %v3140, %v3156
        %v3158 = vsub.f32 1.0, %v3157
        %v3159 = vmul.f32 %v3156, %v3158
        %v3160 = vadd.f32 %v3156, %v3159
        %vm3161 = vweird.f32 %v3140
        %vm3162 = vweird.f32 %v3156
        %vm3163 = vmor %vm3161, %vm3162
        %v3164 = vsel %vm3163, %v3156, %v3160
        %v3165 = vand.u32 2147483647, %v3140
        %vm3166 = vcmp.eq.f32.partialorder %v3165, 8.507059e+37
        %v3167 = vand.u32 %v3140, 2147483648
        %v3168 = vor.u32 1.1754944e-38, %v3167
        %v3169 = vsel %vm3166, %v3168, %v3164
        %v3170 = vmul.f32 %v3134, %v3169
        %v3171 = vpack.c.bf16 %v3170, %v3155
        %v3173 = vsel %vm1758, %v3171, 0
        %3175 = vmatpush.bf16.msra.mxu0 0
        %3176 = vmatpush.bf16.msra.mxu0 0
        %3177 = vmatpush.bf16.msra.mxu0 0
        %3178 = vmatpush.bf16.msra.mxu0 0
        %3179 = vmatpush.bf16.msra.mxu0 0
        %3180 = vmatpush.bf16.msra.mxu0 0
        %3181 = vmatpush.bf16.msra.mxu0 0
        %3182 = vmatpush.bf16.msra.mxu0 %v3100
        %3183 = vmatmul.bf16.gmra.mxu0 %v3173
        %v3184 = vpop.f32.mrf.mxu0
        %v3185 = vadd.f32 0.0, %v3184
        %v3186 = vpop.f32.mrf.mxu0
        %v3187 = vadd.f32 0.0, %v3186
        %3188 = vdwg.mxu0
        %3190 = vrot.lane.b32.xlu0 %v3098, 96
        %v3191 = vpop.permute.xlu0 %3190
        %3193 = vrot.lane.b32.xlu0 %v3099, 96
        %v3194 = vpop.permute.xlu0 %3193
        %v3196 = vsel %vm1735, %v3191, 0
        %v3199 = vsel %vm1735, %v3194, 0
        %3201 = vmatpush.bf16.xpose.msra.mxu0 0
        %3202 = vmatpush.bf16.xpose.msra.mxu0 0
        %3203 = vmatpush.bf16.xpose.msra.mxu0 0
        %3204 = vmatpush.bf16.xpose.msra.mxu0 0
        %3205 = vmatpush.bf16.xpose.msra.mxu0 0
        %3206 = vmatpush.bf16.xpose.msra.mxu0 0
        %3207 = vmatpush.bf16.xpose.msra.mxu0 0
        %3208 = vmatpush.bf16.xpose.msra.mxu0 %v3199
        %3209 = vmatmul.bf16.gmra.mxu0 %v3196
        %v3210 = vpop.f32.mrf.mxu0
        %v3211 = vadd.f32 0.0, %v3210
        %v3212 = vpop.f32.mrf.mxu0
        %v3213 = vadd.f32 0.0, %v3212
        %3214 = vdwg.mxu0
        %v3215 = vsel %vm1483, %v3211, -inf
        %v3216 = vsel %vm1484, %v3213, -inf
        %v3217 = vsel %vm1758, %v3215, -inf
        %3218 = vmax.xlane.f32.xlu0 %v3217
        %v3219 = vpop.xlane.xlu0 %3218
        %v3220 = vsel %vm1758, %v3216, -inf
        %3221 = vmax.xlane.f32.xlu0 %v3220
        %v3222 = vpop.xlane.xlu0 %3221
        %v3223 = vsub.f32 %v3215, %v3219
        %v3224 = vsub.f32 %v3216, %v3222
        %v3225 = vmul.f32 %v3223, 1.442695
        %v3226 = vpow.pop %v3225
        %v3227 = vmul.f32 %v3224, 1.442695
        %v3228 = vpow.pop %v3227
        %v3229 = vsel %vm1758, %v3226, 0.0
        %3230 = vadd.xlane.f32.xlu0 %v3229
        %v3231 = vpop.xlane.xlu0 %3230
        %v3232 = vsel %vm1758, %v3228, 0.0
        %3233 = vadd.xlane.f32.xlu0 %v3232
        %v3234 = vpop.xlane.xlu0 %3233
        %v3235 = vrcp.pop %v3231
        %v3236 = vmul.f32 %v3231, %v3235
        %v3237 = vsub.f32 1.0, %v3236
        %v3238 = vmul.f32 %v3235, %v3237
        %v3239 = vadd.f32 %v3235, %v3238
        %vm3240 = vweird.f32 %v3231
        %vm3241 = vweird.f32 %v3235
        %vm3242 = vmor %vm3240, %vm3241
        %v3243 = vsel %vm3242, %v3235, %v3239
        %v3244 = vand.u32 2147483647, %v3231
        %vm3245 = vcmp.eq.f32.partialorder %v3244, 8.507059e+37
        %v3246 = vand.u32 %v3231, 2147483648
        %v3247 = vor.u32 1.1754944e-38, %v3246
        %v3248 = vsel %vm3245, %v3247, %v3243
        %v3249 = vmul.f32 %v3226, %v3248
        %v3250 = vrcp.pop %v3234
        %v3251 = vmul.f32 %v3234, %v3250
        %v3252 = vsub.f32 1.0, %v3251
        %v3253 = vmul.f32 %v3250, %v3252
        %v3254 = vadd.f32 %v3250, %v3253
        %vm3255 = vweird.f32 %v3234
        %vm3256 = vweird.f32 %v3250
        %vm3257 = vmor %vm3255, %vm3256
        %v3258 = vsel %vm3257, %v3250, %v3254
        %v3259 = vand.u32 2147483647, %v3234
        %vm3260 = vcmp.eq.f32.partialorder %v3259, 8.507059e+37
        %v3261 = vand.u32 %v3234, 2147483648
        %v3262 = vor.u32 1.1754944e-38, %v3261
        %v3263 = vsel %vm3260, %v3262, %v3258
        %v3264 = vmul.f32 %v3228, %v3263
        %v3265 = vpack.c.bf16 %v3264, %v3249
        %3267 = vrot.lane.b32.xlu0 %v3100, 96
        %v3268 = vpop.permute.xlu0 %3267
        %v3271 = vsel %vm1758, %v3265, 0
        %3273 = vmatpush.bf16.msra.mxu0 0
        %3274 = vmatpush.bf16.msra.mxu0 0
        %3275 = vmatpush.bf16.msra.mxu0 0
        %3276 = vmatpush.bf16.msra.mxu0 0
        %3277 = vmatpush.bf16.msra.mxu0 0
        %3278 = vmatpush.bf16.msra.mxu0 0
        %3279 = vmatpush.bf16.msra.mxu0 0
        %3280 = vmatpush.bf16.msra.mxu0 %v3268
        %3281 = vmatmul.bf16.gmra.mxu0 %v3271
        %v3282 = vpop.f32.mrf.mxu0
        %v3283 = vadd.f32 0.0, %v3282
        %v3284 = vpop.f32.mrf.mxu0
        %v3285 = vadd.f32 0.0, %v3284
        %3286 = vdwg.mxu0
        %3287 = vrot.lane.b32.xlu0 %v3098, 64
        %v3288 = vpop.permute.xlu0 %3287
        %3289 = vrot.lane.b32.xlu0 %v3099, 64
        %v3290 = vpop.permute.xlu0 %3289
        %v3292 = vsel %vm1735, %v3288, 0
        %v3295 = vsel %vm1735, %v3290, 0
        %3297 = vmatpush.bf16.xpose.msra.mxu0 0
        %3298 = vmatpush.bf16.xpose.msra.mxu0 0
        %3299 = vmatpush.bf16.xpose.msra.mxu0 0
        %3300 = vmatpush.bf16.xpose.msra.mxu0 0
        %3301 = vmatpush.bf16.xpose.msra.mxu0 0
        %3302 = vmatpush.bf16.xpose.msra.mxu0 0
        %3303 = vmatpush.bf16.xpose.msra.mxu0 0
        %3304 = vmatpush.bf16.xpose.msra.mxu0 %v3295
        %3305 = vmatmul.bf16.gmra.mxu0 %v3292
        %v3306 = vpop.f32.mrf.mxu0
        %v3307 = vadd.f32 0.0, %v3306
        %v3308 = vpop.f32.mrf.mxu0
        %v3309 = vadd.f32 0.0, %v3308
        %3310 = vdwg.mxu0
        %v3311 = vsel %vm1483, %v3307, -inf
        %v3312 = vsel %vm1484, %v3309, -inf
        %v3313 = vsel %vm1758, %v3311, -inf
        %3314 = vmax.xlane.f32.xlu0 %v3313
        %v3315 = vpop.xlane.xlu0 %3314
        %v3316 = vsel %vm1758, %v3312, -inf
        %3317 = vmax.xlane.f32.xlu0 %v3316
        %v3318 = vpop.xlane.xlu0 %3317
        %v3319 = vsub.f32 %v3311, %v3315
        %v3320 = vsub.f32 %v3312, %v3318
        %v3321 = vmul.f32 %v3319, 1.442695
        %v3322 = vpow.pop %v3321
        %v3323 = vmul.f32 %v3320, 1.442695
        %v3324 = vpow.pop %v3323
        %v3325 = vsel %vm1758, %v3322, 0.0
        %3326 = vadd.xlane.f32.xlu0 %v3325
        %v3327 = vpop.xlane.xlu0 %3326
        %v3328 = vsel %vm1758, %v3324, 0.0
        %3329 = vadd.xlane.f32.xlu0 %v3328
        %v3330 = vpop.xlane.xlu0 %3329
        %v3331 = vrcp.pop %v3327
        %v3332 = vmul.f32 %v3327, %v3331
        %v3333 = vsub.f32 1.0, %v3332
        %v3334 = vmul.f32 %v3331, %v3333
        %v3335 = vadd.f32 %v3331, %v3334
        %vm3336 = vweird.f32 %v3327
        %vm3337 = vweird.f32 %v3331
        %vm3338 = vmor %vm3336, %vm3337
        %v3339 = vsel %vm3338, %v3331, %v3335
        %v3340 = vand.u32 2147483647, %v3327
        %vm3341 = vcmp.eq.f32.partialorder %v3340, 8.507059e+37
        %v3342 = vand.u32 %v3327, 2147483648
        %v3343 = vor.u32 1.1754944e-38, %v3342
        %v3344 = vsel %vm3341, %v3343, %v3339
        %v3345 = vmul.f32 %v3322, %v3344
        %v3346 = vrcp.pop %v3330
        %v3347 = vmul.f32 %v3330, %v3346
        %v3348 = vsub.f32 1.0, %v3347
        %v3349 = vmul.f32 %v3346, %v3348
        %v3350 = vadd.f32 %v3346, %v3349
        %vm3351 = vweird.f32 %v3330
        %vm3352 = vweird.f32 %v3346
        %vm3353 = vmor %vm3351, %vm3352
        %v3354 = vsel %vm3353, %v3346, %v3350
        %v3355 = vand.u32 2147483647, %v3330
        %vm3356 = vcmp.eq.f32.partialorder %v3355, 8.507059e+37
        %v3357 = vand.u32 %v3330, 2147483648
        %v3358 = vor.u32 1.1754944e-38, %v3357
        %v3359 = vsel %vm3356, %v3358, %v3354
        %v3360 = vmul.f32 %v3324, %v3359
        %v3361 = vpack.c.bf16 %v3360, %v3345
        %3362 = vrot.lane.b32.xlu0 %v3100, 64
        %v3363 = vpop.permute.xlu0 %3362
        %v3366 = vsel %vm1758, %v3361, 0
        %3368 = vmatpush.bf16.msra.mxu0 0
        %3369 = vmatpush.bf16.msra.mxu0 0
        %3370 = vmatpush.bf16.msra.mxu0 0
        %3371 = vmatpush.bf16.msra.mxu0 0
        %3372 = vmatpush.bf16.msra.mxu0 0
        %3373 = vmatpush.bf16.msra.mxu0 0
        %3374 = vmatpush.bf16.msra.mxu0 0
        %3375 = vmatpush.bf16.msra.mxu0 %v3363
        %3376 = vmatmul.bf16.gmra.mxu0 %v3366
        %v3377 = vpop.f32.mrf.mxu0
        %v3378 = vadd.f32 0.0, %v3377
        %v3379 = vpop.f32.mrf.mxu0
        %v3380 = vadd.f32 0.0, %v3379
        %3381 = vdwg.mxu0
        %3382 = vrot.lane.b32.xlu0 %v3098, 32
        %v3383 = vpop.permute.xlu0 %3382
        %3384 = vrot.lane.b32.xlu0 %v3099, 32
        %v3385 = vpop.permute.xlu0 %3384
        %v3387 = vsel %vm1735, %v3383, 0
        %v3390 = vsel %vm1735, %v3385, 0
        %3392 = vmatpush.bf16.xpose.msra.mxu0 0
        %3393 = vmatpush.bf16.xpose.msra.mxu0 0
        %3394 = vmatpush.bf16.xpose.msra.mxu0 0
        %3395 = vmatpush.bf16.xpose.msra.mxu0 0
        %3396 = vmatpush.bf16.xpose.msra.mxu0 0
        %3397 = vmatpush.bf16.xpose.msra.mxu0 0
        %3398 = vmatpush.bf16.xpose.msra.mxu0 0
        %3399 = vmatpush.bf16.xpose.msra.mxu0 %v3390
        %3400 = vmatmul.bf16.gmra.mxu0 %v3387
        %v3401 = vpop.f32.mrf.mxu0
        %v3402 = vadd.f32 0.0, %v3401
        %v3403 = vpop.f32.mrf.mxu0
        %v3404 = vadd.f32 0.0, %v3403
        %3405 = vdwg.mxu0
        %v3406 = vsel %vm1483, %v3402, -inf
        %v3407 = vsel %vm1484, %v3404, -inf
        %v3408 = vsel %vm1758, %v3406, -inf
        %3409 = vmax.xlane.f32.xlu0 %v3408
        %v3410 = vpop.xlane.xlu0 %3409
        %v3411 = vsel %vm1758, %v3407, -inf
        %3412 = vmax.xlane.f32.xlu0 %v3411
        %v3413 = vpop.xlane.xlu0 %3412
        %v3414 = vsub.f32 %v3406, %v3410
        %v3415 = vsub.f32 %v3407, %v3413
        %v3416 = vmul.f32 %v3414, 1.442695
        %v3417 = vpow.pop %v3416
        %v3418 = vmul.f32 %v3415, 1.442695
        %v3419 = vpow.pop %v3418
        %v3420 = vsel %vm1758, %v3417, 0.0
        %3421 = vadd.xlane.f32.xlu0 %v3420
        %v3422 = vpop.xlane.xlu0 %3421
        %v3423 = vsel %vm1758, %v3419, 0.0
        %3424 = vadd.xlane.f32.xlu0 %v3423
        %v3425 = vpop.xlane.xlu0 %3424
        %v3426 = vrcp.pop %v3422
        %v3427 = vmul.f32 %v3422, %v3426
        %v3428 = vsub.f32 1.0, %v3427
        %v3429 = vmul.f32 %v3426, %v3428
        %v3430 = vadd.f32 %v3426, %v3429
        %vm3431 = vweird.f32 %v3422
        %vm3432 = vweird.f32 %v3426
        %vm3433 = vmor %vm3431, %vm3432
        %v3434 = vsel %vm3433, %v3426, %v3430
        %v3435 = vand.u32 2147483647, %v3422
        %vm3436 = vcmp.eq.f32.partialorder %v3435, 8.507059e+37
        %v3437 = vand.u32 %v3422, 2147483648
        %v3438 = vor.u32 1.1754944e-38, %v3437
        %v3439 = vsel %vm3436, %v3438, %v3434
        %v3440 = vmul.f32 %v3417, %v3439
        %v3441 = vrcp.pop %v3425
        %v3442 = vmul.f32 %v3425, %v3441
        %v3443 = vsub.f32 1.0, %v3442
        %v3444 = vmul.f32 %v3441, %v3443
        %v3445 = vadd.f32 %v3441, %v3444
        %vm3446 = vweird.f32 %v3425
        %vm3447 = vweird.f32 %v3441
        %vm3448 = vmor %vm3446, %vm3447
        %v3449 = vsel %vm3448, %v3441, %v3445
        %v3450 = vand.u32 2147483647, %v3425
        %vm3451 = vcmp.eq.f32.partialorder %v3450, 8.507059e+37
        %v3452 = vand.u32 %v3425, 2147483648
        %v3453 = vor.u32 1.1754944e-38, %v3452
        %v3454 = vsel %vm3451, %v3453, %v3449
        %v3455 = vmul.f32 %v3419, %v3454
        %v3456 = vpack.c.bf16 %v3455, %v3440
        %3457 = vrot.lane.b32.xlu0 %v3100, 32
        %v3458 = vpop.permute.xlu0 %3457
        %v3461 = vsel %vm1758, %v3456, 0
        %3463 = vmatpush.bf16.msra.mxu0 0
        %3464 = vmatpush.bf16.msra.mxu0 0
        %3465 = vmatpush.bf16.msra.mxu0 0
        %3466 = vmatpush.bf16.msra.mxu0 0
        %3467 = vmatpush.bf16.msra.mxu0 0
        %3468 = vmatpush.bf16.msra.mxu0 0
        %3469 = vmatpush.bf16.msra.mxu0 0
        %3470 = vmatpush.bf16.msra.mxu0 %v3458
        %3471 = vmatmul.bf16.gmra.mxu0 %v3461
        %v3472 = vpop.f32.mrf.mxu0
        %v3473 = vadd.f32 0.0, %v3472
        %v3474 = vpop.f32.mrf.mxu0
        %v3475 = vadd.f32 0.0, %v3474
        %3476 = vdwg.mxu0
        %3479 = vrot.lane.b32.xlu0 %v3283, 32
        %v3480 = vpop.permute.xlu0 %3479
        %3481 = vrot.lane.b32.xlu0 %v3285, 32
        %v3482 = vpop.permute.xlu0 %3481
        %3487 = vrot.lane.b32.xlu0 %v3378, 64
        %v3488 = vpop.permute.xlu0 %3487
        %3489 = vrot.lane.b32.xlu0 %v3380, 64
        %v3490 = vpop.permute.xlu0 %3489
        %3495 = vrot.lane.b32.xlu0 %v3473, 96
        %v3496 = vpop.permute.xlu0 %3495
        %3497 = vrot.lane.b32.xlu0 %v3475, 96
        %v3498 = vpop.permute.xlu0 %3497
        %v3501 = vsel %vm1735, %v3185, %v3480
        %v3502 = vsel %vm1735, %v3187, %v3482
        %v3503 = vsel %vm2139, %v3501, %v3488
        %v3504 = vsel %vm2139, %v3502, %v3490
        %v3505 = vsel %vm2142, %v3503, %v3496
        %v3506 = vsel %vm2142, %v3504, %v3498
        %v3507 = vpack.c.bf16 %v3506, %v3505
        %s3508 = scalar_lea.vmem [#allocation20], 64
        %v3509 = vld [vmem:[%s3508] sm:$0xf]
        %v3510 = vld [vmem:[%s3508 + $0x4] sm:$0xf]
        %v3511 = vld [vmem:[%s3508 + $0x8] sm:$0xf]
        %v3512 = vld [vmem:[%s3508 + $0xc] sm:$0xf]
        %v3513 = vld [vmem:[%s3508 + $0x10] sm:$0xf]
        %v3514 = vld [vmem:[%s3508 + $0x14] sm:$0xf]
        %v3515 = vld [vmem:[%s3508 + $0x18] sm:$0xf]
        %v3516 = vld [vmem:[%s3508 + $0x1c] sm:$0xf]
        %v3517 = vld [vmem:[%s3508 + $0x20] sm:$0xf]
        %v3518 = vld [vmem:[%s3508 + $0x24] sm:$0xf]
        %v3519 = vld [vmem:[%s3508 + $0x28] sm:$0xf]
        %v3520 = vld [vmem:[%s3508 + $0x2c] sm:$0xf]
        %v3521 = vld [vmem:[%s3508 + $0x30] sm:$0xf]
        %v3522 = vld [vmem:[%s3508 + $0x34] sm:$0xf]
        %v3523 = vld [vmem:[%s3508 + $0x38] sm:$0xf]
        %v3524 = vld [vmem:[%s3508 + $0x3c] sm:$0xf]
        %s3525 = scalar_lea.vmem [#allocation22], 1
        %v3526 = vld [vmem:[%s3525] sm:$0x1]
        %v3528 = vperm.slane %v3526, 0
        %v3546 = vunpack.c.l.b16 %v3509
        %v3547 = vunpack.c.l.b16 %v3510
        %v3548 = vunpack.c.l.b16 %v3511
        %v3549 = vunpack.c.l.b16 %v3512
        %v3550 = vunpack.c.l.b16 %v3513
        %v3551 = vunpack.c.l.b16 %v3514
        %v3552 = vunpack.c.l.b16 %v3515
        %v3553 = vunpack.c.l.b16 %v3516
        %v3554 = vunpack.c.l.b16 %v3517
        %v3555 = vunpack.c.l.b16 %v3518
        %v3556 = vunpack.c.l.b16 %v3519
        %v3557 = vunpack.c.l.b16 %v3520
        %v3558 = vunpack.c.l.b16 %v3521
        %v3559 = vunpack.c.l.b16 %v3522
        %v3560 = vunpack.c.l.b16 %v3523
        %v3561 = vunpack.c.l.b16 %v3524
        %v3562 = vpack.c.b16 %v3547, %v3546
        %v3563 = vpack.c.b16 %v3549, %v3548
        %v3564 = vpack.c.b16 %v3551, %v3550
        %v3565 = vpack.c.b16 %v3553, %v3552
        %v3566 = vpack.c.b16 %v3555, %v3554
        %v3567 = vpack.c.b16 %v3557, %v3556
        %v3568 = vpack.c.b16 %v3559, %v3558
        %v3569 = vpack.c.b16 %v3561, %v3560
        %3578 = vmatpush.bf16.msra.mxu0 %v3569
        %3579 = vmatpush.bf16.msra.mxu0 %v3568
        %3580 = vmatpush.bf16.msra.mxu0 %v3567
        %3581 = vmatpush.bf16.msra.mxu0 %v3566
        %3582 = vmatpush.bf16.msra.mxu0 %v3565
        %3583 = vmatpush.bf16.msra.mxu0 %v3564
        %3584 = vmatpush.bf16.msra.mxu0 %v3563
        %3585 = vmatpush.bf16.msra.mxu0 %v3562
        %3586 = vmatmul.bf16.gmra.mxu0 %v3507
        %v3587 = vpop.f32.mrf.mxu0
        %v3588 = vadd.f32 %v3528, %v3587
        %v3589 = vpop.f32.mrf.mxu0
        %v3590 = vadd.f32 %v3528, %v3589
        %3591 = vdwg.mxu0
        %v3592 = vadd.f32 %v2843, %v3588
        %v3593 = vadd.f32 %v2844, %v3590
        %s3594 = scalar_lea.vmem %s31, 1
        %v3595 = vld [vmem:[%s3594] sm:$0x1]
        %s3596 = scalar_lea.vmem %s33, 1
        %v3597 = vld [vmem:[%s3596] sm:$0x1]
        %3598 = vadd.xlane.f32.xlu0 %v3592
        %v3599 = vpop.xlane.xlu0 %3598
        %3600 = vadd.xlane.f32.xlu0 %v3593
        %v3601 = vpop.xlane.xlu0 %3600
        %v3602 = vmul.f32 %v3599, %v1455
        %v3603 = vmul.f32 %v3601, %v1455
        %v3604 = vsub.f32 %v3592, %v3602
        %v3605 = vsub.f32 %v3593, %v3603
        %v3606 = vmul.f32 %v3604, %v3604
        %v3607 = vmul.f32 %v3605, %v3605
        %3608 = vadd.xlane.f32.xlu0 %v3606
        %v3609 = vpop.xlane.xlu0 %3608
        %3610 = vadd.xlane.f32.xlu0 %v3607
        %v3611 = vpop.xlane.xlu0 %3610
        %v3612 = vmul.f32 %v3609, %v1455
        %v3613 = vmul.f32 %v3611, %v1455
        %v3614 = vadd.f32 %v3612, 1e-05
        %v3615 = vadd.f32 %v3613, 1e-05
        %v3616 = vrsqrt.pop %v3614
        %v3617 = vmul.f32 %v3616, %v3614
        %v3618 = vmul.f32 %v3617, %v3616
        %v3619 = vmul.f32 0.5, %v3618
        %v3620 = vsub.f32 1.5, %v3619
        %v3621 = vmul.f32 %v3616, %v3620
        %vm3622 = vweird.f32 %v3614
        %vm3623 = vweird.f32 %v3616
        %vm3624 = vmor %vm3622, %vm3623
        %v3625 = vsel %vm3624, %v3616, %v3621
        %v3626 = vrsqrt.pop %v3615
        %v3627 = vmul.f32 %v3626, %v3615
        %v3628 = vmul.f32 %v3627, %v3626
        %v3629 = vmul.f32 0.5, %v3628
        %v3630 = vsub.f32 1.5, %v3629
        %v3631 = vmul.f32 %v3626, %v3630
        %vm3632 = vweird.f32 %v3615
        %vm3633 = vweird.f32 %v3626
        %vm3634 = vmor %vm3632, %vm3633
        %v3635 = vsel %vm3634, %v3626, %v3631
        %v3636 = vmul.f32 %v3604, %v3625
        %v3637 = vmul.f32 %v3605, %v3635
        %v3639 = vperm.slane %v3595, 0
        %v3641 = vmul.f32 %v3636, %v3639
        %v3642 = vmul.f32 %v3637, %v3639
        %v3644 = vperm.slane %v3597, 0
        %v3646 = vadd.f32 %v3641, %v3644
        %v3647 = vadd.f32 %v3642, %v3644
        %s3648 = scalar_lea.vmem [#allocation23], 64
        %v3649 = vld [vmem:[%s3648] sm:$0xf]
        %v3650 = vld [vmem:[%s3648 + $0x4] sm:$0xf]
        %v3651 = vld [vmem:[%s3648 + $0x8] sm:$0xf]
        %v3652 = vld [vmem:[%s3648 + $0xc] sm:$0xf]
        %v3653 = vld [vmem:[%s3648 + $0x10] sm:$0xf]
        %v3654 = vld [vmem:[%s3648 + $0x14] sm:$0xf]
        %v3655 = vld [vmem:[%s3648 + $0x18] sm:$0xf]
        %v3656 = vld [vmem:[%s3648 + $0x1c] sm:$0xf]
        %v3657 = vld [vmem:[%s3648 + $0x20] sm:$0xf]
        %v3658 = vld [vmem:[%s3648 + $0x24] sm:$0xf]
        %v3659 = vld [vmem:[%s3648 + $0x28] sm:$0xf]
        %v3660 = vld [vmem:[%s3648 + $0x2c] sm:$0xf]
        %v3661 = vld [vmem:[%s3648 + $0x30] sm:$0xf]
        %v3662 = vld [vmem:[%s3648 + $0x34] sm:$0xf]
        %v3663 = vld [vmem:[%s3648 + $0x38] sm:$0xf]
        %v3664 = vld [vmem:[%s3648 + $0x3c] sm:$0xf]
        %s3665 = scalar_lea.vmem [#allocation25], 1
        %v3666 = vld [vmem:[%s3665] sm:$0x1]
        %s3667 = scalar_lea.vmem [#allocation26], 64
        %v3668 = vld [vmem:[%s3667] sm:$0xf]
        %v3669 = vld [vmem:[%s3667 + $0x4] sm:$0xf]
        %v3670 = vld [vmem:[%s3667 + $0x8] sm:$0xf]
        %v3671 = vld [vmem:[%s3667 + $0xc] sm:$0xf]
        %v3672 = vld [vmem:[%s3667 + $0x10] sm:$0xf]
        %v3673 = vld [vmem:[%s3667 + $0x14] sm:$0xf]
        %v3674 = vld [vmem:[%s3667 + $0x18] sm:$0xf]
        %v3675 = vld [vmem:[%s3667 + $0x1c] sm:$0xf]
        %v3676 = vld [vmem:[%s3667 + $0x20] sm:$0xf]
        %v3677 = vld [vmem:[%s3667 + $0x24] sm:$0xf]
        %v3678 = vld [vmem:[%s3667 + $0x28] sm:$0xf]
        %v3679 = vld [vmem:[%s3667 + $0x2c] sm:$0xf]
        %v3680 = vld [vmem:[%s3667 + $0x30] sm:$0xf]
        %v3681 = vld [vmem:[%s3667 + $0x34] sm:$0xf]
        %v3682 = vld [vmem:[%s3667 + $0x38] sm:$0xf]
        %v3683 = vld [vmem:[%s3667 + $0x3c] sm:$0xf]
        %s3684 = scalar_lea.vmem [#allocation28], 1
        %v3685 = vld [vmem:[%s3684] sm:$0x1]
        %v3702 = vunpack.c.l.b16 %v3649
        %v3703 = vunpack.c.l.b16 %v3650
        %v3704 = vunpack.c.l.b16 %v3651
        %v3705 = vunpack.c.l.b16 %v3652
        %v3706 = vunpack.c.l.b16 %v3653
        %v3707 = vunpack.c.l.b16 %v3654
        %v3708 = vunpack.c.l.b16 %v3655
        %v3709 = vunpack.c.l.b16 %v3656
        %v3710 = vunpack.c.l.b16 %v3657
        %v3711 = vunpack.c.l.b16 %v3658
        %v3712 = vunpack.c.l.b16 %v3659
        %v3713 = vunpack.c.l.b16 %v3660
        %v3714 = vunpack.c.l.b16 %v3661
        %v3715 = vunpack.c.l.b16 %v3662
        %v3716 = vunpack.c.l.b16 %v3663
        %v3717 = vunpack.c.l.b16 %v3664
        %v3718 = vpack.c.b16 %v3703, %v3702
        %v3719 = vpack.c.b16 %v3705, %v3704
        %v3720 = vpack.c.b16 %v3707, %v3706
        %v3721 = vpack.c.b16 %v3709, %v3708
        %v3722 = vpack.c.b16 %v3711, %v3710
        %v3723 = vpack.c.b16 %v3713, %v3712
        %v3724 = vpack.c.b16 %v3715, %v3714
        %v3725 = vpack.c.b16 %v3717, %v3716
        %3734 = vmatpush.bf16.msra.mxu0 %v3725
        %3735 = vmatpush.bf16.msra.mxu0 %v3724
        %3736 = vmatpush.bf16.msra.mxu0 %v3723
        %3737 = vmatpush.bf16.msra.mxu0 %v3722
        %3738 = vmatpush.bf16.msra.mxu0 %v3721
        %3739 = vmatpush.bf16.msra.mxu0 %v3720
        %3740 = vmatpush.bf16.msra.mxu0 %v3719
        %3741 = vmatpush.bf16.msra.mxu0 %v3718
        %3742 = vmatmul.bf16.gmra.mxu0 %v1285
        %v3743 = vpop.f32.mrf.mxu0
        %v3744 = vadd.f32 %v3666, %v3743
        %v3745 = vpop.f32.mrf.mxu0
        %3746 = vdwg.mxu0
        %v3747 = vpack.c.bf16 %v3744, %v3744
        %v3764 = vunpack.c.l.b16 %v3668
        %v3765 = vunpack.c.l.b16 %v3669
        %v3766 = vunpack.c.l.b16 %v3670
        %v3767 = vunpack.c.l.b16 %v3671
        %v3768 = vunpack.c.l.b16 %v3672
        %v3769 = vunpack.c.l.b16 %v3673
        %v3770 = vunpack.c.l.b16 %v3674
        %v3771 = vunpack.c.l.b16 %v3675
        %v3772 = vunpack.c.l.b16 %v3676
        %v3773 = vunpack.c.l.b16 %v3677
        %v3774 = vunpack.c.l.b16 %v3678
        %v3775 = vunpack.c.l.b16 %v3679
        %v3776 = vunpack.c.l.b16 %v3680
        %v3777 = vunpack.c.l.b16 %v3681
        %v3778 = vunpack.c.l.b16 %v3682
        %v3779 = vunpack.c.l.b16 %v3683
        %v3780 = vpack.c.b16 %v3765, %v3764
        %v3781 = vpack.c.b16 %v3767, %v3766
        %v3782 = vpack.c.b16 %v3769, %v3768
        %v3783 = vpack.c.b16 %v3771, %v3770
        %v3784 = vpack.c.b16 %v3773, %v3772
        %v3785 = vpack.c.b16 %v3775, %v3774
        %v3786 = vpack.c.b16 %v3777, %v3776
        %v3787 = vpack.c.b16 %v3779, %v3778
        %3796 = vmatpush.bf16.msra.mxu0 %v3787
        %3797 = vmatpush.bf16.msra.mxu0 %v3786
        %3798 = vmatpush.bf16.msra.mxu0 %v3785
        %3799 = vmatpush.bf16.msra.mxu0 %v3784
        %3800 = vmatpush.bf16.msra.mxu0 %v3783
        %3801 = vmatpush.bf16.msra.mxu0 %v3782
        %3802 = vmatpush.bf16.msra.mxu0 %v3781
        %3803 = vmatpush.bf16.msra.mxu0 %v3780
        %3804 = vmatmul.bf16.gmra.mxu0 %v3747
        %v3805 = vpop.f32.mrf.mxu0
        %v3806 = vadd.f32 %v3685, %v3805
        %v3807 = vpop.f32.mrf.mxu0
        %3808 = vdwg.mxu0
        %v3809 = vperm.slane %v3806, 0
        %v3810 = vadd.f32 %v3646, %v3809
        %v3811 = vadd.f32 %v3647, %v3809
        %s3812 = scalar_lea.vmem %s43, 1
        %v3813 = vld [vmem:[%s3812] sm:$0x1]
        %s3814 = scalar_lea.vmem %s45, 1
        %v3815 = vld [vmem:[%s3814] sm:$0x1]
        %3816 = vadd.xlane.f32.xlu0 %v3810
        %v3817 = vpop.xlane.xlu0 %3816
        %3818 = vadd.xlane.f32.xlu0 %v3811
        %v3819 = vpop.xlane.xlu0 %3818
        %v3820 = vmul.f32 %v3817, %v1455
        %v3821 = vmul.f32 %v3819, %v1455
        %v3822 = vsub.f32 %v3810, %v3820
        %v3823 = vsub.f32 %v3811, %v3821
        %v3824 = vmul.f32 %v3822, %v3822
        %v3825 = vmul.f32 %v3823, %v3823
        %3826 = vadd.xlane.f32.xlu0 %v3824
        %v3827 = vpop.xlane.xlu0 %3826
        %3828 = vadd.xlane.f32.xlu0 %v3825
        %v3829 = vpop.xlane.xlu0 %3828
        %v3830 = vmul.f32 %v3827, %v1455
        %v3831 = vmul.f32 %v3829, %v1455
        %v3832 = vadd.f32 %v3830, 1e-05
        %v3833 = vadd.f32 %v3831, 1e-05
        %v3834 = vrsqrt.pop %v3832
        %v3835 = vmul.f32 %v3834, %v3832
        %v3836 = vmul.f32 %v3835, %v3834
        %v3837 = vmul.f32 0.5, %v3836
        %v3838 = vsub.f32 1.5, %v3837
        %v3839 = vmul.f32 %v3834, %v3838
        %vm3840 = vweird.f32 %v3832
        %vm3841 = vweird.f32 %v3834
        %vm3842 = vmor %vm3840, %vm3841
        %v3843 = vsel %vm3842, %v3834, %v3839
        %v3844 = vrsqrt.pop %v3833
        %v3845 = vmul.f32 %v3844, %v3833
        %v3846 = vmul.f32 %v3845, %v3844
        %v3847 = vmul.f32 0.5, %v3846
        %v3848 = vsub.f32 1.5, %v3847
        %v3849 = vmul.f32 %v3844, %v3848
        %vm3850 = vweird.f32 %v3833
        %vm3851 = vweird.f32 %v3844
        %vm3852 = vmor %vm3850, %vm3851
        %v3853 = vsel %vm3852, %v3844, %v3849
        %v3854 = vmul.f32 %v3822, %v3843
        %v3855 = vmul.f32 %v3823, %v3853
        %v3857 = vperm.slane %v3813, 0
        %v3859 = vmul.f32 %v3854, %v3857
        %v3860 = vmul.f32 %v3855, %v3857
        %v3862 = vperm.slane %v3815, 0
        %v3864 = vadd.f32 %v3859, %v3862
        %v3865 = vadd.f32 %v3860, %v3862
        %v3866 = vpack.c.bf16 %v3865, %v3864
        %s3867 = scalar_lea.vmem [#allocation29], 128
        %v3868 = vld [vmem:[%s3867] sm:$0xff]
        %v3869 = vld [vmem:[%s3867 + $0x8] sm:$0xff]
        %v3870 = vld [vmem:[%s3867 + $0x10] sm:$0xff]
        %v3871 = vld [vmem:[%s3867 + $0x18] sm:$0xff]
        %v3872 = vld [vmem:[%s3867 + $0x20] sm:$0xff]
        %v3873 = vld [vmem:[%s3867 + $0x28] sm:$0xff]
        %v3874 = vld [vmem:[%s3867 + $0x30] sm:$0xff]
        %v3875 = vld [vmem:[%s3867 + $0x38] sm:$0xff]
        %v3876 = vld [vmem:[%s3867 + $0x40] sm:$0xff]
        %v3877 = vld [vmem:[%s3867 + $0x48] sm:$0xff]
        %v3878 = vld [vmem:[%s3867 + $0x50] sm:$0xff]
        %v3879 = vld [vmem:[%s3867 + $0x58] sm:$0xff]
        %v3880 = vld [vmem:[%s3867 + $0x60] sm:$0xff]
        %v3881 = vld [vmem:[%s3867 + $0x68] sm:$0xff]
        %v3882 = vld [vmem:[%s3867 + $0x70] sm:$0xff]
        %v3883 = vld [vmem:[%s3867 + $0x78] sm:$0xff]
        %s3884 = scalar_lea.vmem [#allocation31], 2
        %v3885 = vld [vmem:[%s3884] sm:$0x3]
        %v3887 = vperm.slane %v3885, 0
        %v3888 = vperm.slane %v3885, 1
        %v3907 = vunpack.c.l.b16 %v3868
        %v3908 = vunpack.c.h.b16 %v3868
        %v3909 = vunpack.c.l.b16 %v3869
        %v3910 = vunpack.c.h.b16 %v3869
        %v3911 = vunpack.c.l.b16 %v3870
        %v3912 = vunpack.c.h.b16 %v3870
        %v3913 = vunpack.c.l.b16 %v3871
        %v3914 = vunpack.c.h.b16 %v3871
        %v3915 = vunpack.c.l.b16 %v3872
        %v3916 = vunpack.c.h.b16 %v3872
        %v3917 = vunpack.c.l.b16 %v3873
        %v3918 = vunpack.c.h.b16 %v3873
        %v3919 = vunpack.c.l.b16 %v3874
        %v3920 = vunpack.c.h.b16 %v3874
        %v3921 = vunpack.c.l.b16 %v3875
        %v3922 = vunpack.c.h.b16 %v3875
        %v3923 = vunpack.c.l.b16 %v3876
        %v3924 = vunpack.c.h.b16 %v3876
        %v3925 = vunpack.c.l.b16 %v3877
        %v3926 = vunpack.c.h.b16 %v3877
        %v3927 = vunpack.c.l.b16 %v3878
        %v3928 = vunpack.c.h.b16 %v3878
        %v3929 = vunpack.c.l.b16 %v3879
        %v3930 = vunpack.c.h.b16 %v3879
        %v3931 = vunpack.c.l.b16 %v3880
        %v3932 = vunpack.c.h.b16 %v3880
        %v3933 = vunpack.c.l.b16 %v3881
        %v3934 = vunpack.c.h.b16 %v3881
        %v3935 = vunpack.c.l.b16 %v3882
        %v3936 = vunpack.c.h.b16 %v3882
        %v3937 = vunpack.c.l.b16 %v3883
        %v3938 = vunpack.c.h.b16 %v3883
        %v3939 = vpack.c.b16 %v3909, %v3907
        %v3940 = vpack.c.b16 %v3910, %v3908
        %v3941 = vpack.c.b16 %v3913, %v3911
        %v3942 = vpack.c.b16 %v3914, %v3912
        %v3943 = vpack.c.b16 %v3917, %v3915
        %v3944 = vpack.c.b16 %v3918, %v3916
        %v3945 = vpack.c.b16 %v3921, %v3919
        %v3946 = vpack.c.b16 %v3922, %v3920
        %v3947 = vpack.c.b16 %v3925, %v3923
        %v3948 = vpack.c.b16 %v3926, %v3924
        %v3949 = vpack.c.b16 %v3929, %v3927
        %v3950 = vpack.c.b16 %v3930, %v3928
        %v3951 = vpack.c.b16 %v3933, %v3931
        %v3952 = vpack.c.b16 %v3934, %v3932
        %v3953 = vpack.c.b16 %v3937, %v3935
        %v3954 = vpack.c.b16 %v3938, %v3936
        %3971 = vmatpush.bf16.msra.mxu0 %v3953
        %3972 = vmatpush.bf16.msra.mxu0 %v3951
        %3973 = vmatpush.bf16.msra.mxu0 %v3949
        %3974 = vmatpush.bf16.msra.mxu0 %v3947
        %3975 = vmatpush.bf16.msra.mxu0 %v3945
        %3976 = vmatpush.bf16.msra.mxu0 %v3943
        %3977 = vmatpush.bf16.msra.mxu0 %v3941
        %3978 = vmatpush.bf16.msra.mxu0 %v3939
        %3979 = vmatmul.bf16.gmra.mxu0 %v3866
        %v3980 = vpop.f32.mrf.mxu0
        %v3981 = vadd.f32 %v3887, %v3980
        %v3982 = vpop.f32.mrf.mxu0
        %v3983 = vadd.f32 %v3887, %v3982
        %3984 = vdwg.mxu0
        %3985 = vmatpush.bf16.msra.mxu0 %v3954
        %3986 = vmatpush.bf16.msra.mxu0 %v3952
        %3987 = vmatpush.bf16.msra.mxu0 %v3950
        %3988 = vmatpush.bf16.msra.mxu0 %v3948
        %3989 = vmatpush.bf16.msra.mxu0 %v3946
        %3990 = vmatpush.bf16.msra.mxu0 %v3944
        %3991 = vmatpush.bf16.msra.mxu0 %v3942
        %3992 = vmatpush.bf16.msra.mxu0 %v3940
        %3993 = vmatmul.bf16.gmra.mxu0 %v3866
        %v3994 = vpop.f32.mrf.mxu0
        %v3995 = vadd.f32 %v3888, %v3994
        %v3996 = vpop.f32.mrf.mxu0
        %v3997 = vadd.f32 %v3888, %v3996
        %3998 = vdwg.mxu0
        %v3999 = vmax.f32 %v3981, 0.0
        %v4000 = vmax.f32 %v3995, 0.0
        %v4001 = vmax.f32 %v3983, 0.0
        %v4002 = vmax.f32 %v3997, 0.0
        %v4003 = vpack.c.bf16 %v4001, %v3999
        %v4004 = vpack.c.bf16 %v4002, %v4000
        %s4005 = scalar_lea.vmem [#allocation32], 128
        %v4006 = vld [vmem:[%s4005] sm:$0xf]
        %v4007 = vld [vmem:[%s4005 + $0x4] sm:$0xf]
        %v4008 = vld [vmem:[%s4005 + $0x8] sm:$0xf]
        %v4009 = vld [vmem:[%s4005 + $0xc] sm:$0xf]
        %v4010 = vld [vmem:[%s4005 + $0x10] sm:$0xf]
        %v4011 = vld [vmem:[%s4005 + $0x14] sm:$0xf]
        %v4012 = vld [vmem:[%s4005 + $0x18] sm:$0xf]
        %v4013 = vld [vmem:[%s4005 + $0x1c] sm:$0xf]
        %v4014 = vld [vmem:[%s4005 + $0x20] sm:$0xf]
        %v4015 = vld [vmem:[%s4005 + $0x24] sm:$0xf]
        %v4016 = vld [vmem:[%s4005 + $0x28] sm:$0xf]
        %v4017 = vld [vmem:[%s4005 + $0x2c] sm:$0xf]
        %v4018 = vld [vmem:[%s4005 + $0x30] sm:$0xf]
        %v4019 = vld [vmem:[%s4005 + $0x34] sm:$0xf]
        %v4020 = vld [vmem:[%s4005 + $0x38] sm:$0xf]
        %v4021 = vld [vmem:[%s4005 + $0x3c] sm:$0xf]
        %v4022 = vld [vmem:[%s4005 + $0x40] sm:$0xf]
        %v4023 = vld [vmem:[%s4005 + $0x44] sm:$0xf]
        %v4024 = vld [vmem:[%s4005 + $0x48] sm:$0xf]
        %v4025 = vld [vmem:[%s4005 + $0x4c] sm:$0xf]
        %v4026 = vld [vmem:[%s4005 + $0x50] sm:$0xf]
        %v4027 = vld [vmem:[%s4005 + $0x54] sm:$0xf]
        %v4028 = vld [vmem:[%s4005 + $0x58] sm:$0xf]
        %v4029 = vld [vmem:[%s4005 + $0x5c] sm:$0xf]
        %v4030 = vld [vmem:[%s4005 + $0x60] sm:$0xf]
        %v4031 = vld [vmem:[%s4005 + $0x64] sm:$0xf]
        %v4032 = vld [vmem:[%s4005 + $0x68] sm:$0xf]
        %v4033 = vld [vmem:[%s4005 + $0x6c] sm:$0xf]
        %v4034 = vld [vmem:[%s4005 + $0x70] sm:$0xf]
        %v4035 = vld [vmem:[%s4005 + $0x74] sm:$0xf]
        %v4036 = vld [vmem:[%s4005 + $0x78] sm:$0xf]
        %v4037 = vld [vmem:[%s4005 + $0x7c] sm:$0xf]
        %s4038 = scalar_lea.vmem [#allocation34], 1
        %v4039 = vld [vmem:[%s4038] sm:$0x1]
        %v4041 = vperm.slane %v4039, 0
        %v4075 = vunpack.c.l.b16 %v4006
        %v4076 = vunpack.c.l.b16 %v4007
        %v4077 = vunpack.c.l.b16 %v4008
        %v4078 = vunpack.c.l.b16 %v4009
        %v4079 = vunpack.c.l.b16 %v4010
        %v4080 = vunpack.c.l.b16 %v4011
        %v4081 = vunpack.c.l.b16 %v4012
        %v4082 = vunpack.c.l.b16 %v4013
        %v4083 = vunpack.c.l.b16 %v4014
        %v4084 = vunpack.c.l.b16 %v4015
        %v4085 = vunpack.c.l.b16 %v4016
        %v4086 = vunpack.c.l.b16 %v4017
        %v4087 = vunpack.c.l.b16 %v4018
        %v4088 = vunpack.c.l.b16 %v4019
        %v4089 = vunpack.c.l.b16 %v4020
        %v4090 = vunpack.c.l.b16 %v4021
        %v4091 = vunpack.c.l.b16 %v4022
        %v4092 = vunpack.c.l.b16 %v4023
        %v4093 = vunpack.c.l.b16 %v4024
        %v4094 = vunpack.c.l.b16 %v4025
        %v4095 = vunpack.c.l.b16 %v4026
        %v4096 = vunpack.c.l.b16 %v4027
        %v4097 = vunpack.c.l.b16 %v4028
        %v4098 = vunpack.c.l.b16 %v4029
        %v4099 = vunpack.c.l.b16 %v4030
        %v4100 = vunpack.c.l.b16 %v4031
        %v4101 = vunpack.c.l.b16 %v4032
        %v4102 = vunpack.c.l.b16 %v4033
        %v4103 = vunpack.c.l.b16 %v4034
        %v4104 = vunpack.c.l.b16 %v4035
        %v4105 = vunpack.c.l.b16 %v4036
        %v4106 = vunpack.c.l.b16 %v4037
        %v4107 = vpack.c.b16 %v4076, %v4075
        %v4108 = vpack.c.b16 %v4078, %v4077
        %v4109 = vpack.c.b16 %v4080, %v4079
        %v4110 = vpack.c.b16 %v4082, %v4081
        %v4111 = vpack.c.b16 %v4084, %v4083
        %v4112 = vpack.c.b16 %v4086, %v4085
        %v4113 = vpack.c.b16 %v4088, %v4087
        %v4114 = vpack.c.b16 %v4090, %v4089
        %v4115 = vpack.c.b16 %v4092, %v4091
        %v4116 = vpack.c.b16 %v4094, %v4093
        %v4117 = vpack.c.b16 %v4096, %v4095
        %v4118 = vpack.c.b16 %v4098, %v4097
        %v4119 = vpack.c.b16 %v4100, %v4099
        %v4120 = vpack.c.b16 %v4102, %v4101
        %v4121 = vpack.c.b16 %v4104, %v4103
        %v4122 = vpack.c.b16 %v4106, %v4105
        %4139 = vmatpush.bf16.msra.mxu0 %v4114
        %4140 = vmatpush.bf16.msra.mxu0 %v4113
        %4141 = vmatpush.bf16.msra.mxu0 %v4112
        %4142 = vmatpush.bf16.msra.mxu0 %v4111
        %4143 = vmatpush.bf16.msra.mxu0 %v4110
        %4144 = vmatpush.bf16.msra.mxu0 %v4109
        %4145 = vmatpush.bf16.msra.mxu0 %v4108
        %4146 = vmatpush.bf16.msra.mxu0 %v4107
        %4147 = vmatmul.bf16.gmra.mxu0 %v4003
        %v4148 = vpop.f32.mrf.mxu0
        %v4149 = vadd.f32 %v4041, %v4148
        %v4150 = vpop.f32.mrf.mxu0
        %4151 = vdwg.mxu0
        %4152 = vmatpush.bf16.msra.mxu0 %v4122
        %4153 = vmatpush.bf16.msra.mxu0 %v4121
        %4154 = vmatpush.bf16.msra.mxu0 %v4120
        %4155 = vmatpush.bf16.msra.mxu0 %v4119
        %4156 = vmatpush.bf16.msra.mxu0 %v4118
        %4157 = vmatpush.bf16.msra.mxu0 %v4117
        %4158 = vmatpush.bf16.msra.mxu0 %v4116
        %4159 = vmatpush.bf16.msra.mxu0 %v4115
        %4160 = vmatmul.bf16.gmra.mxu0 %v4004
        %v4161 = vpop.f32.mrf.mxu0
        %v4162 = vadd.f32 %v4149, %v4161
        %v4163 = vpop.f32.mrf.mxu0
        %4164 = vdwg.mxu0
        %v4165 = vadd.f32 %v3864, %v4162
        %s4166 = scalar_lea.vmem %s55, 1
        %v4167 = vld [vmem:[%s4166] sm:$0x1]
        %s4168 = scalar_lea.vmem %s57, 1
        %v4169 = vld [vmem:[%s4168] sm:$0x1]
        %4170 = vadd.xlane.f32.xlu0 %v4165
        %v4171 = vpop.xlane.xlu0 %4170
        %v4172 = vmul.f32 %v4171, %v1455
        %v4173 = vsub.f32 %v4165, %v4172
        %v4174 = vmul.f32 %v4173, %v4173
        %4175 = vadd.xlane.f32.xlu0 %v4174
        %v4176 = vpop.xlane.xlu0 %4175
        %v4177 = vmul.f32 %v4176, %v1455
        %v4178 = vadd.f32 %v4177, 1e-05
        %v4179 = vrsqrt.pop %v4178
        %v4180 = vmul.f32 %v4179, %v4178
        %v4181 = vmul.f32 %v4180, %v4179
        %v4182 = vmul.f32 0.5, %v4181
        %v4183 = vsub.f32 1.5, %v4182
        %v4184 = vmul.f32 %v4179, %v4183
        %vm4185 = vweird.f32 %v4178
        %vm4186 = vweird.f32 %v4179
        %vm4187 = vmor %vm4185, %vm4186
        %v4188 = vsel %vm4187, %v4179, %v4184
        %v4189 = vmul.f32 %v4173, %v4188
        %v4191 = vperm.slane %v4167, 0
        %v4193 = vmul.f32 %v4189, %v4191
        %v4195 = vperm.slane %v4169, 0
        %v4197 = vadd.f32 %v4193, %v4195
        %v4198 = vpack.c.bf16 %v4197, %v4197
        %v4199 = vld [vmem:[#allocation35] sm:$0xff]
        %v4200 = vld [vmem:[#allocation35 + $0x8] sm:$0xff]
        %v4201 = vld [vmem:[#allocation35 + $0x10] sm:$0xff]
        %v4202 = vld [vmem:[#allocation35 + $0x18] sm:$0xff]
        %v4203 = vld [vmem:[#allocation35 + $0x20] sm:$0xff]
        %v4204 = vld [vmem:[#allocation35 + $0x28] sm:$0xff]
        %v4205 = vld [vmem:[#allocation35 + $0x30] sm:$0xff]
        %v4206 = vld [vmem:[#allocation35 + $0x38] sm:$0xff]
        %v4207 = vld [vmem:[#allocation35 + $0x40] sm:$0xff]
        %v4208 = vld [vmem:[#allocation35 + $0x48] sm:$0xff]
        %v4209 = vld [vmem:[#allocation35 + $0x50] sm:$0xff]
        %v4210 = vld [vmem:[#allocation35 + $0x58] sm:$0xff]
        %v4211 = vld [vmem:[#allocation35 + $0x60] sm:$0xff]
        %v4212 = vld [vmem:[#allocation35 + $0x68] sm:$0xff]
        %v4213 = vld [vmem:[#allocation35 + $0x70] sm:$0xff]
        %v4214 = vld [vmem:[#allocation35 + $0x78] sm:$0xff]
        %v4231 = vunpack.c.l.b16 %v4199
        %v4232 = vunpack.c.h.b16 %v4199
        %v4233 = vunpack.c.l.b16 %v4200
        %v4234 = vunpack.c.h.b16 %v4200
        %v4235 = vunpack.c.l.b16 %v4201
        %v4236 = vunpack.c.h.b16 %v4201
        %v4237 = vunpack.c.l.b16 %v4202
        %v4238 = vunpack.c.h.b16 %v4202
        %v4239 = vunpack.c.l.b16 %v4203
        %v4240 = vunpack.c.h.b16 %v4203
        %v4241 = vunpack.c.l.b16 %v4204
        %v4242 = vunpack.c.h.b16 %v4204
        %v4243 = vunpack.c.l.b16 %v4205
        %v4244 = vunpack.c.h.b16 %v4205
        %v4245 = vunpack.c.l.b16 %v4206
        %v4246 = vunpack.c.h.b16 %v4206
        %v4247 = vunpack.c.l.b16 %v4207
        %v4248 = vunpack.c.h.b16 %v4207
        %v4249 = vunpack.c.l.b16 %v4208
        %v4250 = vunpack.c.h.b16 %v4208
        %v4251 = vunpack.c.l.b16 %v4209
        %v4252 = vunpack.c.h.b16 %v4209
        %v4253 = vunpack.c.l.b16 %v4210
        %v4254 = vunpack.c.h.b16 %v4210
        %v4255 = vunpack.c.l.b16 %v4211
        %v4256 = vunpack.c.h.b16 %v4211
        %v4257 = vunpack.c.l.b16 %v4212
        %v4258 = vunpack.c.h.b16 %v4212
        %v4259 = vunpack.c.l.b16 %v4213
        %v4260 = vunpack.c.h.b16 %v4213
        %v4261 = vunpack.c.l.b16 %v4214
        %v4262 = vunpack.c.h.b16 %v4214
        %v4263 = vpack.c.b16 %v4233, %v4231
        %v4264 = vpack.c.b16 %v4234, %v4232
        %v4265 = vpack.c.b16 %v4237, %v4235
        %v4266 = vpack.c.b16 %v4238, %v4236
        %v4267 = vpack.c.b16 %v4241, %v4239
        %v4268 = vpack.c.b16 %v4242, %v4240
        %v4269 = vpack.c.b16 %v4245, %v4243
        %v4270 = vpack.c.b16 %v4246, %v4244
        %v4271 = vpack.c.b16 %v4249, %v4247
        %v4272 = vpack.c.b16 %v4250, %v4248
        %v4273 = vpack.c.b16 %v4253, %v4251
        %v4274 = vpack.c.b16 %v4254, %v4252
        %v4275 = vpack.c.b16 %v4257, %v4255
        %v4276 = vpack.c.b16 %v4258, %v4256
        %v4277 = vpack.c.b16 %v4261, %v4259
        %v4278 = vpack.c.b16 %v4262, %v4260
        %4295 = vmatpush.bf16.msra.mxu0 %v4277
        %4296 = vmatpush.bf16.msra.mxu0 %v4275
        %4297 = vmatpush.bf16.msra.mxu0 %v4273
        %4298 = vmatpush.bf16.msra.mxu0 %v4271
        %4299 = vmatpush.bf16.msra.mxu0 %v4269
        %4300 = vmatpush.bf16.msra.mxu0 %v4267
        %4301 = vmatpush.bf16.msra.mxu0 %v4265
        %4302 = vmatpush.bf16.msra.mxu0 %v4263
        %4303 = vmatmul.bf16.gmra.mxu0 %v4198
        %v4304 = vpop.f32.mrf.mxu0
        %v4305 = vadd.f32 0.0, %v4304
        %v4306 = vpop.f32.mrf.mxu0
        %4307 = vdwg.mxu0
        %4308 = vmatpush.bf16.msra.mxu0 %v4278
        %4309 = vmatpush.bf16.msra.mxu0 %v4276
        %4310 = vmatpush.bf16.msra.mxu0 %v4274
        %4311 = vmatpush.bf16.msra.mxu0 %v4272
        %4312 = vmatpush.bf16.msra.mxu0 %v4270
        %4313 = vmatpush.bf16.msra.mxu0 %v4268
        %4314 = vmatpush.bf16.msra.mxu0 %v4266
        %4315 = vmatpush.bf16.msra.mxu0 %v4264
        %4316 = vmatmul.bf16.gmra.mxu0 %v4198
        %v4317 = vpop.f32.mrf.mxu0
        %v4318 = vadd.f32 0.0, %v4317
        %v4319 = vpop.f32.mrf.mxu0
        %4320 = vdwg.mxu0
        %4321 = vst [vmem:[%s1282] sm:$0xff] %v4305
        %4322 = vst [vmem:[%s1282 + $0x8] sm:$0xff] %v4318
        %s4323 = sand.u32 %s732, 1
        %s4324 = scalar_lea.sflag [#allocation4], %s4323
        %s4325 = sand.u32 %s732, 1
        %s4326 = smul.addr %s4325, 16
        %s4327 = scalar_lea.vmem [#allocation37], %s4326
        // Predicated region
        $region229: #{_lambda_.1} parent=139 // pred_check
          %p4328 = pneg %p742
        $region230: #{_lambda_.1} parent=139 // pred_check_branch
          %4330 = sbr.rel (%p4328) target = $region232
        $region231: #{_lambda_.1} parent=139 // pred_region
          %4332 = vsyncadd %s4324, 0
          %s4333 = smul.addr %s89, 2
          %s4334 = smul.addr %s4333, 8
          %s4335 = scalar_lea.hbm %s61, %s4334
          %s4337 = sshll.u32 %s4327, 4
          %s4338 = int_to_ptr.vmem [resolvable:$true] %s4337
          %s4339 = sshll.u32 %s4335, 4
          %s4340 = int_to_ptr.hbm [resolvable:$true] %s4339
          %4342 = dma.vmem_to_hbm [thread:$0]  %s4338, 256, %s4340, %s4324
        $region232: #{_lambda_.1} parent=139 // pred_fallthru
          _
      $region140: #{_lambda_.1} parent=5 // pred_fallthru
        _
      %p4343 = scmp.le.s32.totalorder 2, %s84
      // Predicated region
      $region233: #{_lambda_.1} parent=5 // pred_check
        %p4344 = pneg %p4343
      $region234: #{_lambda_.1} parent=5 // pred_check_branch
        %4346 = sbr.rel (%p4344) target = $region236
      $region235: #{_lambda_.1} parent=5 // pred_region
        %s4347 = ssub.s32 %s84, 2
        // Predicated region
        $region237: #{_lambda_.1} parent=235 // pred_check
          %p4348 = pneg %p748
        $region238: #{_lambda_.1} parent=235 // pred_check_branch
          %4350 = sbr.rel (%p4348) target = $region240
        $region239: #{_lambda_.1} parent=235 // pred_region
          %s4351 = sand.u32 %s733, 1
          %s4352 = scalar_lea.sflag [#allocation4], %s4351
          %s4353 = sand.u32 %s733, 1
          %s4354 = smul.addr %s4353, 16
          %s4355 = scalar_lea.vmem [#allocation37], %s4354
          %4357 = dma.done %s4352, 256
        $region240: #{_lambda_.1} parent=235 // pred_fallthru
          _
      $region236: #{_lambda_.1} parent=5 // pred_fallthru
        _
    $region6: #{_lambda_.1} parent=1 // loop_footer
      %s88 = sadd.s32 1, %s84
    $region7: #{_lambda_.1} parent=1 // loop_footer_branch
      %83 = sbr.rel target = $region3
    $region8: #{_lambda_.1} parent=1 // loop_exit
      _
    %4358 = vsyncpa [#allocation3], 1
    %s4359 = scalar_lea.sflag [#allocation3], 1
    %4360 = vsyncpa %s4359, 1
    %4361 = vsyncpa [#allocation6], 1
    %4362 = vsyncpa [#allocation9], 1
    %4363 = vsyncpa [#allocation12], 1
    %4364 = vsyncpa [#allocation15], 1
    %4365 = vsyncpa [#allocation18], 1
    %4366 = vsyncpa [#allocation21], 1
    %4367 = vsyncpa [#allocation24], 1
    %4368 = vsyncpa [#allocation27], 1
    %4369 = vsyncpa [#allocation30], 1
    %4370 = vsyncpa [#allocation33], 1
    %4371 = vsyncpa [#allocation36], 1
    %4372 = vsyncpa [#allocation4], 1
    %s4373 = scalar_lea.sflag [#allocation4], 1
    %4374 = vsyncpa %s4373, 1

</llo_original>
